<compile_context>
chip_gen: v6e
topology: v6e:2x2x1
jax: 0.10.0
libtpu: 0.0.40
codegen_flags: <defaults>
</compile_context>

<pallas_src>
import functools

import jax
import jax.numpy as jnp
from jax.experimental import pallas as pl
from jax.experimental.pallas import tpu as pltpu


# --------------------------------------------------------------------------------------
# Kernel: fused 3x3x3 conv (3 banded MXU matmuls, K = 3*W*Cin) + folded-BN bias + ReLU.
# One grid step computes the full (D, H, W*Cout) output slab for one batch element.
# --------------------------------------------------------------------------------------
def _convknl3_kernel(x_ref, w_ref, bias_ref, o_ref, slab_ref, *, D, H, WCi, WCo, dblk):
    # ---- build the kh-stacked, D/H zero-padded slab once per grid step --------------
    # slab[dd, h, kh*WCi + wc] = x_padded[dd, h + kh, wc]  (D/H halo rows stay zero)
    slab_ref[...] = jnp.zeros_like(slab_ref)
    slab_ref[1:D + 1, 1:H, 0:WCi] = x_ref[0, :, 0:H - 1, :]              # kh = 0 (h-1)
    slab_ref[1:D + 1, :, WCi:2 * WCi] = x_ref[0]                          # kh = 1 (h)
    slab_ref[1:D + 1, 0:H - 1, 2 * WCi:3 * WCi] = x_ref[0, :, 1:H, :]     # kh = 2 (h+1)

    bias = bias_ref[...]                                                  # (1, WCo) f32

    # ---- 3 matmuls (K = 3*WCi) per M sub-block; kd slice is a leading-dim view ------
    for b in range(D // dblk):            # short static loop; each block's accumulator
        d0 = b * dblk                     # dies at its own store -> bounded vreg usage
        acc = jnp.zeros((dblk * H, WCo), jnp.float32)
        for kd in range(3):
            patch = slab_ref[d0 + kd:d0 + kd + dblk].reshape(dblk * H, 3 * WCi)
            acc = acc + jnp.dot(patch, w_ref[kd],
                                preferred_element_type=jnp.float32)
        y = jnp.maximum(acc + bias, 0.0)  # BN scale already folded into the weights
        o_ref[0, d0:d0 + dblk] = y.reshape(dblk, H, WCo).astype(o_ref.dtype)


# --------------------------------------------------------------------------------------
# Weight packing: fold kw taps + W zero-padding into a block-banded matrix, fold kh
# into the contraction dim, and fold the BN scale (in f32, before the bf16 cast).
#   wb[kd, kh*W*Cin + w_in*Cin + c, w_out*Cout + o] = weight[o, c, kd, kh, kw] * scale[o]
#   where kw = w_in - w_out + 1 in {0,1,2} and 0 <= w_in < W (else zero).
# --------------------------------------------------------------------------------------
def build_banded_weight(weight, W, scale):
    Cout, Cin = weight.shape[0], weight.shape[1]
    wt = jnp.transpose(weight, (2, 3, 4, 1, 0)) * scale          # (kd,kh,kw,Cin,Cout)
    w_in = jnp.arange(W)[:, None]
    w_out = jnp.arange(W)[None, :]
    wb = jnp.zeros((3, 3, W, Cin, W, Cout), jnp.float32)
    for kw in range(3):
        band = (w_in == w_out + (kw - 1)).astype(jnp.float32)    # (W_in, W_out) band
        wb = wb + band[None, None, :, None, :, None] * wt[:, :, kw][:, :, None, :, None, :]
    # K axis flattens (kh, W_in, Cin); N axis flattens (W_out, Cout).
    return wb.reshape(3, 3 * W * Cin, W * Cout)


# --------------------------------------------------------------------------------------
# Forward wrapper: NCDHW in / NCDHW out (PyTorch module boundary).
# --------------------------------------------------------------------------------------
def conv_knl3_forward(x, params, *, eps=1e-5):
    N, Cin, D, H, W = x.shape
    weight = params['weight']                                    # (Cout, Cin, 3, 3, 3)
    Cout = weight.shape[0]
    scale = params['gamma'] / jnp.sqrt(params['running_var'] + eps)
    bias = (params['conv_bias'] - params['running_mean']) * scale + params['beta']

    WCi, WCo = W * Cin, W * Cout

    # channels-last with W folded into the lane dim; bf16 MXU operands.
    x_cl = jnp.transpose(x, (0, 2, 3, 4, 1)).reshape(N, D, H, WCi).astype(jnp.bfloat16)

    # Banded weight (BN scale folded in f32 before the bf16 cast) + folded bias.
    wb = build_banded_weight(weight, W, scale).astype(jnp.bfloat16)   # (3, 3*WCi, WCo)
    bias_wc = jnp.tile(bias, W).reshape(1, WCo).astype(jnp.float32)

    # VMEM guard: the banded weight grows as W^2*Cin*Cout (e.g. W=32, C=64 -> ~72 MiB,
    # exceeding v7x's 64 MiB VMEM).  For larger sizes: single-buffer the weight spec
    # (pipeline_mode=pl.Buffered(1)), make kd a reduction grid axis, or drop the
    # banded trick and do kw via lane shifts once Cin >= 128.
    wb_bytes = 2 * 3 * (3 * WCi) * WCo
    assert wb_bytes <= 16 * 1024 * 1024, (
        f"banded weight ({wb_bytes / 2**20:.1f} MiB) too large for resident-VMEM plan")

    # M sub-block: largest divisor of D with dblk*H <= 64 rows (vreg-pressure bound).
    dblk = 1
    for cand in range(1, D + 1):
        if D % cand == 0 and cand * H <= 64:
            dblk = cand

    kernel = functools.partial(_convknl3_kernel, D=D, H=H, WCi=WCi, WCo=WCo, dblk=dblk)

    out = pl.pallas_call(
        kernel,
        out_shape=jax.ShapeDtypeStruct((N, D, H, WCo), jnp.float32),
        grid=(N,),
        in_specs=[
            pl.BlockSpec((1, D, H, WCi), lambda n: (n, 0, 0, 0)),
            pl.BlockSpec((3, 3 * WCi, WCo), lambda n: (0, 0, 0)),     # resident weights
            pl.BlockSpec((1, WCo), lambda n: (0, 0)),
        ],
        out_specs=pl.BlockSpec((1, D, H, WCo), lambda n: (n, 0, 0, 0)),
        scratch_shapes=[pltpu.VMEM((D + 2, H, 3 * WCi), jnp.bfloat16)],
        compiler_params=pltpu.CompilerParams(dimension_semantics=("parallel",)),
    )(x_cl, wb, bias_wc)

    out = out.reshape(N, D, H, W, Cout)
    return jnp.transpose(out, (0, 4, 1, 2, 3))                    # back to NCDHW


# --------------------------------------------------------------------------------------
# Parameter init (deterministic, synthetic) and pure-JAX reference.
# The reference mirrors the kernel's intentional bf16 rounding of the inputs and the
# scale-folded weights (the MXU path); the conv itself runs in f32 via XLA.
# --------------------------------------------------------------------------------------
def init_params(key, in_ch, out_ch):
    ks = jax.random.split(key, 6)
    return dict(
        weight=0.1 * jax.random.normal(ks[0], (out_ch, in_ch, 3, 3, 3), jnp.float32),
        conv_bias=0.1 * jax.random.normal(ks[1], (out_ch,), jnp.float32),
        gamma=1.0 + 0.1 * jax.random.normal(ks[2], (out_ch,), jnp.float32),
        beta=0.1 * jax.random.normal(ks[3], (out_ch,), jnp.float32),
        running_mean=0.1 * jax.random.normal(ks[4], (out_ch,), jnp.float32),
        running_var=jnp.abs(jax.random.normal(ks[5], (out_ch,), jnp.float32)) + 0.5,
    )


def conv_knl3_ref(x, params, eps=1e-5):
    scale = params['gamma'] / jnp.sqrt(params['running_var'] + eps)
    bias = (params['conv_bias'] - params['running_mean']) * scale + params['beta']
    xr = x.astype(jnp.bfloat16).astype(jnp.float32)
    wr = (params['weight'] * scale[:, None, None, None, None]
          ).astype(jnp.bfloat16).astype(jnp.float32)
    y = jax.lax.conv_general_dilated(
        xr, wr, window_strides=(1, 1, 1),
        padding=((1, 1), (1, 1), (1, 1)),
        dimension_numbers=('NCDHW', 'OIDHW', 'NCDHW'))
    y = y + bias[None, :, None, None, None]
    return jnp.maximum(y, 0.0)


if __name__ == "__main__":
    key = jax.random.PRNGKey(0)
    k_x, k_p = jax.random.split(key)

    N, in_ch, out_ch = 2, 8, 8
    D = H = W = 16
    x = jax.random.normal(k_x, (N, in_ch, D, H, W), jnp.float32)
    params = init_params(k_p, in_ch, out_ch)

    out = jax.block_until_ready(conv_knl3_forward(x, params))
    ref = jax.block_until_ready(conv_knl3_ref(x, params))

    assert out.shape == (N, out_ch, D, H, W), out.shape
    max_err = float(jnp.max(jnp.abs(out - ref)))
    assert max_err < 2e-3, f"mismatch vs reference: {max_err}"
    print("KERNEL_OK")
</pallas_src>

<mosaic_0001>
module attributes {stable_mosaic.version = 11 : i64} {
  func.func @_convknl3_kernel(%arg0: i32, %arg1: memref<1x16x16x128xbf16, #tpu.memory_space<vmem>>, %arg2: memref<3x384x128xbf16, #tpu.memory_space<vmem>>, %arg3: memref<1x128xf32, #tpu.memory_space<vmem>>, %arg4: memref<1x16x16x128xf32, #tpu.memory_space<vmem>>, %arg5: memref<18x16x384xbf16, #tpu.memory_space<vmem>>) attributes {dimension_semantics = [#tpu.dimension_semantics<parallel>], iteration_bounds = array<i64: 2>, scalar_prefetch = 0 : i64, scratch_operands = 1 : i64, tpu.core_type = #tpu.core_type<tc>, window_params = [{transform_indices = @transform_0, window_bounds = array<i64: 1, 16, 16, 128>}, {pipeline_mode = #tpu.pipeline_mode<synchronous>, transform_indices = @transform_1, window_bounds = array<i64: 3, 384, 128>}, {pipeline_mode = #tpu.pipeline_mode<synchronous>, transform_indices = @transform_2, window_bounds = array<i64: 1, 128>}, {transform_indices = @transform_3, window_bounds = array<i64: 1, 16, 16, 128>}]} {
    %cst = arith.constant 0.000000e+00 : bf16
    %0 = vector.broadcast %cst : bf16 to vector<18x16x384xbf16>
    %c0 = arith.constant 0 : index
    %c0_0 = arith.constant 0 : index
    %c0_1 = arith.constant 0 : index
    %1 = vector.load %arg5[%c0, %c0_0, %c0_1] : memref<18x16x384xbf16, #tpu.memory_space<vmem>>, vector<18x16x384xbf16>
    tpu.vector_store %arg5[%c0, %c0_0, %c0_1], %0 {strides = array<i32>} : memref<18x16x384xbf16, #tpu.memory_space<vmem>>, vector<18x16x384xbf16>,
    %c0_2 = arith.constant 0 : index
    %c0_3 = arith.constant 0 : index
    %c0_4 = arith.constant 0 : index
    %c0_5 = arith.constant 0 : index
    %2 = vector.load %arg1[%c0_2, %c0_3, %c0_4, %c0_5] : memref<1x16x16x128xbf16, #tpu.memory_space<vmem>>, vector<1x16x15x128xbf16>
    %3 = vector.shape_cast %2 : vector<1x16x15x128xbf16> to vector<16x15x128xbf16>
    %c1 = arith.constant 1 : index
    %c1_6 = arith.constant 1 : index
    %c0_7 = arith.constant 0 : index
    %4 = vector.load %arg5[%c1, %c1_6, %c0_7] : memref<18x16x384xbf16, #tpu.memory_space<vmem>>, vector<16x15x128xbf16>
    tpu.vector_store %arg5[%c1, %c1_6, %c0_7], %3 {strides = array<i32>} : memref<18x16x384xbf16, #tpu.memory_space<vmem>>, vector<16x15x128xbf16>,
    %c0_8 = arith.constant 0 : index
    %c0_9 = arith.constant 0 : index
    %c0_10 = arith.constant 0 : index
    %c0_11 = arith.constant 0 : index
    %5 = vector.load %arg1[%c0_8, %c0_9, %c0_10, %c0_11] : memref<1x16x16x128xbf16, #tpu.memory_space<vmem>>, vector<1x16x16x128xbf16>
    %6 = vector.shape_cast %5 : vector<1x16x16x128xbf16> to vector<16x16x128xbf16>
    %c1_12 = arith.constant 1 : index
    %c0_13 = arith.constant 0 : index
    %c128 = arith.constant 128 : index
    %7 = vector.load %arg5[%c1_12, %c0_13, %c128] : memref<18x16x384xbf16, #tpu.memory_space<vmem>>, vector<16x16x128xbf16>
    tpu.vector_store %arg5[%c1_12, %c0_13, %c128], %6 {strides = array<i32>} : memref<18x16x384xbf16, #tpu.memory_space<vmem>>, vector<16x16x128xbf16>,
    %c0_14 = arith.constant 0 : index
    %c0_15 = arith.constant 0 : index
    %c1_16 = arith.constant 1 : index
    %c0_17 = arith.constant 0 : index
    %8 = vector.load %arg1[%c0_14, %c0_15, %c1_16, %c0_17] : memref<1x16x16x128xbf16, #tpu.memory_space<vmem>>, vector<1x16x15x128xbf16>
    %9 = vector.shape_cast %8 : vector<1x16x15x128xbf16> to vector<16x15x128xbf16>
    %c1_18 = arith.constant 1 : index
    %c0_19 = arith.constant 0 : index
    %c256 = arith.constant 256 : index
    %10 = vector.load %arg5[%c1_18, %c0_19, %c256] : memref<18x16x384xbf16, #tpu.memory_space<vmem>>, vector<16x15x128xbf16>
    tpu.vector_store %arg5[%c1_18, %c0_19, %c256], %9 {strides = array<i32>} : memref<18x16x384xbf16, #tpu.memory_space<vmem>>, vector<16x15x128xbf16>,
    %c0_20 = arith.constant 0 : index
    %c0_21 = arith.constant 0 : index
    %11 = vector.load %arg3[%c0_20, %c0_21] : memref<1x128xf32, #tpu.memory_space<vmem>>, vector<1x128xf32>
    %cst_22 = arith.constant 0.000000e+00 : f32
    %12 = vector.broadcast %cst_22 : f32 to vector<64x128xf32>
    %c0_23 = arith.constant 0 : index
    %c0_24 = arith.constant 0 : index
    %c0_25 = arith.constant 0 : index
    %13 = vector.load %arg5[%c0_23, %c0_24, %c0_25] : memref<18x16x384xbf16, #tpu.memory_space<vmem>>, vector<4x16x384xbf16>
    %14 = vector.shape_cast %13 : vector<4x16x384xbf16> to vector<64x384xbf16>
    %c0_26 = arith.constant 0 : index
    %c0_27 = arith.constant 0 : index
    %c0_28 = arith.constant 0 : index
    %15 = vector.load %arg2[%c0_26, %c0_27, %c0_28] : memref<3x384x128xbf16, #tpu.memory_space<vmem>>, vector<1x384x128xbf16>
    %16 = vector.shape_cast %15 : vector<1x384x128xbf16> to vector<384x128xbf16>
    %cst_29 = arith.constant dense<0.000000e+00> : vector<64x128xf32>
    %17 = tpu.matmul %14, %16, %cst_29 {dimension_numbers = #tpu.dot_dimension_numbers<[1], [0], [0], [1], [0, 0, 1, 1], [], []>} : vector<64x384xbf16>, vector<384x128xbf16>, vector<64x128xf32> -> vector<64x128xf32>
    %18 = arith.addf %12, %17 : vector<64x128xf32>
    %c1_30 = arith.constant 1 : index
    %c0_31 = arith.constant 0 : index
    %c0_32 = arith.constant 0 : index
    %19 = vector.load %arg5[%c1_30, %c0_31, %c0_32] : memref<18x16x384xbf16, #tpu.memory_space<vmem>>, vector<4x16x384xbf16>
    %20 = vector.shape_cast %19 : vector<4x16x384xbf16> to vector<64x384xbf16>
    %c1_33 = arith.constant 1 : index
    %c0_34 = arith.constant 0 : index
    %c0_35 = arith.constant 0 : index
    %21 = vector.load %arg2[%c1_33, %c0_34, %c0_35] : memref<3x384x128xbf16, #tpu.memory_space<vmem>>, vector<1x384x128xbf16>
    %22 = vector.shape_cast %21 : vector<1x384x128xbf16> to vector<384x128xbf16>
    %cst_36 = arith.constant dense<0.000000e+00> : vector<64x128xf32>
    %23 = tpu.matmul %20, %22, %cst_36 {dimension_numbers = #tpu.dot_dimension_numbers<[1], [0], [0], [1], [0, 0, 1, 1], [], []>} : vector<64x384xbf16>, vector<384x128xbf16>, vector<64x128xf32> -> vector<64x128xf32>
    %24 = arith.addf %18, %23 : vector<64x128xf32>
    %c2 = arith.constant 2 : index
    %c0_37 = arith.constant 0 : index
    %c0_38 = arith.constant 0 : index
    %25 = vector.load %arg5[%c2, %c0_37, %c0_38] : memref<18x16x384xbf16, #tpu.memory_space<vmem>>, vector<4x16x384xbf16>
    %26 = vector.shape_cast %25 : vector<4x16x384xbf16> to vector<64x384xbf16>
    %c2_39 = arith.constant 2 : index
    %c0_40 = arith.constant 0 : index
    %c0_41 = arith.constant 0 : index
    %27 = vector.load %arg2[%c2_39, %c0_40, %c0_41] : memref<3x384x128xbf16, #tpu.memory_space<vmem>>, vector<1x384x128xbf16>
    %28 = vector.shape_cast %27 : vector<1x384x128xbf16> to vector<384x128xbf16>
    %cst_42 = arith.constant dense<0.000000e+00> : vector<64x128xf32>
    %29 = tpu.matmul %26, %28, %cst_42 {dimension_numbers = #tpu.dot_dimension_numbers<[1], [0], [0], [1], [0, 0, 1, 1], [], []>} : vector<64x384xbf16>, vector<384x128xbf16>, vector<64x128xf32> -> vector<64x128xf32>
    %30 = arith.addf %24, %29 : vector<64x128xf32>
    %31 = vector.broadcast %11 : vector<1x128xf32> to vector<64x128xf32>
    %32 = arith.addf %30, %31 : vector<64x128xf32>
    %cst_43 = arith.constant 0.000000e+00 : f32
    %33 = vector.broadcast %cst_43 : f32 to vector<64x128xf32>
    %34 = arith.maximumf %32, %33 : vector<64x128xf32>
    %35 = vector.shape_cast %34 : vector<64x128xf32> to vector<4x16x128xf32>
    %c0_44 = arith.constant 0 : index
    %c0_45 = arith.constant 0 : index
    %c0_46 = arith.constant 0 : index
    %c0_47 = arith.constant 0 : index
    %36 = vector.load %arg4[%c0_44, %c0_45, %c0_46, %c0_47] : memref<1x16x16x128xf32, #tpu.memory_space<vmem>>, vector<1x4x16x128xf32>
    %37 = vector.shape_cast %36 : vector<1x4x16x128xf32> to vector<4x16x128xf32>
    %38 = vector.shape_cast %35 : vector<4x16x128xf32> to vector<1x4x16x128xf32>
    tpu.vector_store %arg4[%c0_44, %c0_45, %c0_46, %c0_47], %38 {strides = array<i32>} : memref<1x16x16x128xf32, #tpu.memory_space<vmem>>, vector<1x4x16x128xf32>,
    %cst_48 = arith.constant 0.000000e+00 : f32
    %39 = vector.broadcast %cst_48 : f32 to vector<64x128xf32>
    %c4 = arith.constant 4 : index
    %c0_49 = arith.constant 0 : index
    %c0_50 = arith.constant 0 : index
    %40 = vector.load %arg5[%c4, %c0_49, %c0_50] : memref<18x16x384xbf16, #tpu.memory_space<vmem>>, vector<4x16x384xbf16>
    %41 = vector.shape_cast %40 : vector<4x16x384xbf16> to vector<64x384xbf16>
    %c0_51 = arith.constant 0 : index
    %c0_52 = arith.constant 0 : index
    %c0_53 = arith.constant 0 : index
    %42 = vector.load %arg2[%c0_51, %c0_52, %c0_53] : memref<3x384x128xbf16, #tpu.memory_space<vmem>>, vector<1x384x128xbf16>
    %43 = vector.shape_cast %42 : vector<1x384x128xbf16> to vector<384x128xbf16>
    %cst_54 = arith.constant dense<0.000000e+00> : vector<64x128xf32>
    %44 = tpu.matmul %41, %43, %cst_54 {dimension_numbers = #tpu.dot_dimension_numbers<[1], [0], [0], [1], [0, 0, 1, 1], [], []>} : vector<64x384xbf16>, vector<384x128xbf16>, vector<64x128xf32> -> vector<64x128xf32>
    %45 = arith.addf %39, %44 : vector<64x128xf32>
    %c5 = arith.constant 5 : index
    %c0_55 = arith.constant 0 : index
    %c0_56 = arith.constant 0 : index
    %46 = vector.load %arg5[%c5, %c0_55, %c0_56] : memref<18x16x384xbf16, #tpu.memory_space<vmem>>, vector<4x16x384xbf16>
    %47 = vector.shape_cast %46 : vector<4x16x384xbf16> to vector<64x384xbf16>
    %c1_57 = arith.constant 1 : index
    %c0_58 = arith.constant 0 : index
    %c0_59 = arith.constant 0 : index
    %48 = vector.load %arg2[%c1_57, %c0_58, %c0_59] : memref<3x384x128xbf16, #tpu.memory_space<vmem>>, vector<1x384x128xbf16>
    %49 = vector.shape_cast %48 : vector<1x384x128xbf16> to vector<384x128xbf16>
    %cst_60 = arith.constant dense<0.000000e+00> : vector<64x128xf32>
    %50 = tpu.matmul %47, %49, %cst_60 {dimension_numbers = #tpu.dot_dimension_numbers<[1], [0], [0], [1], [0, 0, 1, 1], [], []>} : vector<64x384xbf16>, vector<384x128xbf16>, vector<64x128xf32> -> vector<64x128xf32>
    %51 = arith.addf %45, %50 : vector<64x128xf32>
    %c6 = arith.constant 6 : index
    %c0_61 = arith.constant 0 : index
    %c0_62 = arith.constant 0 : index
    %52 = vector.load %arg5[%c6, %c0_61, %c0_62] : memref<18x16x384xbf16, #tpu.memory_space<vmem>>, vector<4x16x384xbf16>
    %53 = vector.shape_cast %52 : vector<4x16x384xbf16> to vector<64x384xbf16>
    %c2_63 = arith.constant 2 : index
    %c0_64 = arith.constant 0 : index
    %c0_65 = arith.constant 0 : index
    %54 = vector.load %arg2[%c2_63, %c0_64, %c0_65] : memref<3x384x128xbf16, #tpu.memory_space<vmem>>, vector<1x384x128xbf16>
    %55 = vector.shape_cast %54 : vector<1x384x128xbf16> to vector<384x128xbf16>
    %cst_66 = arith.constant dense<0.000000e+00> : vector<64x128xf32>
    %56 = tpu.matmul %53, %55, %cst_66 {dimension_numbers = #tpu.dot_dimension_numbers<[1], [0], [0], [1], [0, 0, 1, 1], [], []>} : vector<64x384xbf16>, vector<384x128xbf16>, vector<64x128xf32> -> vector<64x128xf32>
    %57 = arith.addf %51, %56 : vector<64x128xf32>
    %58 = vector.broadcast %11 : vector<1x128xf32> to vector<64x128xf32>
    %59 = arith.addf %57, %58 : vector<64x128xf32>
    %cst_67 = arith.constant 0.000000e+00 : f32
    %60 = vector.broadcast %cst_67 : f32 to vector<64x128xf32>
    %61 = arith.maximumf %59, %60 : vector<64x128xf32>
    %62 = vector.shape_cast %61 : vector<64x128xf32> to vector<4x16x128xf32>
    %c0_68 = arith.constant 0 : index
    %c4_69 = arith.constant 4 : index
    %c0_70 = arith.constant 0 : index
    %c0_71 = arith.constant 0 : index
    %63 = vector.load %arg4[%c0_68, %c4_69, %c0_70, %c0_71] : memref<1x16x16x128xf32, #tpu.memory_space<vmem>>, vector<1x4x16x128xf32>
    %64 = vector.shape_cast %63 : vector<1x4x16x128xf32> to vector<4x16x128xf32>
    %65 = vector.shape_cast %62 : vector<4x16x128xf32> to vector<1x4x16x128xf32>
    tpu.vector_store %arg4[%c0_68, %c4_69, %c0_70, %c0_71], %65 {strides = array<i32>} : memref<1x16x16x128xf32, #tpu.memory_space<vmem>>, vector<1x4x16x128xf32>,
    %cst_72 = arith.constant 0.000000e+00 : f32
    %66 = vector.broadcast %cst_72 : f32 to vector<64x128xf32>
    %c8 = arith.constant 8 : index
    %c0_73 = arith.constant 0 : index
    %c0_74 = arith.constant 0 : index
    %67 = vector.load %arg5[%c8, %c0_73, %c0_74] : memref<18x16x384xbf16, #tpu.memory_space<vmem>>, vector<4x16x384xbf16>
    %68 = vector.shape_cast %67 : vector<4x16x384xbf16> to vector<64x384xbf16>
    %c0_75 = arith.constant 0 : index
    %c0_76 = arith.constant 0 : index
    %c0_77 = arith.constant 0 : index
    %69 = vector.load %arg2[%c0_75, %c0_76, %c0_77] : memref<3x384x128xbf16, #tpu.memory_space<vmem>>, vector<1x384x128xbf16>
    %70 = vector.shape_cast %69 : vector<1x384x128xbf16> to vector<384x128xbf16>
    %cst_78 = arith.constant dense<0.000000e+00> : vector<64x128xf32>
    %71 = tpu.matmul %68, %70, %cst_78 {dimension_numbers = #tpu.dot_dimension_numbers<[1], [0], [0], [1], [0, 0, 1, 1], [], []>} : vector<64x384xbf16>, vector<384x128xbf16>, vector<64x128xf32> -> vector<64x128xf32>
    %72 = arith.addf %66, %71 : vector<64x128xf32>
    %c9 = arith.constant 9 : index
    %c0_79 = arith.constant 0 : index
    %c0_80 = arith.constant 0 : index
    %73 = vector.load %arg5[%c9, %c0_79, %c0_80] : memref<18x16x384xbf16, #tpu.memory_space<vmem>>, vector<4x16x384xbf16>
    %74 = vector.shape_cast %73 : vector<4x16x384xbf16> to vector<64x384xbf16>
    %c1_81 = arith.constant 1 : index
    %c0_82 = arith.constant 0 : index
    %c0_83 = arith.constant 0 : index
    %75 = vector.load %arg2[%c1_81, %c0_82, %c0_83] : memref<3x384x128xbf16, #tpu.memory_space<vmem>>, vector<1x384x128xbf16>
    %76 = vector.shape_cast %75 : vector<1x384x128xbf16> to vector<384x128xbf16>
    %cst_84 = arith.constant dense<0.000000e+00> : vector<64x128xf32>
    %77 = tpu.matmul %74, %76, %cst_84 {dimension_numbers = #tpu.dot_dimension_numbers<[1], [0], [0], [1], [0, 0, 1, 1], [], []>} : vector<64x384xbf16>, vector<384x128xbf16>, vector<64x128xf32> -> vector<64x128xf32>
    %78 = arith.addf %72, %77 : vector<64x128xf32>
    %c10 = arith.constant 10 : index
    %c0_85 = arith.constant 0 : index
    %c0_86 = arith.constant 0 : index
    %79 = vector.load %arg5[%c10, %c0_85, %c0_86] : memref<18x16x384xbf16, #tpu.memory_space<vmem>>, vector<4x16x384xbf16>
    %80 = vector.shape_cast %79 : vector<4x16x384xbf16> to vector<64x384xbf16>
    %c2_87 = arith.constant 2 : index
    %c0_88 = arith.constant 0 : index
    %c0_89 = arith.constant 0 : index
    %81 = vector.load %arg2[%c2_87, %c0_88, %c0_89] : memref<3x384x128xbf16, #tpu.memory_space<vmem>>, vector<1x384x128xbf16>
    %82 = vector.shape_cast %81 : vector<1x384x128xbf16> to vector<384x128xbf16>
    %cst_90 = arith.constant dense<0.000000e+00> : vector<64x128xf32>
    %83 = tpu.matmul %80, %82, %cst_90 {dimension_numbers = #tpu.dot_dimension_numbers<[1], [0], [0], [1], [0, 0, 1, 1], [], []>} : vector<64x384xbf16>, vector<384x128xbf16>, vector<64x128xf32> -> vector<64x128xf32>
    %84 = arith.addf %78, %83 : vector<64x128xf32>
    %85 = vector.broadcast %11 : vector<1x128xf32> to vector<64x128xf32>
    %86 = arith.addf %84, %85 : vector<64x128xf32>
    %cst_91 = arith.constant 0.000000e+00 : f32
    %87 = vector.broadcast %cst_91 : f32 to vector<64x128xf32>
    %88 = arith.maximumf %86, %87 : vector<64x128xf32>
    %89 = vector.shape_cast %88 : vector<64x128xf32> to vector<4x16x128xf32>
    %c0_92 = arith.constant 0 : index
    %c8_93 = arith.constant 8 : index
    %c0_94 = arith.constant 0 : index
    %c0_95 = arith.constant 0 : index
    %90 = vector.load %arg4[%c0_92, %c8_93, %c0_94, %c0_95] : memref<1x16x16x128xf32, #tpu.memory_space<vmem>>, vector<1x4x16x128xf32>
    %91 = vector.shape_cast %90 : vector<1x4x16x128xf32> to vector<4x16x128xf32>
    %92 = vector.shape_cast %89 : vector<4x16x128xf32> to vector<1x4x16x128xf32>
    tpu.vector_store %arg4[%c0_92, %c8_93, %c0_94, %c0_95], %92 {strides = array<i32>} : memref<1x16x16x128xf32, #tpu.memory_space<vmem>>, vector<1x4x16x128xf32>,
    %cst_96 = arith.constant 0.000000e+00 : f32
    %93 = vector.broadcast %cst_96 : f32 to vector<64x128xf32>
    %c12 = arith.constant 12 : index
    %c0_97 = arith.constant 0 : index
    %c0_98 = arith.constant 0 : index
    %94 = vector.load %arg5[%c12, %c0_97, %c0_98] : memref<18x16x384xbf16, #tpu.memory_space<vmem>>, vector<4x16x384xbf16>
    %95 = vector.shape_cast %94 : vector<4x16x384xbf16> to vector<64x384xbf16>
    %c0_99 = arith.constant 0 : index
    %c0_100 = arith.constant 0 : index
    %c0_101 = arith.constant 0 : index
    %96 = vector.load %arg2[%c0_99, %c0_100, %c0_101] : memref<3x384x128xbf16, #tpu.memory_space<vmem>>, vector<1x384x128xbf16>
    %97 = vector.shape_cast %96 : vector<1x384x128xbf16> to vector<384x128xbf16>
    %cst_102 = arith.constant dense<0.000000e+00> : vector<64x128xf32>
    %98 = tpu.matmul %95, %97, %cst_102 {dimension_numbers = #tpu.dot_dimension_numbers<[1], [0], [0], [1], [0, 0, 1, 1], [], []>} : vector<64x384xbf16>, vector<384x128xbf16>, vector<64x128xf32> -> vector<64x128xf32>
    %99 = arith.addf %93, %98 : vector<64x128xf32>
    %c13 = arith.constant 13 : index
    %c0_103 = arith.constant 0 : index
    %c0_104 = arith.constant 0 : index
    %100 = vector.load %arg5[%c13, %c0_103, %c0_104] : memref<18x16x384xbf16, #tpu.memory_space<vmem>>, vector<4x16x384xbf16>
    %101 = vector.shape_cast %100 : vector<4x16x384xbf16> to vector<64x384xbf16>
    %c1_105 = arith.constant 1 : index
    %c0_106 = arith.constant 0 : index
    %c0_107 = arith.constant 0 : index
    %102 = vector.load %arg2[%c1_105, %c0_106, %c0_107] : memref<3x384x128xbf16, #tpu.memory_space<vmem>>, vector<1x384x128xbf16>
    %103 = vector.shape_cast %102 : vector<1x384x128xbf16> to vector<384x128xbf16>
    %cst_108 = arith.constant dense<0.000000e+00> : vector<64x128xf32>
    %104 = tpu.matmul %101, %103, %cst_108 {dimension_numbers = #tpu.dot_dimension_numbers<[1], [0], [0], [1], [0, 0, 1, 1], [], []>} : vector<64x384xbf16>, vector<384x128xbf16>, vector<64x128xf32> -> vector<64x128xf32>
    %105 = arith.addf %99, %104 : vector<64x128xf32>
    %c14 = arith.constant 14 : index
    %c0_109 = arith.constant 0 : index
    %c0_110 = arith.constant 0 : index
    %106 = vector.load %arg5[%c14, %c0_109, %c0_110] : memref<18x16x384xbf16, #tpu.memory_space<vmem>>, vector<4x16x384xbf16>
    %107 = vector.shape_cast %106 : vector<4x16x384xbf16> to vector<64x384xbf16>
    %c2_111 = arith.constant 2 : index
    %c0_112 = arith.constant 0 : index
    %c0_113 = arith.constant 0 : index
    %108 = vector.load %arg2[%c2_111, %c0_112, %c0_113] : memref<3x384x128xbf16, #tpu.memory_space<vmem>>, vector<1x384x128xbf16>
    %109 = vector.shape_cast %108 : vector<1x384x128xbf16> to vector<384x128xbf16>
    %cst_114 = arith.constant dense<0.000000e+00> : vector<64x128xf32>
    %110 = tpu.matmul %107, %109, %cst_114 {dimension_numbers = #tpu.dot_dimension_numbers<[1], [0], [0], [1], [0, 0, 1, 1], [], []>} : vector<64x384xbf16>, vector<384x128xbf16>, vector<64x128xf32> -> vector<64x128xf32>
    %111 = arith.addf %105, %110 : vector<64x128xf32>
    %112 = vector.broadcast %11 : vector<1x128xf32> to vector<64x128xf32>
    %113 = arith.addf %111, %112 : vector<64x128xf32>
    %cst_115 = arith.constant 0.000000e+00 : f32
    %114 = vector.broadcast %cst_115 : f32 to vector<64x128xf32>
    %115 = arith.maximumf %113, %114 : vector<64x128xf32>
    %116 = vector.shape_cast %115 : vector<64x128xf32> to vector<4x16x128xf32>
    %c0_116 = arith.constant 0 : index
    %c12_117 = arith.constant 12 : index
    %c0_118 = arith.constant 0 : index
    %c0_119 = arith.constant 0 : index
    %117 = vector.load %arg4[%c0_116, %c12_117, %c0_118, %c0_119] : memref<1x16x16x128xf32, #tpu.memory_space<vmem>>, vector<1x4x16x128xf32>
    %118 = vector.shape_cast %117 : vector<1x4x16x128xf32> to vector<4x16x128xf32>
    %119 = vector.shape_cast %116 : vector<4x16x128xf32> to vector<1x4x16x128xf32>
    tpu.vector_store %arg4[%c0_116, %c12_117, %c0_118, %c0_119], %119 {strides = array<i32>} : memref<1x16x16x128xf32, #tpu.memory_space<vmem>>, vector<1x4x16x128xf32>,
    return
  }
  func.func @transform_0(%arg0: i32) -> (i32, i32, i32, i32) {
    %c0_i32 = arith.constant 0 : i32
    %c0_i32_0 = arith.constant 0 : i32
    %c0_i32_1 = arith.constant 0 : i32
    %c0_i32_2 = arith.constant 0 : i32
    return %arg0, %c0_i32, %c0_i32_0, %c0_i32_1 : i32, i32, i32, i32
  }
  func.func @transform_1(%arg0: i32) -> (i32, i32, i32) {
    %c0_i32 = arith.constant 0 : i32
    %c0_i32_0 = arith.constant 0 : i32
    %c0_i32_1 = arith.constant 0 : i32
    %c0_i32_2 = arith.constant 0 : i32
    return %c0_i32, %c0_i32_0, %c0_i32_1 : i32, i32, i32
  }
  func.func @transform_2(%arg0: i32) -> (i32, i32) {
    %c0_i32 = arith.constant 0 : i32
    %c0_i32_0 = arith.constant 0 : i32
    %c0_i32_1 = arith.constant 0 : i32
    return %c0_i32, %c0_i32_0 : i32, i32
  }
  func.func @transform_3(%arg0: i32) -> (i32, i32, i32, i32) {
    %c0_i32 = arith.constant 0 : i32
    %c0_i32_0 = arith.constant 0 : i32
    %c0_i32_1 = arith.constant 0 : i32
    %c0_i32_2 = arith.constant 0 : i32
    return %arg0, %c0_i32, %c0_i32_0, %c0_i32_1 : i32, i32, i32, i32
  }
}

</mosaic_0001>

<llo_original>
// kernel: tpu_custom_call.1
$region0: #{tpu_custom_call.1}
  #allocation0 [shape = 'u32[]', space=smem, size = 0x4, offset = 0x4, fixed_abs, tag = 'smem constant byte address 0x4 - core index']
  #allocation1 [shape = 'u32[144,128]{1,0:T(1,128)}', space=vmem, size = 0x12000, scoped, tag = 'internal scratch']
  #allocation2 [shape = 'bf16[18,16,384]{2,1,0:T(8,128)(2,1)}', space=vmem, size = 0x36000, scoped, tag = 'scratch operand']
  %s0 = inlined_call_operand.hbm [shape: bf16[2,16,16,128], index: 0, kind: input, shape index: {}]
  %s1 = inlined_call_operand.hbm [shape: bf16[3,384,128], index: 1, kind: input, shape index: {}]
  %s2 = inlined_call_operand.vmem [shape: f32[1,128], index: 2, kind: input, shape index: {}]
  %s3 = inlined_call_operand.hbm [shape: f32[2,16,16,128], index: 3, kind: output, shape index: {}]
  %s4 = sld [smem:[#allocation0]]
  $region53: #{tpu_custom_call.1} parent=0
    _
  %s6 = ssub.s32 1, %s4
  %s7 = scalar_select 0, %s6, %s4
  $region1: #{tpu_custom_call.1} parent=0
    #allocation3 [shape = 'u8[131072]{0}', space=vmem, size = 0x20000, scoped, tag = 'input window, operand 0']
    #allocation4 [shape = 's32[2]{0}', space=sflag, size = 0x8, scoped, tag = 'scoped memory for tpu_custom_call.1']
    #allocation5 [shape = 's32[2]{0}', space=sflag, size = 0x8, scoped, tag = 'scoped memory for tpu_custom_call.1']
    #allocation6 [shape = 'u8[294912]{0}', space=vmem, size = 0x48000, scoped, tag = 'input window, operand 1, single buffered']
    #allocation7 [shape = 's32[1]{0}', space=sflag, size = 0x4, scoped, tag = 'scoped memory for tpu_custom_call.1']
    #allocation8 [shape = 'u8[262144]{0}', space=vmem, size = 0x40000, scoped, tag = 'output window, operand 0']
    %8 = vsyncpa [#allocation4], 0
    %s9 = scalar_lea.sflag [#allocation4], 1
    %10 = vsyncpa %s9, 0
    %11 = vsyncpa [#allocation7], 0
    %12 = vsyncpa [#allocation5], 0
    %s13 = scalar_lea.sflag [#allocation5], 1
    %14 = vsyncpa %s13, 0
    loop: start=0, step=1, limit=4
    $region2: #{tpu_custom_call.1} parent=1 // loop_pre_header
      _
    $region3: #{tpu_custom_call.1} parent=1 // loop_header
      %s16 = sphi 0, %s20
      %p17 = scmp.ge.s32.totalorder %s16, 4
      %s26 = sphi 0, %s28
      %s29 = sphi 0, %s26
      %s30 = sphi 0, %s29
      %s46 = sphi 0, %s30
      %s50 = sphi 0, %s50
      %s52 = sphi 0, %s50
      %s53 = sphi 0, %s52
      %s67 = sphi 0, %s53
      %s71 = sphi 0, %s71
      %s73 = sphi 0, %s71
      %s74 = sphi 0, %s73
      %s88 = sphi 0, %s74
      %s94 = sphi 0, %s96
      %s97 = sphi 0, %s94
      %s98 = sphi 0, %s97
      %s114 = sphi 0, %s98
    $region4: #{tpu_custom_call.1} parent=1 // loop_header_branch
      %19 = sbr.rel (%p17) target = $region8
    $region5: #{tpu_custom_call.1} parent=1 // loop_body
      %s21 = ssub.s32 %s16, 1
      %s22 = ssub.s32 %s16, 2
      %s23 = sadd.s32 %s16, 1
      %s24 = ssub.s32 %s16, %s23
      %p25 = scmp.eq.s32.totalorder %s24, 0
      %s27 = sadd.s32 %s26, 1
      %s28 = scalar_select %p25, %s26, %s27
      %p31 = pneg %p25
      %p32 = scmp.eq.s32.totalorder %s16, 1
      %p33 = por %p31, %p32
      %p34 = scmp.ne.s32.totalorder %s26, %s29
      %p35 = scmp.eq.s32.totalorder %s16, 0
      %p36 = por %p34, %p35
      %p37 = scmp.ne.s32.totalorder %s26, %s29
      %p38 = scmp.eq.s32.totalorder %s21, 1
      %p39 = por %p37, %p38
      %p40 = scmp.ne.s32.totalorder %s29, %s30
      %p41 = scmp.eq.s32.totalorder %s21, 0
      %p42 = por %p40, %p41
      %p43 = scmp.ne.s32.totalorder %s29, %s30
      %p44 = scmp.eq.s32.totalorder %s22, 1
      %p45 = por %p43, %p44
      %p47 = scmp.ne.s32.totalorder %s30, %s46
      %p48 = scmp.eq.s32.totalorder %s22, 0
      %p49 = por %p47, %p48
      %s51 = sadd.s32 %s50, 1
      %p54 = scmp.eq.s32.totalorder %s16, 1
      %p55 = scmp.ne.s32.totalorder %s50, %s52
      %p56 = scmp.eq.s32.totalorder %s16, 0
      %p57 = por %p55, %p56
      %p58 = scmp.ne.s32.totalorder %s50, %s52
      %p59 = scmp.eq.s32.totalorder %s21, 1
      %p60 = por %p58, %p59
      %p61 = scmp.ne.s32.totalorder %s52, %s53
      %p62 = scmp.eq.s32.totalorder %s21, 0
      %p63 = por %p61, %p62
      %p64 = scmp.ne.s32.totalorder %s52, %s53
      %p65 = scmp.eq.s32.totalorder %s22, 1
      %p66 = por %p64, %p65
      %p68 = scmp.ne.s32.totalorder %s53, %s67
      %p69 = scmp.eq.s32.totalorder %s22, 0
      %p70 = por %p68, %p69
      %s72 = sadd.s32 %s71, 1
      %p75 = scmp.eq.s32.totalorder %s16, 1
      %p76 = scmp.ne.s32.totalorder %s71, %s73
      %p77 = scmp.eq.s32.totalorder %s16, 0
      %p78 = por %p76, %p77
      %p79 = scmp.ne.s32.totalorder %s71, %s73
      %p80 = scmp.eq.s32.totalorder %s21, 1
      %p81 = por %p79, %p80
      %p82 = scmp.ne.s32.totalorder %s73, %s74
      %p83 = scmp.eq.s32.totalorder %s21, 0
      %p84 = por %p82, %p83
      %p85 = scmp.ne.s32.totalorder %s73, %s74
      %p86 = scmp.eq.s32.totalorder %s22, 1
      %p87 = por %p85, %p86
      %p89 = scmp.ne.s32.totalorder %s74, %s88
      %p90 = scmp.eq.s32.totalorder %s22, 0
      %p91 = por %p89, %p90
      %s92 = ssub.s32 %s16, %s23
      %p93 = scmp.eq.s32.totalorder %s92, 0
      %s95 = sadd.s32 %s94, 1
      %s96 = scalar_select %p93, %s94, %s95
      %p99 = pneg %p93
      %p100 = scmp.eq.s32.totalorder %s16, 1
      %p101 = por %p99, %p100
      %p102 = scmp.ne.s32.totalorder %s94, %s97
      %p103 = scmp.eq.s32.totalorder %s16, 0
      %p104 = por %p102, %p103
      %p105 = scmp.ne.s32.totalorder %s94, %s97
      %p106 = scmp.eq.s32.totalorder %s21, 1
      %p107 = por %p105, %p106
      %p108 = scmp.ne.s32.totalorder %s97, %s98
      %p109 = scmp.eq.s32.totalorder %s21, 0
      %p110 = por %p108, %p109
      %p111 = scmp.ne.s32.totalorder %s97, %s98
      %p112 = scmp.eq.s32.totalorder %s22, 1
      %p113 = por %p111, %p112
      %p115 = scmp.ne.s32.totalorder %s98, %s114
      %p116 = scmp.eq.s32.totalorder %s22, 0
      %p117 = por %p115, %p116
      %p118 = scmp.le.s32.totalorder 1, %s16
      %p119 = scmp.lt.s32.totalorder %s16, 3
      %p120 = pnand %p118, %p119
      %p121 = pneg %p120
      // Predicated region
      $region9: #{tpu_custom_call.1} parent=5 // pred_check
        _
      $region10: #{tpu_custom_call.1} parent=5 // pred_check_branch
        %123 = sbr.rel (%p120) target = $region12
      $region11: #{tpu_custom_call.1} parent=5 // pred_region
        %s124 = ssub.s32 %s16, 1
        // Predicated region
        $region13: #{tpu_custom_call.1} parent=11 // pred_check
          %p125 = pneg %p63
        $region14: #{tpu_custom_call.1} parent=11 // pred_check_branch
          %127 = sbr.rel (%p125) target = $region16
        $region15: #{tpu_custom_call.1} parent=11 // pred_region
          %s129 = ssub.s32 9216, 9216
          %130 = vsyncadd [#allocation7], %s129
          %s131 = sshll.u32 [#allocation6], 4
          %s132 = int_to_ptr.vmem [resolvable:$true] %s131
          %137 = dma.hbm_to_vmem [thread:$0]  %s1, 9216, %s132, [#allocation7], 64, 64, 4
        $region16: #{tpu_custom_call.1} parent=11 // pred_fallthru
          _
        // Predicated region
        $region17: #{tpu_custom_call.1} parent=11 // pred_check
          %p138 = pneg %p84
        $region18: #{tpu_custom_call.1} parent=11 // pred_check_branch
          %140 = sbr.rel (%p138) target = $region20
        $region19: #{tpu_custom_call.1} parent=11 // pred_region
          _
        $region20: #{tpu_custom_call.1} parent=11 // pred_fallthru
          _
      $region12: #{tpu_custom_call.1} parent=5 // pred_fallthru
        _
      %p141 = scmp.lt.s32.totalorder %s16, 2
      // Predicated region
      $region21: #{tpu_custom_call.1} parent=5 // pred_check
        %p142 = pneg %p141
      $region22: #{tpu_custom_call.1} parent=5 // pred_check_branch
        %144 = sbr.rel (%p142) target = $region24
      $region23: #{tpu_custom_call.1} parent=5 // pred_region
        // Predicated region
        $region25: #{tpu_custom_call.1} parent=23 // pred_check
          %p145 = pneg %p36
        $region26: #{tpu_custom_call.1} parent=23 // pred_check_branch
          %147 = sbr.rel (%p145) target = $region28
        $region27: #{tpu_custom_call.1} parent=23 // pred_region
          %s148 = sand.u32 %s26, 1
          %s149 = scalar_lea.sflag [#allocation4], %s148
          %s150 = sand.u32 %s26, 1
          %s151 = smul.addr %s150, 128
          %s152 = scalar_lea.vmem [#allocation3], %s151
          %s154 = ssub.s32 2048, 2048
          %155 = vsyncadd %s149, %s154
          %s156 = smul.addr %s16, 32
          %s157 = smul.addr %s156, 64
          %s158 = scalar_lea.hbm %s0, %s157
          %s159 = sshll.u32 %s152, 4
          %s160 = int_to_ptr.vmem [resolvable:$true] %s159
          %165 = dma.hbm_to_vmem [thread:$0]  %s158, 2048, %s160, %s149, 64, 64, 4
        $region28: #{tpu_custom_call.1} parent=23 // pred_fallthru
          _
      $region24: #{tpu_custom_call.1} parent=5 // pred_fallthru
        _
      %p166 = scmp.le.s32.totalorder 1, %s16
      %p167 = scmp.lt.s32.totalorder %s16, 3
      %p168 = pnand %p166, %p167
      %p169 = pneg %p168
      // Predicated region
      $region29: #{tpu_custom_call.1} parent=5 // pred_check
        _
      $region30: #{tpu_custom_call.1} parent=5 // pred_check_branch
        %171 = sbr.rel (%p168) target = $region32
      $region31: #{tpu_custom_call.1} parent=5 // pred_region
        %s172 = ssub.s32 %s16, 1
        %s173 = sand.u32 %s29, 1
        %s174 = scalar_lea.sflag [#allocation4], %s173
        %s175 = sand.u32 %s29, 1
        %s176 = smul.addr %s175, 128
        %s177 = scalar_lea.vmem [#allocation3], %s176
        // Predicated region
        $region33: #{tpu_custom_call.1} parent=31 // pred_check
          %p178 = pneg %p42
        $region34: #{tpu_custom_call.1} parent=31 // pred_check_branch
          %180 = sbr.rel (%p178) target = $region36
        $region35: #{tpu_custom_call.1} parent=31 // pred_region
          %181 = dma.done %s174, 2048
        $region36: #{tpu_custom_call.1} parent=31 // pred_fallthru
          _
        // Predicated region
        $region37: #{tpu_custom_call.1} parent=31 // pred_check
          %p182 = pneg %p63
        $region38: #{tpu_custom_call.1} parent=31 // pred_check_branch
          %184 = sbr.rel (%p182) target = $region40
        $region39: #{tpu_custom_call.1} parent=31 // pred_region
          %185 = dma.done [#allocation7], 9216
        $region40: #{tpu_custom_call.1} parent=31 // pred_fallthru
          _
        %s186 = sand.u32 %s29, 1
        %s187 = scalar_lea.sflag [#allocation4], %s186
        %s188 = sand.u32 %s29, 1
        %s189 = smul.addr %s188, 128
        %s190 = scalar_lea.vmem [#allocation3], %s189
        %p191 = pneg %p42
        %p192 = pneg %p39
        %p193 = pneg %p63
        %p194 = pneg %p60
        %p195 = pneg %p84
        %p196 = pneg %p81
        %p197 = pneg %p110
        %p198 = pneg %p107
        %s199 = sand.u32 %s97, 1
        %s200 = scalar_lea.sflag [#allocation5], %s199
        %s201 = sand.u32 %s97, 1
        %s202 = smul.addr %s201, 256
        %s203 = scalar_lea.vmem [#allocation8], %s202
        %205 = vst [vmem:[#allocation2] sm:$0xff] 0
        %206 = vst [vmem:[#allocation2 + $0x8] sm:$0xf] 0
        %207 = vst [vmem:[#allocation2 + $0xc] sm:$0xff] 0
        %208 = vst [vmem:[#allocation2 + $0x14] sm:$0xf] 0
        %209 = vst [vmem:[#allocation2 + $0x18] sm:$0xff] 0
        %210 = vst [vmem:[#allocation2 + $0x20] sm:$0xf] 0
        %211 = vst [vmem:[#allocation2 + $0x24] sm:$0xff] 0
        %212 = vst [vmem:[#allocation2 + $0x2c] sm:$0xf] 0
        %213 = vst [vmem:[#allocation2 + $0x30] sm:$0xff] 0
        %214 = vst [vmem:[#allocation2 + $0x38] sm:$0xf] 0
        %215 = vst [vmem:[#allocation2 + $0x3c] sm:$0xff] 0
        %216 = vst [vmem:[#allocation2 + $0x44] sm:$0xf] 0
        %217 = vst [vmem:[#allocation2 + $0x48] sm:$0xff] 0
        %218 = vst [vmem:[#allocation2 + $0x50] sm:$0xf] 0
        %219 = vst [vmem:[#allocation2 + $0x54] sm:$0xff] 0
        %220 = vst [vmem:[#allocation2 + $0x5c] sm:$0xf] 0
        %221 = vst [vmem:[#allocation2 + $0x60] sm:$0xff] 0
        %222 = vst [vmem:[#allocation2 + $0x68] sm:$0xf] 0
        %223 = vst [vmem:[#allocation2 + $0x6c] sm:$0xff] 0
        %224 = vst [vmem:[#allocation2 + $0x74] sm:$0xf] 0
        %225 = vst [vmem:[#allocation2 + $0x78] sm:$0xff] 0
        %226 = vst [vmem:[#allocation2 + $0x80] sm:$0xf] 0
        %227 = vst [vmem:[#allocation2 + $0x84] sm:$0xff] 0
        %228 = vst [vmem:[#allocation2 + $0x8c] sm:$0xf] 0
        %229 = vst [vmem:[#allocation2 + $0x90] sm:$0xff] 0
        %230 = vst [vmem:[#allocation2 + $0x98] sm:$0xf] 0
        %231 = vst [vmem:[#allocation2 + $0x9c] sm:$0xff] 0
        %232 = vst [vmem:[#allocation2 + $0xa4] sm:$0xf] 0
        %233 = vst [vmem:[#allocation2 + $0xa8] sm:$0xff] 0
        %234 = vst [vmem:[#allocation2 + $0xb0] sm:$0xf] 0
        %235 = vst [vmem:[#allocation2 + $0xb4] sm:$0xff] 0
        %236 = vst [vmem:[#allocation2 + $0xbc] sm:$0xf] 0
        %237 = vst [vmem:[#allocation2 + $0xc0] sm:$0xff] 0
        %238 = vst [vmem:[#allocation2 + $0xc8] sm:$0xf] 0
        %239 = vst [vmem:[#allocation2 + $0xcc] sm:$0xff] 0
        %240 = vst [vmem:[#allocation2 + $0xd4] sm:$0xf] 0
        %241 = vst [vmem:[#allocation2 + $0xd8] sm:$0xff] 0
        %242 = vst [vmem:[#allocation2 + $0xe0] sm:$0xf] 0
        %243 = vst [vmem:[#allocation2 + $0xe4] sm:$0xff] 0
        %244 = vst [vmem:[#allocation2 + $0xec] sm:$0xf] 0
        %245 = vst [vmem:[#allocation2 + $0xf0] sm:$0xff] 0
        %246 = vst [vmem:[#allocation2 + $0xf8] sm:$0xf] 0
        %247 = vst [vmem:[#allocation2 + $0xfc] sm:$0xff] 0
        %248 = vst [vmem:[#allocation2 + $0x104] sm:$0xf] 0
        %249 = vst [vmem:[#allocation2 + $0x108] sm:$0xff] 0
        %250 = vst [vmem:[#allocation2 + $0x110] sm:$0xf] 0
        %251 = vst [vmem:[#allocation2 + $0x114] sm:$0xff] 0
        %252 = vst [vmem:[#allocation2 + $0x11c] sm:$0xf] 0
        %253 = vst [vmem:[#allocation2 + $0x120] sm:$0xff] 0
        %254 = vst [vmem:[#allocation2 + $0x128] sm:$0xf] 0
        %255 = vst [vmem:[#allocation2 + $0x12c] sm:$0xff] 0
        %256 = vst [vmem:[#allocation2 + $0x134] sm:$0xf] 0
        %257 = vst [vmem:[#allocation2 + $0x138] sm:$0xff] 0
        %258 = vst [vmem:[#allocation2 + $0x140] sm:$0xf] 0
        %259 = vst [vmem:[#allocation2 + $0x144] sm:$0xff] 0
        %260 = vst [vmem:[#allocation2 + $0x14c] sm:$0xf] 0
        %261 = vst [vmem:[#allocation2 + $0x150] sm:$0xff] 0
        %262 = vst [vmem:[#allocation2 + $0x158] sm:$0xf] 0
        %263 = vst [vmem:[#allocation2 + $0x15c] sm:$0xff] 0
        %264 = vst [vmem:[#allocation2 + $0x164] sm:$0xf] 0
        %265 = vst [vmem:[#allocation2 + $0x168] sm:$0xff] 0
        %266 = vst [vmem:[#allocation2 + $0x170] sm:$0xf] 0
        %267 = vst [vmem:[#allocation2 + $0x174] sm:$0xff] 0
        %268 = vst [vmem:[#allocation2 + $0x17c] sm:$0xf] 0
        %269 = vst [vmem:[#allocation2 + $0x180] sm:$0xff] 0
        %270 = vst [vmem:[#allocation2 + $0x188] sm:$0xf] 0
        %271 = vst [vmem:[#allocation2 + $0x18c] sm:$0xff] 0
        %272 = vst [vmem:[#allocation2 + $0x194] sm:$0xf] 0
        %273 = vst [vmem:[#allocation2 + $0x198] sm:$0xff] 0
        %274 = vst [vmem:[#allocation2 + $0x1a0] sm:$0xf] 0
        %275 = vst [vmem:[#allocation2 + $0x1a4] sm:$0xff] 0
        %276 = vst [vmem:[#allocation2 + $0x1ac] sm:$0xf] 0
        %v277 = vld [vmem:[%s177] sm:$0xf]
        %v278 = vld [vmem:[%s177 + $0x4] sm:$0xf]
        %v279 = vld [vmem:[%s177 + $0x8] sm:$0xf]
        %v280 = vld [vmem:[%s177 + $0xc] sm:$0xf]
        %v281 = vld [vmem:[%s177 + $0x10] sm:$0xf]
        %v282 = vld [vmem:[%s177 + $0x14] sm:$0xf]
        %v283 = vld [vmem:[%s177 + $0x18] sm:$0xf]
        %v284 = vld [vmem:[%s177 + $0x1c] sm:$0xf]
        %v285 = vld [vmem:[%s177 + $0x20] sm:$0xf]
        %v286 = vld [vmem:[%s177 + $0x24] sm:$0xf]
        %v287 = vld [vmem:[%s177 + $0x28] sm:$0xf]
        %v288 = vld [vmem:[%s177 + $0x2c] sm:$0xf]
        %v289 = vld [vmem:[%s177 + $0x30] sm:$0xf]
        %v290 = vld [vmem:[%s177 + $0x34] sm:$0xf]
        %v291 = vld [vmem:[%s177 + $0x38] sm:$0xf]
        %v292 = vld [vmem:[%s177 + $0x3c] sm:$0xf]
        %v293 = vld [vmem:[%s177 + $0x40] sm:$0xf]
        %v294 = vld [vmem:[%s177 + $0x44] sm:$0xf]
        %v295 = vld [vmem:[%s177 + $0x48] sm:$0xf]
        %v296 = vld [vmem:[%s177 + $0x4c] sm:$0xf]
        %v297 = vld [vmem:[%s177 + $0x50] sm:$0xf]
        %v298 = vld [vmem:[%s177 + $0x54] sm:$0xf]
        %v299 = vld [vmem:[%s177 + $0x58] sm:$0xf]
        %v300 = vld [vmem:[%s177 + $0x5c] sm:$0xf]
        %v301 = vld [vmem:[%s177 + $0x60] sm:$0xf]
        %v302 = vld [vmem:[%s177 + $0x64] sm:$0xf]
        %v303 = vld [vmem:[%s177 + $0x68] sm:$0xf]
        %v304 = vld [vmem:[%s177 + $0x6c] sm:$0xf]
        %v305 = vld [vmem:[%s177 + $0x70] sm:$0xf]
        %v306 = vld [vmem:[%s177 + $0x74] sm:$0xf]
        %v307 = vld [vmem:[%s177 + $0x78] sm:$0xf]
        %v308 = vld [vmem:[%s177 + $0x7c] sm:$0xf]
        %vm309 = vsmask.f32 256
        %vm310 = vsmask.f32 4368
        %vm311 = vmor %vm309, %vm310
        %v313 = vshrl.u32 %v277, 16
        %v315 = vrot.slane %v313, 7
        %v316 = vshll.u32 %v277, 16
        %v318 = vor.u32 %v315, %v316
        %v319 = vrot.slane %v315, 4
        %v321 = vshrl.u32 %v278, 16
        %v323 = vrot.slane %v321, 7
        %v324 = vshll.u32 %v278, 16
        %v326 = vor.u32 %v323, %v324
        %v327 = vsel %vm311, %v319, %v326
        %v329 = vshrl.u32 %v279, 16
        %v331 = vrot.slane %v329, 7
        %v332 = vshll.u32 %v279, 16
        %v334 = vor.u32 %v331, %v332
        %v335 = vrot.slane %v331, 4
        %v337 = vshrl.u32 %v280, 16
        %v339 = vrot.slane %v337, 7
        %v340 = vshll.u32 %v280, 16
        %v342 = vor.u32 %v339, %v340
        %v343 = vsel %vm311, %v335, %v342
        %v345 = vshrl.u32 %v281, 16
        %v347 = vrot.slane %v345, 7
        %v348 = vshll.u32 %v281, 16
        %v350 = vor.u32 %v347, %v348
        %v351 = vrot.slane %v347, 4
        %v353 = vshrl.u32 %v282, 16
        %v355 = vrot.slane %v353, 7
        %v356 = vshll.u32 %v282, 16
        %v358 = vor.u32 %v355, %v356
        %v359 = vsel %vm311, %v351, %v358
        %v361 = vshrl.u32 %v283, 16
        %v363 = vrot.slane %v361, 7
        %v364 = vshll.u32 %v283, 16
        %v366 = vor.u32 %v363, %v364
        %v367 = vrot.slane %v363, 4
        %v369 = vshrl.u32 %v284, 16
        %v371 = vrot.slane %v369, 7
        %v372 = vshll.u32 %v284, 16
        %v374 = vor.u32 %v371, %v372
        %v375 = vsel %vm311, %v367, %v374
        %v377 = vshrl.u32 %v285, 16
        %v379 = vrot.slane %v377, 7
        %v380 = vshll.u32 %v285, 16
        %v382 = vor.u32 %v379, %v380
        %v383 = vrot.slane %v379, 4
        %v385 = vshrl.u32 %v286, 16
        %v387 = vrot.slane %v385, 7
        %v388 = vshll.u32 %v286, 16
        %v390 = vor.u32 %v387, %v388
        %v391 = vsel %vm311, %v383, %v390
        %v393 = vshrl.u32 %v287, 16
        %v395 = vrot.slane %v393, 7
        %v396 = vshll.u32 %v287, 16
        %v398 = vor.u32 %v395, %v396
        %v399 = vrot.slane %v395, 4
        %v401 = vshrl.u32 %v288, 16
        %v403 = vrot.slane %v401, 7
        %v404 = vshll.u32 %v288, 16
        %v406 = vor.u32 %v403, %v404
        %v407 = vsel %vm311, %v399, %v406
        %v409 = vshrl.u32 %v289, 16
        %v411 = vrot.slane %v409, 7
        %v412 = vshll.u32 %v289, 16
        %v414 = vor.u32 %v411, %v412
        %v415 = vrot.slane %v411, 4
        %v417 = vshrl.u32 %v290, 16
        %v419 = vrot.slane %v417, 7
        %v420 = vshll.u32 %v290, 16
        %v422 = vor.u32 %v419, %v420
        %v423 = vsel %vm311, %v415, %v422
        %v425 = vshrl.u32 %v291, 16
        %v427 = vrot.slane %v425, 7
        %v428 = vshll.u32 %v291, 16
        %v430 = vor.u32 %v427, %v428
        %v431 = vrot.slane %v427, 4
        %v433 = vshrl.u32 %v292, 16
        %v435 = vrot.slane %v433, 7
        %v436 = vshll.u32 %v292, 16
        %v438 = vor.u32 %v435, %v436
        %v439 = vsel %vm311, %v431, %v438
        %v441 = vshrl.u32 %v293, 16
        %v443 = vrot.slane %v441, 7
        %v444 = vshll.u32 %v293, 16
        %v446 = vor.u32 %v443, %v444
        %v447 = vrot.slane %v443, 4
        %v449 = vshrl.u32 %v294, 16
        %v451 = vrot.slane %v449, 7
        %v452 = vshll.u32 %v294, 16
        %v454 = vor.u32 %v451, %v452
        %v455 = vsel %vm311, %v447, %v454
        %v457 = vshrl.u32 %v295, 16
        %v459 = vrot.slane %v457, 7
        %v460 = vshll.u32 %v295, 16
        %v462 = vor.u32 %v459, %v460
        %v463 = vrot.slane %v459, 4
        %v465 = vshrl.u32 %v296, 16
        %v467 = vrot.slane %v465, 7
        %v468 = vshll.u32 %v296, 16
        %v470 = vor.u32 %v467, %v468
        %v471 = vsel %vm311, %v463, %v470
        %v473 = vshrl.u32 %v297, 16
        %v475 = vrot.slane %v473, 7
        %v476 = vshll.u32 %v297, 16
        %v478 = vor.u32 %v475, %v476
        %v479 = vrot.slane %v475, 4
        %v481 = vshrl.u32 %v298, 16
        %v483 = vrot.slane %v481, 7
        %v484 = vshll.u32 %v298, 16
        %v486 = vor.u32 %v483, %v484
        %v487 = vsel %vm311, %v479, %v486
        %v489 = vshrl.u32 %v299, 16
        %v491 = vrot.slane %v489, 7
        %v492 = vshll.u32 %v299, 16
        %v494 = vor.u32 %v491, %v492
        %v495 = vrot.slane %v491, 4
        %v497 = vshrl.u32 %v300, 16
        %v499 = vrot.slane %v497, 7
        %v500 = vshll.u32 %v300, 16
        %v502 = vor.u32 %v499, %v500
        %v503 = vsel %vm311, %v495, %v502
        %v505 = vshrl.u32 %v301, 16
        %v507 = vrot.slane %v505, 7
        %v508 = vshll.u32 %v301, 16
        %v510 = vor.u32 %v507, %v508
        %v511 = vrot.slane %v507, 4
        %v513 = vshrl.u32 %v302, 16
        %v515 = vrot.slane %v513, 7
        %v516 = vshll.u32 %v302, 16
        %v518 = vor.u32 %v515, %v516
        %v519 = vsel %vm311, %v511, %v518
        %v521 = vshrl.u32 %v303, 16
        %v523 = vrot.slane %v521, 7
        %v524 = vshll.u32 %v303, 16
        %v526 = vor.u32 %v523, %v524
        %v527 = vrot.slane %v523, 4
        %v529 = vshrl.u32 %v304, 16
        %v531 = vrot.slane %v529, 7
        %v532 = vshll.u32 %v304, 16
        %v534 = vor.u32 %v531, %v532
        %v535 = vsel %vm311, %v527, %v534
        %v537 = vshrl.u32 %v305, 16
        %v539 = vrot.slane %v537, 7
        %v540 = vshll.u32 %v305, 16
        %v542 = vor.u32 %v539, %v540
        %v543 = vrot.slane %v539, 4
        %v545 = vshrl.u32 %v306, 16
        %v547 = vrot.slane %v545, 7
        %v548 = vshll.u32 %v306, 16
        %v550 = vor.u32 %v547, %v548
        %v551 = vsel %vm311, %v543, %v550
        %v553 = vshrl.u32 %v307, 16
        %v555 = vrot.slane %v553, 7
        %v556 = vshll.u32 %v307, 16
        %v558 = vor.u32 %v555, %v556
        %v559 = vrot.slane %v555, 4
        %v561 = vshrl.u32 %v308, 16
        %v563 = vrot.slane %v561, 7
        %v564 = vshll.u32 %v308, 16
        %v566 = vor.u32 %v563, %v564
        %v567 = vsel %vm311, %v559, %v566
        %s600 = scalar_lea.vmem [#allocation2], 24
        %vm601 = vcmask 1043456
        %vm602 = vsmask.f32 7938
        %vm603 = vmand %vm601, %vm602
        %v604 = vld [vmem:[%s600] sm:$0xf]
        %v605 = vsel %vm603, %v318, %v604
        %606 = vst [vmem:[%s600] sm:$0xf] %v605
        %607 = vst [vmem:[%s600 + $0xc] sm:$0xf] %v327
        %v608 = vld [vmem:[%s600 + $0x18] sm:$0xf]
        %v609 = vsel %vm603, %v334, %v608
        %610 = vst [vmem:[%s600 + $0x18] sm:$0xf] %v609
        %611 = vst [vmem:[%s600 + $0x24] sm:$0xf] %v343
        %v612 = vld [vmem:[%s600 + $0x30] sm:$0xf]
        %v613 = vsel %vm603, %v350, %v612
        %614 = vst [vmem:[%s600 + $0x30] sm:$0xf] %v613
        %615 = vst [vmem:[%s600 + $0x3c] sm:$0xf] %v359
        %v616 = vld [vmem:[%s600 + $0x48] sm:$0xf]
        %v617 = vsel %vm603, %v366, %v616
        %618 = vst [vmem:[%s600 + $0x48] sm:$0xf] %v617
        %619 = vst [vmem:[%s600 + $0x54] sm:$0xf] %v375
        %v620 = vld [vmem:[%s600 + $0x60] sm:$0xf]
        %v621 = vsel %vm603, %v382, %v620
        %622 = vst [vmem:[%s600 + $0x60] sm:$0xf] %v621
        %623 = vst [vmem:[%s600 + $0x6c] sm:$0xf] %v391
        %v624 = vld [vmem:[%s600 + $0x78] sm:$0xf]
        %v625 = vsel %vm603, %v398, %v624
        %626 = vst [vmem:[%s600 + $0x78] sm:$0xf] %v625
        %627 = vst [vmem:[%s600 + $0x84] sm:$0xf] %v407
        %v628 = vld [vmem:[%s600 + $0x90] sm:$0xf]
        %v629 = vsel %vm603, %v414, %v628
        %630 = vst [vmem:[%s600 + $0x90] sm:$0xf] %v629
        %631 = vst [vmem:[%s600 + $0x9c] sm:$0xf] %v423
        %v632 = vld [vmem:[%s600 + $0xa8] sm:$0xf]
        %v633 = vsel %vm603, %v430, %v632
        %634 = vst [vmem:[%s600 + $0xa8] sm:$0xf] %v633
        %635 = vst [vmem:[%s600 + $0xb4] sm:$0xf] %v439
        %v636 = vld [vmem:[%s600 + $0xc0] sm:$0xf]
        %v637 = vsel %vm603, %v446, %v636
        %638 = vst [vmem:[%s600 + $0xc0] sm:$0xf] %v637
        %639 = vst [vmem:[%s600 + $0xcc] sm:$0xf] %v455
        %v640 = vld [vmem:[%s600 + $0xd8] sm:$0xf]
        %v641 = vsel %vm603, %v462, %v640
        %642 = vst [vmem:[%s600 + $0xd8] sm:$0xf] %v641
        %643 = vst [vmem:[%s600 + $0xe4] sm:$0xf] %v471
        %v644 = vld [vmem:[%s600 + $0xf0] sm:$0xf]
        %v645 = vsel %vm603, %v478, %v644
        %646 = vst [vmem:[%s600 + $0xf0] sm:$0xf] %v645
        %647 = vst [vmem:[%s600 + $0xfc] sm:$0xf] %v487
        %v648 = vld [vmem:[%s600 + $0x108] sm:$0xf]
        %v649 = vsel %vm603, %v494, %v648
        %650 = vst [vmem:[%s600 + $0x108] sm:$0xf] %v649
        %651 = vst [vmem:[%s600 + $0x114] sm:$0xf] %v503
        %v652 = vld [vmem:[%s600 + $0x120] sm:$0xf]
        %v653 = vsel %vm603, %v510, %v652
        %654 = vst [vmem:[%s600 + $0x120] sm:$0xf] %v653
        %655 = vst [vmem:[%s600 + $0x12c] sm:$0xf] %v519
        %v656 = vld [vmem:[%s600 + $0x138] sm:$0xf]
        %v657 = vsel %vm603, %v526, %v656
        %658 = vst [vmem:[%s600 + $0x138] sm:$0xf] %v657
        %659 = vst [vmem:[%s600 + $0x144] sm:$0xf] %v535
        %v660 = vld [vmem:[%s600 + $0x150] sm:$0xf]
        %v661 = vsel %vm603, %v542, %v660
        %662 = vst [vmem:[%s600 + $0x150] sm:$0xf] %v661
        %663 = vst [vmem:[%s600 + $0x15c] sm:$0xf] %v551
        %v664 = vld [vmem:[%s600 + $0x168] sm:$0xf]
        %v665 = vsel %vm603, %v558, %v664
        %666 = vst [vmem:[%s600 + $0x168] sm:$0xf] %v665
        %667 = vst [vmem:[%s600 + $0x174] sm:$0xf] %v567
        %v668 = vld [vmem:[%s177] sm:$0xf]
        %v669 = vld [vmem:[%s177 + $0x4] sm:$0xf]
        %v670 = vld [vmem:[%s177 + $0x8] sm:$0xf]
        %v671 = vld [vmem:[%s177 + $0xc] sm:$0xf]
        %v672 = vld [vmem:[%s177 + $0x10] sm:$0xf]
        %v673 = vld [vmem:[%s177 + $0x14] sm:$0xf]
        %v674 = vld [vmem:[%s177 + $0x18] sm:$0xf]
        %v675 = vld [vmem:[%s177 + $0x1c] sm:$0xf]
        %v676 = vld [vmem:[%s177 + $0x20] sm:$0xf]
        %v677 = vld [vmem:[%s177 + $0x24] sm:$0xf]
        %v678 = vld [vmem:[%s177 + $0x28] sm:$0xf]
        %v679 = vld [vmem:[%s177 + $0x2c] sm:$0xf]
        %v680 = vld [vmem:[%s177 + $0x30] sm:$0xf]
        %v681 = vld [vmem:[%s177 + $0x34] sm:$0xf]
        %v682 = vld [vmem:[%s177 + $0x38] sm:$0xf]
        %v683 = vld [vmem:[%s177 + $0x3c] sm:$0xf]
        %v684 = vld [vmem:[%s177 + $0x40] sm:$0xf]
        %v685 = vld [vmem:[%s177 + $0x44] sm:$0xf]
        %v686 = vld [vmem:[%s177 + $0x48] sm:$0xf]
        %v687 = vld [vmem:[%s177 + $0x4c] sm:$0xf]
        %v688 = vld [vmem:[%s177 + $0x50] sm:$0xf]
        %v689 = vld [vmem:[%s177 + $0x54] sm:$0xf]
        %v690 = vld [vmem:[%s177 + $0x58] sm:$0xf]
        %v691 = vld [vmem:[%s177 + $0x5c] sm:$0xf]
        %v692 = vld [vmem:[%s177 + $0x60] sm:$0xf]
        %v693 = vld [vmem:[%s177 + $0x64] sm:$0xf]
        %v694 = vld [vmem:[%s177 + $0x68] sm:$0xf]
        %v695 = vld [vmem:[%s177 + $0x6c] sm:$0xf]
        %v696 = vld [vmem:[%s177 + $0x70] sm:$0xf]
        %v697 = vld [vmem:[%s177 + $0x74] sm:$0xf]
        %v698 = vld [vmem:[%s177 + $0x78] sm:$0xf]
        %v699 = vld [vmem:[%s177 + $0x7c] sm:$0xf]
        %700 = vst [vmem:[%s600 + $0x4] sm:$0xf] %v668
        %701 = vst [vmem:[%s600 + $0x10] sm:$0xf] %v669
        %702 = vst [vmem:[%s600 + $0x1c] sm:$0xf] %v670
        %703 = vst [vmem:[%s600 + $0x28] sm:$0xf] %v671
        %704 = vst [vmem:[%s600 + $0x34] sm:$0xf] %v672
        %705 = vst [vmem:[%s600 + $0x40] sm:$0xf] %v673
        %706 = vst [vmem:[%s600 + $0x4c] sm:$0xf] %v674
        %707 = vst [vmem:[%s600 + $0x58] sm:$0xf] %v675
        %708 = vst [vmem:[%s600 + $0x64] sm:$0xf] %v676
        %709 = vst [vmem:[%s600 + $0x70] sm:$0xf] %v677
        %710 = vst [vmem:[%s600 + $0x7c] sm:$0xf] %v678
        %711 = vst [vmem:[%s600 + $0x88] sm:$0xf] %v679
        %712 = vst [vmem:[%s600 + $0x94] sm:$0xf] %v680
        %713 = vst [vmem:[%s600 + $0xa0] sm:$0xf] %v681
        %714 = vst [vmem:[%s600 + $0xac] sm:$0xf] %v682
        %715 = vst [vmem:[%s600 + $0xb8] sm:$0xf] %v683
        %716 = vst [vmem:[%s600 + $0xc4] sm:$0xf] %v684
        %717 = vst [vmem:[%s600 + $0xd0] sm:$0xf] %v685
        %718 = vst [vmem:[%s600 + $0xdc] sm:$0xf] %v686
        %719 = vst [vmem:[%s600 + $0xe8] sm:$0xf] %v687
        %720 = vst [vmem:[%s600 + $0xf4] sm:$0xf] %v688
        %721 = vst [vmem:[%s600 + $0x100] sm:$0xf] %v689
        %722 = vst [vmem:[%s600 + $0x10c] sm:$0xf] %v690
        %723 = vst [vmem:[%s600 + $0x118] sm:$0xf] %v691
        %724 = vst [vmem:[%s600 + $0x124] sm:$0xf] %v692
        %725 = vst [vmem:[%s600 + $0x130] sm:$0xf] %v693
        %726 = vst [vmem:[%s600 + $0x13c] sm:$0xf] %v694
        %727 = vst [vmem:[%s600 + $0x148] sm:$0xf] %v695
        %728 = vst [vmem:[%s600 + $0x154] sm:$0xf] %v696
        %729 = vst [vmem:[%s600 + $0x160] sm:$0xf] %v697
        %730 = vst [vmem:[%s600 + $0x16c] sm:$0xf] %v698
        %731 = vst [vmem:[%s600 + $0x178] sm:$0xf] %v699
        %v732 = vld [vmem:[%s177] sm:$0xf]
        %v733 = vld [vmem:[%s177 + $0x4] sm:$0xf]
        %v734 = vld [vmem:[%s177 + $0x8] sm:$0xf]
        %v735 = vld [vmem:[%s177 + $0xc] sm:$0xf]
        %v736 = vld [vmem:[%s177 + $0x10] sm:$0xf]
        %v737 = vld [vmem:[%s177 + $0x14] sm:$0xf]
        %v738 = vld [vmem:[%s177 + $0x18] sm:$0xf]
        %v739 = vld [vmem:[%s177 + $0x1c] sm:$0xf]
        %v740 = vld [vmem:[%s177 + $0x20] sm:$0xf]
        %v741 = vld [vmem:[%s177 + $0x24] sm:$0xf]
        %v742 = vld [vmem:[%s177 + $0x28] sm:$0xf]
        %v743 = vld [vmem:[%s177 + $0x2c] sm:$0xf]
        %v744 = vld [vmem:[%s177 + $0x30] sm:$0xf]
        %v745 = vld [vmem:[%s177 + $0x34] sm:$0xf]
        %v746 = vld [vmem:[%s177 + $0x38] sm:$0xf]
        %v747 = vld [vmem:[%s177 + $0x3c] sm:$0xf]
        %v748 = vld [vmem:[%s177 + $0x40] sm:$0xf]
        %v749 = vld [vmem:[%s177 + $0x44] sm:$0xf]
        %v750 = vld [vmem:[%s177 + $0x48] sm:$0xf]
        %v751 = vld [vmem:[%s177 + $0x4c] sm:$0xf]
        %v752 = vld [vmem:[%s177 + $0x50] sm:$0xf]
        %v753 = vld [vmem:[%s177 + $0x54] sm:$0xf]
        %v754 = vld [vmem:[%s177 + $0x58] sm:$0xf]
        %v755 = vld [vmem:[%s177 + $0x5c] sm:$0xf]
        %v756 = vld [vmem:[%s177 + $0x60] sm:$0xf]
        %v757 = vld [vmem:[%s177 + $0x64] sm:$0xf]
        %v758 = vld [vmem:[%s177 + $0x68] sm:$0xf]
        %v759 = vld [vmem:[%s177 + $0x6c] sm:$0xf]
        %v760 = vld [vmem:[%s177 + $0x70] sm:$0xf]
        %v761 = vld [vmem:[%s177 + $0x74] sm:$0xf]
        %v762 = vld [vmem:[%s177 + $0x78] sm:$0xf]
        %v763 = vld [vmem:[%s177 + $0x7c] sm:$0xf]
        %vm764 = vsmask.f32 3328
        %vm765 = vsmask.f32 7440
        %vm766 = vmor %vm764, %vm765
        %v768 = vshrl.u32 %v732, 16
        %v770 = vrot.slane %v768, 4
        %v771 = vshll.u32 %v732, 16
        %v773 = vrot.slane %v771, 5
        %v774 = vor.u32 %v770, %v773
        %v775 = vrot.slane %v774, 4
        %v777 = vshll.u32 %v733, 16
        %v779 = vrot.slane %v777, 5
        %v780 = vsel %vm766, %v775, %v779
        %v781 = vshrl.u32 %v733, 16
        %v783 = vrot.slane %v781, 4
        %v784 = vor.u32 %v783, %v779
        %v785 = vrot.slane %v784, 4
        %v787 = vshrl.u32 %v734, 16
        %v789 = vrot.slane %v787, 4
        %v790 = vshll.u32 %v734, 16
        %v792 = vrot.slane %v790, 5
        %v793 = vor.u32 %v789, %v792
        %v794 = vrot.slane %v793, 4
        %v796 = vshll.u32 %v735, 16
        %v798 = vrot.slane %v796, 5
        %v799 = vsel %vm766, %v794, %v798
        %v800 = vshrl.u32 %v735, 16
        %v802 = vrot.slane %v800, 4
        %v803 = vor.u32 %v802, %v798
        %v804 = vrot.slane %v803, 4
        %v806 = vshrl.u32 %v736, 16
        %v808 = vrot.slane %v806, 4
        %v809 = vshll.u32 %v736, 16
        %v811 = vrot.slane %v809, 5
        %v812 = vor.u32 %v808, %v811
        %v813 = vrot.slane %v812, 4
        %v815 = vshll.u32 %v737, 16
        %v817 = vrot.slane %v815, 5
        %v818 = vsel %vm766, %v813, %v817
        %v819 = vshrl.u32 %v737, 16
        %v821 = vrot.slane %v819, 4
        %v822 = vor.u32 %v821, %v817
        %v823 = vrot.slane %v822, 4
        %v825 = vshrl.u32 %v738, 16
        %v827 = vrot.slane %v825, 4
        %v828 = vshll.u32 %v738, 16
        %v830 = vrot.slane %v828, 5
        %v831 = vor.u32 %v827, %v830
        %v832 = vrot.slane %v831, 4
        %v834 = vshll.u32 %v739, 16
        %v836 = vrot.slane %v834, 5
        %v837 = vsel %vm766, %v832, %v836
        %v838 = vshrl.u32 %v739, 16
        %v840 = vrot.slane %v838, 4
        %v841 = vor.u32 %v840, %v836
        %v842 = vrot.slane %v841, 4
        %v844 = vshrl.u32 %v740, 16
        %v846 = vrot.slane %v844, 4
        %v847 = vshll.u32 %v740, 16
        %v849 = vrot.slane %v847, 5
        %v850 = vor.u32 %v846, %v849
        %v851 = vrot.slane %v850, 4
        %v853 = vshll.u32 %v741, 16
        %v855 = vrot.slane %v853, 5
        %v856 = vsel %vm766, %v851, %v855
        %v857 = vshrl.u32 %v741, 16
        %v859 = vrot.slane %v857, 4
        %v860 = vor.u32 %v859, %v855
        %v861 = vrot.slane %v860, 4
        %v863 = vshrl.u32 %v742, 16
        %v865 = vrot.slane %v863, 4
        %v866 = vshll.u32 %v742, 16
        %v868 = vrot.slane %v866, 5
        %v869 = vor.u32 %v865, %v868
        %v870 = vrot.slane %v869, 4
        %v872 = vshll.u32 %v743, 16
        %v874 = vrot.slane %v872, 5
        %v875 = vsel %vm766, %v870, %v874
        %v876 = vshrl.u32 %v743, 16
        %v878 = vrot.slane %v876, 4
        %v879 = vor.u32 %v878, %v874
        %v880 = vrot.slane %v879, 4
        %v882 = vshrl.u32 %v744, 16
        %v884 = vrot.slane %v882, 4
        %v885 = vshll.u32 %v744, 16
        %v887 = vrot.slane %v885, 5
        %v888 = vor.u32 %v884, %v887
        %v889 = vrot.slane %v888, 4
        %v891 = vshll.u32 %v745, 16
        %v893 = vrot.slane %v891, 5
        %v894 = vsel %vm766, %v889, %v893
        %v895 = vshrl.u32 %v745, 16
        %v897 = vrot.slane %v895, 4
        %v898 = vor.u32 %v897, %v893
        %v899 = vrot.slane %v898, 4
        %v901 = vshrl.u32 %v746, 16
        %v903 = vrot.slane %v901, 4
        %v904 = vshll.u32 %v746, 16
        %v906 = vrot.slane %v904, 5
        %v907 = vor.u32 %v903, %v906
        %v908 = vrot.slane %v907, 4
        %v910 = vshll.u32 %v747, 16
        %v912 = vrot.slane %v910, 5
        %v913 = vsel %vm766, %v908, %v912
        %v914 = vshrl.u32 %v747, 16
        %v916 = vrot.slane %v914, 4
        %v917 = vor.u32 %v916, %v912
        %v918 = vrot.slane %v917, 4
        %v920 = vshrl.u32 %v748, 16
        %v922 = vrot.slane %v920, 4
        %v923 = vshll.u32 %v748, 16
        %v925 = vrot.slane %v923, 5
        %v926 = vor.u32 %v922, %v925
        %v927 = vrot.slane %v926, 4
        %v929 = vshll.u32 %v749, 16
        %v931 = vrot.slane %v929, 5
        %v932 = vsel %vm766, %v927, %v931
        %v933 = vshrl.u32 %v749, 16
        %v935 = vrot.slane %v933, 4
        %v936 = vor.u32 %v935, %v931
        %v937 = vrot.slane %v936, 4
        %v939 = vshrl.u32 %v750, 16
        %v941 = vrot.slane %v939, 4
        %v942 = vshll.u32 %v750, 16
        %v944 = vrot.slane %v942, 5
        %v945 = vor.u32 %v941, %v944
        %v946 = vrot.slane %v945, 4
        %v948 = vshll.u32 %v751, 16
        %v950 = vrot.slane %v948, 5
        %v951 = vsel %vm766, %v946, %v950
        %v952 = vshrl.u32 %v751, 16
        %v954 = vrot.slane %v952, 4
        %v955 = vor.u32 %v954, %v950
        %v956 = vrot.slane %v955, 4
        %v958 = vshrl.u32 %v752, 16
        %v960 = vrot.slane %v958, 4
        %v961 = vshll.u32 %v752, 16
        %v963 = vrot.slane %v961, 5
        %v964 = vor.u32 %v960, %v963
        %v965 = vrot.slane %v964, 4
        %v967 = vshll.u32 %v753, 16
        %v969 = vrot.slane %v967, 5
        %v970 = vsel %vm766, %v965, %v969
        %v971 = vshrl.u32 %v753, 16
        %v973 = vrot.slane %v971, 4
        %v974 = vor.u32 %v973, %v969
        %v975 = vrot.slane %v974, 4
        %v977 = vshrl.u32 %v754, 16
        %v979 = vrot.slane %v977, 4
        %v980 = vshll.u32 %v754, 16
        %v982 = vrot.slane %v980, 5
        %v983 = vor.u32 %v979, %v982
        %v984 = vrot.slane %v983, 4
        %v986 = vshll.u32 %v755, 16
        %v988 = vrot.slane %v986, 5
        %v989 = vsel %vm766, %v984, %v988
        %v990 = vshrl.u32 %v755, 16
        %v992 = vrot.slane %v990, 4
        %v993 = vor.u32 %v992, %v988
        %v994 = vrot.slane %v993, 4
        %v996 = vshrl.u32 %v756, 16
        %v998 = vrot.slane %v996, 4
        %v999 = vshll.u32 %v756, 16
        %v1001 = vrot.slane %v999, 5
        %v1002 = vor.u32 %v998, %v1001
        %v1003 = vrot.slane %v1002, 4
        %v1005 = vshll.u32 %v757, 16
        %v1007 = vrot.slane %v1005, 5
        %v1008 = vsel %vm766, %v1003, %v1007
        %v1009 = vshrl.u32 %v757, 16
        %v1011 = vrot.slane %v1009, 4
        %v1012 = vor.u32 %v1011, %v1007
        %v1013 = vrot.slane %v1012, 4
        %v1015 = vshrl.u32 %v758, 16
        %v1017 = vrot.slane %v1015, 4
        %v1018 = vshll.u32 %v758, 16
        %v1020 = vrot.slane %v1018, 5
        %v1021 = vor.u32 %v1017, %v1020
        %v1022 = vrot.slane %v1021, 4
        %v1024 = vshll.u32 %v759, 16
        %v1026 = vrot.slane %v1024, 5
        %v1027 = vsel %vm766, %v1022, %v1026
        %v1028 = vshrl.u32 %v759, 16
        %v1030 = vrot.slane %v1028, 4
        %v1031 = vor.u32 %v1030, %v1026
        %v1032 = vrot.slane %v1031, 4
        %v1034 = vshrl.u32 %v760, 16
        %v1036 = vrot.slane %v1034, 4
        %v1037 = vshll.u32 %v760, 16
        %v1039 = vrot.slane %v1037, 5
        %v1040 = vor.u32 %v1036, %v1039
        %v1041 = vrot.slane %v1040, 4
        %v1043 = vshll.u32 %v761, 16
        %v1045 = vrot.slane %v1043, 5
        %v1046 = vsel %vm766, %v1041, %v1045
        %v1047 = vshrl.u32 %v761, 16
        %v1049 = vrot.slane %v1047, 4
        %v1050 = vor.u32 %v1049, %v1045
        %v1051 = vrot.slane %v1050, 4
        %v1053 = vshrl.u32 %v762, 16
        %v1055 = vrot.slane %v1053, 4
        %v1056 = vshll.u32 %v762, 16
        %v1058 = vrot.slane %v1056, 5
        %v1059 = vor.u32 %v1055, %v1058
        %v1060 = vrot.slane %v1059, 4
        %v1062 = vshll.u32 %v763, 16
        %v1064 = vrot.slane %v1062, 5
        %v1065 = vsel %vm766, %v1060, %v1064
        %v1066 = vshrl.u32 %v763, 16
        %v1068 = vrot.slane %v1066, 4
        %v1069 = vor.u32 %v1068, %v1064
        %v1070 = vrot.slane %v1069, 4
        %1103 = vst [vmem:[%s600 + $0x8] sm:$0xf] %v780
        %vm1104 = vmand %vm601, %vm764
        %v1105 = vld [vmem:[%s600 + $0x14] sm:$0xf]
        %v1106 = vsel %vm1104, %v785, %v1105
        %1107 = vst [vmem:[%s600 + $0x14] sm:$0xf] %v1106
        %1108 = vst [vmem:[%s600 + $0x20] sm:$0xf] %v799
        %v1109 = vld [vmem:[%s600 + $0x2c] sm:$0xf]
        %v1110 = vsel %vm1104, %v804, %v1109
        %1111 = vst [vmem:[%s600 + $0x2c] sm:$0xf] %v1110
        %1112 = vst [vmem:[%s600 + $0x38] sm:$0xf] %v818
        %v1113 = vld [vmem:[%s600 + $0x44] sm:$0xf]
        %v1114 = vsel %vm1104, %v823, %v1113
        %1115 = vst [vmem:[%s600 + $0x44] sm:$0xf] %v1114
        %1116 = vst [vmem:[%s600 + $0x50] sm:$0xf] %v837
        %v1117 = vld [vmem:[%s600 + $0x5c] sm:$0xf]
        %v1118 = vsel %vm1104, %v842, %v1117
        %1119 = vst [vmem:[%s600 + $0x5c] sm:$0xf] %v1118
        %1120 = vst [vmem:[%s600 + $0x68] sm:$0xf] %v856
        %v1121 = vld [vmem:[%s600 + $0x74] sm:$0xf]
        %v1122 = vsel %vm1104, %v861, %v1121
        %1123 = vst [vmem:[%s600 + $0x74] sm:$0xf] %v1122
        %1124 = vst [vmem:[%s600 + $0x80] sm:$0xf] %v875
        %v1125 = vld [vmem:[%s600 + $0x8c] sm:$0xf]
        %v1126 = vsel %vm1104, %v880, %v1125
        %1127 = vst [vmem:[%s600 + $0x8c] sm:$0xf] %v1126
        %1128 = vst [vmem:[%s600 + $0x98] sm:$0xf] %v894
        %v1129 = vld [vmem:[%s600 + $0xa4] sm:$0xf]
        %v1130 = vsel %vm1104, %v899, %v1129
        %1131 = vst [vmem:[%s600 + $0xa4] sm:$0xf] %v1130
        %1132 = vst [vmem:[%s600 + $0xb0] sm:$0xf] %v913
        %v1133 = vld [vmem:[%s600 + $0xbc] sm:$0xf]
        %v1134 = vsel %vm1104, %v918, %v1133
        %1135 = vst [vmem:[%s600 + $0xbc] sm:$0xf] %v1134
        %1136 = vst [vmem:[%s600 + $0xc8] sm:$0xf] %v932
        %v1137 = vld [vmem:[%s600 + $0xd4] sm:$0xf]
        %v1138 = vsel %vm1104, %v937, %v1137
        %1139 = vst [vmem:[%s600 + $0xd4] sm:$0xf] %v1138
        %1140 = vst [vmem:[%s600 + $0xe0] sm:$0xf] %v951
        %v1141 = vld [vmem:[%s600 + $0xec] sm:$0xf]
        %v1142 = vsel %vm1104, %v956, %v1141
        %1143 = vst [vmem:[%s600 + $0xec] sm:$0xf] %v1142
        %1144 = vst [vmem:[%s600 + $0xf8] sm:$0xf] %v970
        %v1145 = vld [vmem:[%s600 + $0x104] sm:$0xf]
        %v1146 = vsel %vm1104, %v975, %v1145
        %1147 = vst [vmem:[%s600 + $0x104] sm:$0xf] %v1146
        %1148 = vst [vmem:[%s600 + $0x110] sm:$0xf] %v989
        %v1149 = vld [vmem:[%s600 + $0x11c] sm:$0xf]
        %v1150 = vsel %vm1104, %v994, %v1149
        %1151 = vst [vmem:[%s600 + $0x11c] sm:$0xf] %v1150
        %1152 = vst [vmem:[%s600 + $0x128] sm:$0xf] %v1008
        %v1153 = vld [vmem:[%s600 + $0x134] sm:$0xf]
        %v1154 = vsel %vm1104, %v1013, %v1153
        %1155 = vst [vmem:[%s600 + $0x134] sm:$0xf] %v1154
        %1156 = vst [vmem:[%s600 + $0x140] sm:$0xf] %v1027
        %v1157 = vld [vmem:[%s600 + $0x14c] sm:$0xf]
        %v1158 = vsel %vm1104, %v1032, %v1157
        %1159 = vst [vmem:[%s600 + $0x14c] sm:$0xf] %v1158
        %1160 = vst [vmem:[%s600 + $0x158] sm:$0xf] %v1046
        %v1161 = vld [vmem:[%s600 + $0x164] sm:$0xf]
        %v1162 = vsel %vm1104, %v1051, %v1161
        %1163 = vst [vmem:[%s600 + $0x164] sm:$0xf] %v1162
        %1164 = vst [vmem:[%s600 + $0x170] sm:$0xf] %v1065
        %v1165 = vld [vmem:[%s600 + $0x17c] sm:$0xf]
        %v1166 = vsel %vm1104, %v1070, %v1165
        %1167 = vst [vmem:[%s600 + $0x17c] sm:$0xf] %v1166
        %v1168 = vld [vmem:[%s2] sm:$0x1]
        %v1169 = vld [vmem:[#allocation2] sm:$0xff]
        %v1170 = vld [vmem:[#allocation2 + $0x8] sm:$0xf]
        %v1171 = vld [vmem:[#allocation2 + $0xc] sm:$0xff]
        %v1172 = vld [vmem:[#allocation2 + $0x14] sm:$0xf]
        %v1173 = vld [vmem:[#allocation2 + $0x18] sm:$0xff]
        %v1174 = vld [vmem:[#allocation2 + $0x20] sm:$0xf]
        %v1175 = vld [vmem:[#allocation2 + $0x24] sm:$0xff]
        %v1176 = vld [vmem:[#allocation2 + $0x2c] sm:$0xf]
        %v1177 = vld [vmem:[#allocation2 + $0x30] sm:$0xff]
        %v1178 = vld [vmem:[#allocation2 + $0x38] sm:$0xf]
        %v1179 = vld [vmem:[#allocation2 + $0x3c] sm:$0xff]
        %v1180 = vld [vmem:[#allocation2 + $0x44] sm:$0xf]
        %v1181 = vld [vmem:[#allocation2 + $0x48] sm:$0xff]
        %v1182 = vld [vmem:[#allocation2 + $0x50] sm:$0xf]
        %v1183 = vld [vmem:[#allocation2 + $0x54] sm:$0xff]
        %v1184 = vld [vmem:[#allocation2 + $0x5c] sm:$0xf]
        %v1185 = vld [vmem:[#allocation6] sm:$0xf]
        %v1186 = vld [vmem:[#allocation6 + $0x4] sm:$0xf]
        %v1187 = vld [vmem:[#allocation6 + $0x8] sm:$0xf]
        %v1188 = vld [vmem:[#allocation6 + $0xc] sm:$0xf]
        %v1189 = vld [vmem:[#allocation6 + $0x10] sm:$0xf]
        %v1190 = vld [vmem:[#allocation6 + $0x14] sm:$0xf]
        %v1191 = vld [vmem:[#allocation6 + $0x18] sm:$0xf]
        %v1192 = vld [vmem:[#allocation6 + $0x1c] sm:$0xf]
        %v1193 = vld [vmem:[#allocation6 + $0x20] sm:$0xf]
        %v1194 = vld [vmem:[#allocation6 + $0x24] sm:$0xf]
        %v1195 = vld [vmem:[#allocation6 + $0x28] sm:$0xf]
        %v1196 = vld [vmem:[#allocation6 + $0x2c] sm:$0xf]
        %v1197 = vld [vmem:[#allocation6 + $0x30] sm:$0xf]
        %v1198 = vld [vmem:[#allocation6 + $0x34] sm:$0xf]
        %v1199 = vld [vmem:[#allocation6 + $0x38] sm:$0xf]
        %v1200 = vld [vmem:[#allocation6 + $0x3c] sm:$0xf]
        %v1201 = vld [vmem:[#allocation6 + $0x40] sm:$0xf]
        %v1202 = vld [vmem:[#allocation6 + $0x44] sm:$0xf]
        %v1203 = vld [vmem:[#allocation6 + $0x48] sm:$0xf]
        %v1204 = vld [vmem:[#allocation6 + $0x4c] sm:$0xf]
        %v1205 = vld [vmem:[#allocation6 + $0x50] sm:$0xf]
        %v1206 = vld [vmem:[#allocation6 + $0x54] sm:$0xf]
        %v1207 = vld [vmem:[#allocation6 + $0x58] sm:$0xf]
        %v1208 = vld [vmem:[#allocation6 + $0x5c] sm:$0xf]
        %v1209 = vld [vmem:[#allocation6 + $0x60] sm:$0xf]
        %v1210 = vld [vmem:[#allocation6 + $0x64] sm:$0xf]
        %v1211 = vld [vmem:[#allocation6 + $0x68] sm:$0xf]
        %v1212 = vld [vmem:[#allocation6 + $0x6c] sm:$0xf]
        %v1213 = vld [vmem:[#allocation6 + $0x70] sm:$0xf]
        %v1214 = vld [vmem:[#allocation6 + $0x74] sm:$0xf]
        %v1215 = vld [vmem:[#allocation6 + $0x78] sm:$0xf]
        %v1216 = vld [vmem:[#allocation6 + $0x7c] sm:$0xf]
        %v1217 = vld [vmem:[#allocation6 + $0x80] sm:$0xf]
        %v1218 = vld [vmem:[#allocation6 + $0x84] sm:$0xf]
        %v1219 = vld [vmem:[#allocation6 + $0x88] sm:$0xf]
        %v1220 = vld [vmem:[#allocation6 + $0x8c] sm:$0xf]
        %v1221 = vld [vmem:[#allocation6 + $0x90] sm:$0xf]
        %v1222 = vld [vmem:[#allocation6 + $0x94] sm:$0xf]
        %v1223 = vld [vmem:[#allocation6 + $0x98] sm:$0xf]
        %v1224 = vld [vmem:[#allocation6 + $0x9c] sm:$0xf]
        %v1225 = vld [vmem:[#allocation6 + $0xa0] sm:$0xf]
        %v1226 = vld [vmem:[#allocation6 + $0xa4] sm:$0xf]
        %v1227 = vld [vmem:[#allocation6 + $0xa8] sm:$0xf]
        %v1228 = vld [vmem:[#allocation6 + $0xac] sm:$0xf]
        %v1229 = vld [vmem:[#allocation6 + $0xb0] sm:$0xf]
        %v1230 = vld [vmem:[#allocation6 + $0xb4] sm:$0xf]
        %v1231 = vld [vmem:[#allocation6 + $0xb8] sm:$0xf]
        %v1232 = vld [vmem:[#allocation6 + $0xbc] sm:$0xf]
        %v1233 = vld [vmem:[%s600] sm:$0xff]
        %v1234 = vld [vmem:[%s600 + $0x8] sm:$0xf]
        %v1235 = vld [vmem:[%s600 + $0xc] sm:$0xff]
        %v1236 = vld [vmem:[%s600 + $0x14] sm:$0xf]
        %v1237 = vld [vmem:[%s600 + $0x18] sm:$0xff]
        %v1238 = vld [vmem:[%s600 + $0x20] sm:$0xf]
        %v1239 = vld [vmem:[%s600 + $0x24] sm:$0xff]
        %v1240 = vld [vmem:[%s600 + $0x2c] sm:$0xf]
        %v1241 = vld [vmem:[%s600 + $0x30] sm:$0xff]
        %v1242 = vld [vmem:[%s600 + $0x38] sm:$0xf]
        %v1243 = vld [vmem:[%s600 + $0x3c] sm:$0xff]
        %v1244 = vld [vmem:[%s600 + $0x44] sm:$0xf]
        %v1245 = vld [vmem:[%s600 + $0x48] sm:$0xff]
        %v1246 = vld [vmem:[%s600 + $0x50] sm:$0xf]
        %v1247 = vld [vmem:[%s600 + $0x54] sm:$0xff]
        %v1248 = vld [vmem:[%s600 + $0x5c] sm:$0xf]
        %s1249 = scalar_lea.vmem [#allocation6], 192
        %v1250 = vld [vmem:[%s1249] sm:$0xf]
        %v1251 = vld [vmem:[%s1249 + $0x4] sm:$0xf]
        %v1252 = vld [vmem:[%s1249 + $0x8] sm:$0xf]
        %v1253 = vld [vmem:[%s1249 + $0xc] sm:$0xf]
        %v1254 = vld [vmem:[%s1249 + $0x10] sm:$0xf]
        %v1255 = vld [vmem:[%s1249 + $0x14] sm:$0xf]
        %v1256 = vld [vmem:[%s1249 + $0x18] sm:$0xf]
        %v1257 = vld [vmem:[%s1249 + $0x1c] sm:$0xf]
        %v1258 = vld [vmem:[%s1249 + $0x20] sm:$0xf]
        %v1259 = vld [vmem:[%s1249 + $0x24] sm:$0xf]
        %v1260 = vld [vmem:[%s1249 + $0x28] sm:$0xf]
        %v1261 = vld [vmem:[%s1249 + $0x2c] sm:$0xf]
        %v1262 = vld [vmem:[%s1249 + $0x30] sm:$0xf]
        %v1263 = vld [vmem:[%s1249 + $0x34] sm:$0xf]
        %v1264 = vld [vmem:[%s1249 + $0x38] sm:$0xf]
        %v1265 = vld [vmem:[%s1249 + $0x3c] sm:$0xf]
        %v1266 = vld [vmem:[%s1249 + $0x40] sm:$0xf]
        %v1267 = vld [vmem:[%s1249 + $0x44] sm:$0xf]
        %v1268 = vld [vmem:[%s1249 + $0x48] sm:$0xf]
        %v1269 = vld [vmem:[%s1249 + $0x4c] sm:$0xf]
        %v1270 = vld [vmem:[%s1249 + $0x50] sm:$0xf]
        %v1271 = vld [vmem:[%s1249 + $0x54] sm:$0xf]
        %v1272 = vld [vmem:[%s1249 + $0x58] sm:$0xf]
        %v1273 = vld [vmem:[%s1249 + $0x5c] sm:$0xf]
        %v1274 = vld [vmem:[%s1249 + $0x60] sm:$0xf]
        %v1275 = vld [vmem:[%s1249 + $0x64] sm:$0xf]
        %v1276 = vld [vmem:[%s1249 + $0x68] sm:$0xf]
        %v1277 = vld [vmem:[%s1249 + $0x6c] sm:$0xf]
        %v1278 = vld [vmem:[%s1249 + $0x70] sm:$0xf]
        %v1279 = vld [vmem:[%s1249 + $0x74] sm:$0xf]
        %v1280 = vld [vmem:[%s1249 + $0x78] sm:$0xf]
        %v1281 = vld [vmem:[%s1249 + $0x7c] sm:$0xf]
        %v1282 = vld [vmem:[%s1249 + $0x80] sm:$0xf]
        %v1283 = vld [vmem:[%s1249 + $0x84] sm:$0xf]
        %v1284 = vld [vmem:[%s1249 + $0x88] sm:$0xf]
        %v1285 = vld [vmem:[%s1249 + $0x8c] sm:$0xf]
        %v1286 = vld [vmem:[%s1249 + $0x90] sm:$0xf]
        %v1287 = vld [vmem:[%s1249 + $0x94] sm:$0xf]
        %v1288 = vld [vmem:[%s1249 + $0x98] sm:$0xf]
        %v1289 = vld [vmem:[%s1249 + $0x9c] sm:$0xf]
        %v1290 = vld [vmem:[%s1249 + $0xa0] sm:$0xf]
        %v1291 = vld [vmem:[%s1249 + $0xa4] sm:$0xf]
        %v1292 = vld [vmem:[%s1249 + $0xa8] sm:$0xf]
        %v1293 = vld [vmem:[%s1249 + $0xac] sm:$0xf]
        %v1294 = vld [vmem:[%s1249 + $0xb0] sm:$0xf]
        %v1295 = vld [vmem:[%s1249 + $0xb4] sm:$0xf]
        %v1296 = vld [vmem:[%s1249 + $0xb8] sm:$0xf]
        %v1297 = vld [vmem:[%s1249 + $0xbc] sm:$0xf]
        %v1314 = vunpack.c.l.b16 %v1233
        %v1315 = vunpack.c.h.b16 %v1233
        %v1316 = vunpack.c.l.b16 %v1234
        %v1317 = vunpack.c.l.b16 %v1235
        %v1318 = vunpack.c.h.b16 %v1235
        %v1319 = vunpack.c.l.b16 %v1236
        %v1320 = vunpack.c.l.b16 %v1237
        %v1321 = vunpack.c.h.b16 %v1237
        %v1322 = vunpack.c.l.b16 %v1238
        %v1323 = vunpack.c.l.b16 %v1239
        %v1324 = vunpack.c.h.b16 %v1239
        %v1325 = vunpack.c.l.b16 %v1240
        %v1326 = vunpack.c.l.b16 %v1241
        %v1327 = vunpack.c.h.b16 %v1241
        %v1328 = vunpack.c.l.b16 %v1242
        %v1329 = vunpack.c.l.b16 %v1243
        %v1330 = vunpack.c.h.b16 %v1243
        %v1331 = vunpack.c.l.b16 %v1244
        %v1332 = vunpack.c.l.b16 %v1245
        %v1333 = vunpack.c.h.b16 %v1245
        %v1334 = vunpack.c.l.b16 %v1246
        %v1335 = vunpack.c.l.b16 %v1247
        %v1336 = vunpack.c.h.b16 %v1247
        %v1337 = vunpack.c.l.b16 %v1248
        %v1338 = vpack.c.b16 %v1317, %v1314
        %v1339 = vpack.c.b16 %v1318, %v1315
        %v1340 = vpack.c.b16 %v1319, %v1316
        %v1341 = vpack.c.b16 %v1323, %v1320
        %v1342 = vpack.c.b16 %v1324, %v1321
        %v1343 = vpack.c.b16 %v1325, %v1322
        %v1344 = vpack.c.b16 %v1329, %v1326
        %v1345 = vpack.c.b16 %v1330, %v1327
        %v1346 = vpack.c.b16 %v1331, %v1328
        %v1347 = vpack.c.b16 %v1335, %v1332
        %v1348 = vpack.c.b16 %v1336, %v1333
        %v1349 = vpack.c.b16 %v1337, %v1334
        %v1410 = vunpack.c.l.b16 %v1250
        %v1411 = vunpack.c.l.b16 %v1251
        %v1412 = vunpack.c.l.b16 %v1252
        %v1413 = vunpack.c.l.b16 %v1253
        %v1414 = vunpack.c.l.b16 %v1254
        %v1415 = vunpack.c.l.b16 %v1255
        %v1416 = vunpack.c.l.b16 %v1256
        %v1417 = vunpack.c.l.b16 %v1257
        %v1418 = vunpack.c.l.b16 %v1258
        %v1419 = vunpack.c.l.b16 %v1259
        %v1420 = vunpack.c.l.b16 %v1260
        %v1421 = vunpack.c.l.b16 %v1261
        %v1422 = vunpack.c.l.b16 %v1262
        %v1423 = vunpack.c.l.b16 %v1263
        %v1424 = vunpack.c.l.b16 %v1264
        %v1425 = vunpack.c.l.b16 %v1265
        %v1426 = vunpack.c.l.b16 %v1266
        %v1427 = vunpack.c.l.b16 %v1267
        %v1428 = vunpack.c.l.b16 %v1268
        %v1429 = vunpack.c.l.b16 %v1269
        %v1430 = vunpack.c.l.b16 %v1270
        %v1431 = vunpack.c.l.b16 %v1271
        %v1432 = vunpack.c.l.b16 %v1272
        %v1433 = vunpack.c.l.b16 %v1273
        %v1434 = vunpack.c.l.b16 %v1274
        %v1435 = vunpack.c.l.b16 %v1275
        %v1436 = vunpack.c.l.b16 %v1276
        %v1437 = vunpack.c.l.b16 %v1277
        %v1438 = vunpack.c.l.b16 %v1278
        %v1439 = vunpack.c.l.b16 %v1279
        %v1440 = vunpack.c.l.b16 %v1280
        %v1441 = vunpack.c.l.b16 %v1281
        %v1442 = vunpack.c.l.b16 %v1282
        %v1443 = vunpack.c.l.b16 %v1283
        %v1444 = vunpack.c.l.b16 %v1284
        %v1445 = vunpack.c.l.b16 %v1285
        %v1446 = vunpack.c.l.b16 %v1286
        %v1447 = vunpack.c.l.b16 %v1287
        %v1448 = vunpack.c.l.b16 %v1288
        %v1449 = vunpack.c.l.b16 %v1289
        %v1450 = vunpack.c.l.b16 %v1290
        %v1451 = vunpack.c.l.b16 %v1291
        %v1452 = vunpack.c.l.b16 %v1292
        %v1453 = vunpack.c.l.b16 %v1293
        %v1454 = vunpack.c.l.b16 %v1294
        %v1455 = vunpack.c.l.b16 %v1295
        %v1456 = vunpack.c.l.b16 %v1296
        %v1457 = vunpack.c.l.b16 %v1297
        %v1458 = vpack.c.b16 %v1411, %v1410
        %v1459 = vpack.c.b16 %v1413, %v1412
        %v1460 = vpack.c.b16 %v1415, %v1414
        %v1461 = vpack.c.b16 %v1417, %v1416
        %v1462 = vpack.c.b16 %v1419, %v1418
        %v1463 = vpack.c.b16 %v1421, %v1420
        %v1464 = vpack.c.b16 %v1423, %v1422
        %v1465 = vpack.c.b16 %v1425, %v1424
        %v1466 = vpack.c.b16 %v1427, %v1426
        %v1467 = vpack.c.b16 %v1429, %v1428
        %v1468 = vpack.c.b16 %v1431, %v1430
        %v1469 = vpack.c.b16 %v1433, %v1432
        %v1470 = vpack.c.b16 %v1435, %v1434
        %v1471 = vpack.c.b16 %v1437, %v1436
        %v1472 = vpack.c.b16 %v1439, %v1438
        %v1473 = vpack.c.b16 %v1441, %v1440
        %v1474 = vpack.c.b16 %v1443, %v1442
        %v1475 = vpack.c.b16 %v1445, %v1444
        %v1476 = vpack.c.b16 %v1447, %v1446
        %v1477 = vpack.c.b16 %v1449, %v1448
        %v1478 = vpack.c.b16 %v1451, %v1450
        %v1479 = vpack.c.b16 %v1453, %v1452
        %v1480 = vpack.c.b16 %v1455, %v1454
        %v1481 = vpack.c.b16 %v1457, %v1456
        %1506 = vmatprep.subr.bf16.mxu0 0
        %1507 = vmatpush1.bf16.msra.mxu0 %v1465
        %1508 = vmatprep.subr.bf16.mxu0 0
        %1509 = vmatpush1.bf16.msra.mxu0 %v1464
        %1510 = vmatprep.subr.bf16.mxu0 0
        %1511 = vmatpush1.bf16.msra.mxu0 %v1463
        %1512 = vmatprep.subr.bf16.mxu0 0
        %1513 = vmatpush1.bf16.msra.mxu0 %v1462
        %1514 = vmatprep.subr.bf16.mxu0 0
        %1515 = vmatpush1.bf16.msra.mxu0 %v1461
        %1516 = vmatprep.subr.bf16.mxu0 0
        %1517 = vmatpush1.bf16.msra.mxu0 %v1460
        %1518 = vmatprep.subr.bf16.mxu0 0
        %1519 = vmatpush1.bf16.msra.mxu0 %v1459
        %1520 = vmatprep.subr.bf16.mxu0 0
        %1521 = vmatpush1.bf16.msra.mxu0 %v1458
        %1522 = vmatprep.subr.bf16.mxu0 0
        %1523 = vmatpush2.bf16.msra.mxu0 %v1473
        %1524 = vmatprep.subr.bf16.mxu0 0
        %1525 = vmatpush2.bf16.msra.mxu0 %v1472
        %1526 = vmatprep.subr.bf16.mxu0 0
        %1527 = vmatpush2.bf16.msra.mxu0 %v1471
        %1528 = vmatprep.subr.bf16.mxu0 0
        %1529 = vmatpush2.bf16.msra.mxu0 %v1470
        %1530 = vmatprep.subr.bf16.mxu0 0
        %1531 = vmatpush2.bf16.msra.mxu0 %v1469
        %1532 = vmatprep.subr.bf16.mxu0 0
        %1533 = vmatpush2.bf16.msra.mxu0 %v1468
        %1534 = vmatprep.subr.bf16.mxu0 0
        %1535 = vmatpush2.bf16.msra.mxu0 %v1467
        %1536 = vmatprep.subr.bf16.mxu0 0
        %1537 = vmatpush2.bf16.msra.mxu0 %v1466
        %1538 = vmatprep.mubr.bf16.mxu0 %v1339
        %1539 = vmatmul.mubr.bf16.gmra.mxu0 %v1338
        %v1540 = vpop.f32.mrf.mxu0
        %v1541 = vadd.f32 0.0, %v1540
        %v1542 = vpop.f32.mrf.mxu0
        %v1543 = vpop.f32.mrf.mxu0
        %v1544 = vadd.f32 0.0, %v1543
        %v1545 = vpop.f32.mrf.mxu0
        %1546 = vmatprep.mubr.bf16.mxu0 %v1342
        %1547 = vmatmul.mubr.bf16.gmra.mxu0 %v1341
        %v1548 = vpop.f32.mrf.mxu0
        %v1549 = vadd.f32 0.0, %v1548
        %v1550 = vpop.f32.mrf.mxu0
        %v1551 = vpop.f32.mrf.mxu0
        %v1552 = vadd.f32 0.0, %v1551
        %v1553 = vpop.f32.mrf.mxu0
        %1554 = vmatprep.mubr.bf16.mxu0 %v1345
        %1555 = vmatmul.mubr.bf16.gmra.mxu0 %v1344
        %v1556 = vpop.f32.mrf.mxu0
        %v1557 = vadd.f32 0.0, %v1556
        %v1558 = vpop.f32.mrf.mxu0
        %v1559 = vpop.f32.mrf.mxu0
        %v1560 = vadd.f32 0.0, %v1559
        %v1561 = vpop.f32.mrf.mxu0
        %1562 = vmatprep.mubr.bf16.mxu0 %v1348
        %1563 = vmatmul.mubr.bf16.gmra.mxu0 %v1347
        %v1564 = vpop.f32.mrf.mxu0
        %v1565 = vadd.f32 0.0, %v1564
        %v1566 = vpop.f32.mrf.mxu0
        %v1567 = vpop.f32.mrf.mxu0
        %v1568 = vadd.f32 0.0, %v1567
        %v1569 = vpop.f32.mrf.mxu0
        %1570 = vdwg.mxu0
        %1571 = vmatprep.subr.bf16.mxu0 0
        %1572 = vmatpush1.bf16.msra.mxu0 %v1481
        %1573 = vmatprep.subr.bf16.mxu0 0
        %1574 = vmatpush1.bf16.msra.mxu0 %v1480
        %1575 = vmatprep.subr.bf16.mxu0 0
        %1576 = vmatpush1.bf16.msra.mxu0 %v1479
        %1577 = vmatprep.subr.bf16.mxu0 0
        %1578 = vmatpush1.bf16.msra.mxu0 %v1478
        %1579 = vmatprep.subr.bf16.mxu0 0
        %1580 = vmatpush1.bf16.msra.mxu0 %v1477
        %1581 = vmatprep.subr.bf16.mxu0 0
        %1582 = vmatpush1.bf16.msra.mxu0 %v1476
        %1583 = vmatprep.subr.bf16.mxu0 0
        %1584 = vmatpush1.bf16.msra.mxu0 %v1475
        %1585 = vmatprep.subr.bf16.mxu0 0
        %1586 = vmatpush1.bf16.msra.mxu0 %v1474
        %1587 = vmatprep.subr.bf16.mxu0 0
        %1588 = vmatpush2.bf16.msra.mxu0 0
        %1589 = vmatprep.subr.bf16.mxu0 0
        %1590 = vmatpush2.bf16.msra.mxu0 0
        %1591 = vmatprep.subr.bf16.mxu0 0
        %1592 = vmatpush2.bf16.msra.mxu0 0
        %1593 = vmatprep.subr.bf16.mxu0 0
        %1594 = vmatpush2.bf16.msra.mxu0 0
        %1595 = vmatprep.subr.bf16.mxu0 0
        %1596 = vmatpush2.bf16.msra.mxu0 0
        %1597 = vmatprep.subr.bf16.mxu0 0
        %1598 = vmatpush2.bf16.msra.mxu0 0
        %1599 = vmatprep.subr.bf16.mxu0 0
        %1600 = vmatpush2.bf16.msra.mxu0 0
        %1601 = vmatprep.subr.bf16.mxu0 0
        %1602 = vmatpush2.bf16.msra.mxu0 0
        %1603 = vmatprep.mubr.bf16.mxu0 0
        %1604 = vmatmul.mubr.bf16.gmra.mxu0 %v1340
        %v1605 = vpop.f32.mrf.mxu0
        %v1606 = vadd.f32 %v1541, %v1605
        %v1607 = vpop.f32.mrf.mxu0
        %v1608 = vpop.f32.mrf.mxu0
        %v1609 = vadd.f32 %v1544, %v1608
        %v1610 = vpop.f32.mrf.mxu0
        %1611 = vmatprep.mubr.bf16.mxu0 0
        %1612 = vmatmul.mubr.bf16.gmra.mxu0 %v1343
        %v1613 = vpop.f32.mrf.mxu0
        %v1614 = vadd.f32 %v1549, %v1613
        %v1615 = vpop.f32.mrf.mxu0
        %v1616 = vpop.f32.mrf.mxu0
        %v1617 = vadd.f32 %v1552, %v1616
        %v1618 = vpop.f32.mrf.mxu0
        %1619 = vmatprep.mubr.bf16.mxu0 0
        %1620 = vmatmul.mubr.bf16.gmra.mxu0 %v1346
        %v1621 = vpop.f32.mrf.mxu0
        %v1622 = vadd.f32 %v1557, %v1621
        %v1623 = vpop.f32.mrf.mxu0
        %v1624 = vpop.f32.mrf.mxu0
        %v1625 = vadd.f32 %v1560, %v1624
        %v1626 = vpop.f32.mrf.mxu0
        %1627 = vmatprep.mubr.bf16.mxu0 0
        %1628 = vmatmul.mubr.bf16.gmra.mxu0 %v1349
        %v1629 = vpop.f32.mrf.mxu0
        %v1630 = vadd.f32 %v1565, %v1629
        %v1631 = vpop.f32.mrf.mxu0
        %v1632 = vpop.f32.mrf.mxu0
        %v1633 = vadd.f32 %v1568, %v1632
        %v1634 = vpop.f32.mrf.mxu0
        %1635 = vdwg.mxu0
        %v1652 = vunpack.c.l.b16 %v1169
        %v1653 = vunpack.c.h.b16 %v1169
        %v1654 = vunpack.c.l.b16 %v1170
        %v1655 = vunpack.c.l.b16 %v1171
        %v1656 = vunpack.c.h.b16 %v1171
        %v1657 = vunpack.c.l.b16 %v1172
        %v1658 = vunpack.c.l.b16 %v1173
        %v1659 = vunpack.c.h.b16 %v1173
        %v1660 = vunpack.c.l.b16 %v1174
        %v1661 = vunpack.c.l.b16 %v1175
        %v1662 = vunpack.c.h.b16 %v1175
        %v1663 = vunpack.c.l.b16 %v1176
        %v1664 = vunpack.c.l.b16 %v1177
        %v1665 = vunpack.c.h.b16 %v1177
        %v1666 = vunpack.c.l.b16 %v1178
        %v1667 = vunpack.c.l.b16 %v1179
        %v1668 = vunpack.c.h.b16 %v1179
        %v1669 = vunpack.c.l.b16 %v1180
        %v1670 = vunpack.c.l.b16 %v1181
        %v1671 = vunpack.c.h.b16 %v1181
        %v1672 = vunpack.c.l.b16 %v1182
        %v1673 = vunpack.c.l.b16 %v1183
        %v1674 = vunpack.c.h.b16 %v1183
        %v1675 = vunpack.c.l.b16 %v1184
        %v1676 = vpack.c.b16 %v1655, %v1652
        %v1677 = vpack.c.b16 %v1656, %v1653
        %v1678 = vpack.c.b16 %v1657, %v1654
        %v1679 = vpack.c.b16 %v1661, %v1658
        %v1680 = vpack.c.b16 %v1662, %v1659
        %v1681 = vpack.c.b16 %v1663, %v1660
        %v1682 = vpack.c.b16 %v1667, %v1664
        %v1683 = vpack.c.b16 %v1668, %v1665
        %v1684 = vpack.c.b16 %v1669, %v1666
        %v1685 = vpack.c.b16 %v1673, %v1670
        %v1686 = vpack.c.b16 %v1674, %v1671
        %v1687 = vpack.c.b16 %v1675, %v1672
        %v1748 = vunpack.c.l.b16 %v1185
        %v1749 = vunpack.c.l.b16 %v1186
        %v1750 = vunpack.c.l.b16 %v1187
        %v1751 = vunpack.c.l.b16 %v1188
        %v1752 = vunpack.c.l.b16 %v1189
        %v1753 = vunpack.c.l.b16 %v1190
        %v1754 = vunpack.c.l.b16 %v1191
        %v1755 = vunpack.c.l.b16 %v1192
        %v1756 = vunpack.c.l.b16 %v1193
        %v1757 = vunpack.c.l.b16 %v1194
        %v1758 = vunpack.c.l.b16 %v1195
        %v1759 = vunpack.c.l.b16 %v1196
        %v1760 = vunpack.c.l.b16 %v1197
        %v1761 = vunpack.c.l.b16 %v1198
        %v1762 = vunpack.c.l.b16 %v1199
        %v1763 = vunpack.c.l.b16 %v1200
        %v1764 = vunpack.c.l.b16 %v1201
        %v1765 = vunpack.c.l.b16 %v1202
        %v1766 = vunpack.c.l.b16 %v1203
        %v1767 = vunpack.c.l.b16 %v1204
        %v1768 = vunpack.c.l.b16 %v1205
        %v1769 = vunpack.c.l.b16 %v1206
        %v1770 = vunpack.c.l.b16 %v1207
        %v1771 = vunpack.c.l.b16 %v1208
        %v1772 = vunpack.c.l.b16 %v1209
        %v1773 = vunpack.c.l.b16 %v1210
        %v1774 = vunpack.c.l.b16 %v1211
        %v1775 = vunpack.c.l.b16 %v1212
        %v1776 = vunpack.c.l.b16 %v1213
        %v1777 = vunpack.c.l.b16 %v1214
        %v1778 = vunpack.c.l.b16 %v1215
        %v1779 = vunpack.c.l.b16 %v1216
        %v1780 = vunpack.c.l.b16 %v1217
        %v1781 = vunpack.c.l.b16 %v1218
        %v1782 = vunpack.c.l.b16 %v1219
        %v1783 = vunpack.c.l.b16 %v1220
        %v1784 = vunpack.c.l.b16 %v1221
        %v1785 = vunpack.c.l.b16 %v1222
        %v1786 = vunpack.c.l.b16 %v1223
        %v1787 = vunpack.c.l.b16 %v1224
        %v1788 = vunpack.c.l.b16 %v1225
        %v1789 = vunpack.c.l.b16 %v1226
        %v1790 = vunpack.c.l.b16 %v1227
        %v1791 = vunpack.c.l.b16 %v1228
        %v1792 = vunpack.c.l.b16 %v1229
        %v1793 = vunpack.c.l.b16 %v1230
        %v1794 = vunpack.c.l.b16 %v1231
        %v1795 = vunpack.c.l.b16 %v1232
        %v1796 = vpack.c.b16 %v1749, %v1748
        %v1797 = vpack.c.b16 %v1751, %v1750
        %v1798 = vpack.c.b16 %v1753, %v1752
        %v1799 = vpack.c.b16 %v1755, %v1754
        %v1800 = vpack.c.b16 %v1757, %v1756
        %v1801 = vpack.c.b16 %v1759, %v1758
        %v1802 = vpack.c.b16 %v1761, %v1760
        %v1803 = vpack.c.b16 %v1763, %v1762
        %v1804 = vpack.c.b16 %v1765, %v1764
        %v1805 = vpack.c.b16 %v1767, %v1766
        %v1806 = vpack.c.b16 %v1769, %v1768
        %v1807 = vpack.c.b16 %v1771, %v1770
        %v1808 = vpack.c.b16 %v1773, %v1772
        %v1809 = vpack.c.b16 %v1775, %v1774
        %v1810 = vpack.c.b16 %v1777, %v1776
        %v1811 = vpack.c.b16 %v1779, %v1778
        %v1812 = vpack.c.b16 %v1781, %v1780
        %v1813 = vpack.c.b16 %v1783, %v1782
        %v1814 = vpack.c.b16 %v1785, %v1784
        %v1815 = vpack.c.b16 %v1787, %v1786
        %v1816 = vpack.c.b16 %v1789, %v1788
        %v1817 = vpack.c.b16 %v1791, %v1790
        %v1818 = vpack.c.b16 %v1793, %v1792
        %v1819 = vpack.c.b16 %v1795, %v1794
        %1844 = vmatprep.subr.bf16.mxu0 0
        %1845 = vmatpush1.bf16.msra.mxu0 %v1803
        %1846 = vmatprep.subr.bf16.mxu0 0
        %1847 = vmatpush1.bf16.msra.mxu0 %v1802
        %1848 = vmatprep.subr.bf16.mxu0 0
        %1849 = vmatpush1.bf16.msra.mxu0 %v1801
        %1850 = vmatprep.subr.bf16.mxu0 0
        %1851 = vmatpush1.bf16.msra.mxu0 %v1800
        %1852 = vmatprep.subr.bf16.mxu0 0
        %1853 = vmatpush1.bf16.msra.mxu0 %v1799
        %1854 = vmatprep.subr.bf16.mxu0 0
        %1855 = vmatpush1.bf16.msra.mxu0 %v1798
        %1856 = vmatprep.subr.bf16.mxu0 0
        %1857 = vmatpush1.bf16.msra.mxu0 %v1797
        %1858 = vmatprep.subr.bf16.mxu0 0
        %1859 = vmatpush1.bf16.msra.mxu0 %v1796
        %1860 = vmatprep.subr.bf16.mxu0 0
        %1861 = vmatpush2.bf16.msra.mxu0 %v1811
        %1862 = vmatprep.subr.bf16.mxu0 0
        %1863 = vmatpush2.bf16.msra.mxu0 %v1810
        %1864 = vmatprep.subr.bf16.mxu0 0
        %1865 = vmatpush2.bf16.msra.mxu0 %v1809
        %1866 = vmatprep.subr.bf16.mxu0 0
        %1867 = vmatpush2.bf16.msra.mxu0 %v1808
        %1868 = vmatprep.subr.bf16.mxu0 0
        %1869 = vmatpush2.bf16.msra.mxu0 %v1807
        %1870 = vmatprep.subr.bf16.mxu0 0
        %1871 = vmatpush2.bf16.msra.mxu0 %v1806
        %1872 = vmatprep.subr.bf16.mxu0 0
        %1873 = vmatpush2.bf16.msra.mxu0 %v1805
        %1874 = vmatprep.subr.bf16.mxu0 0
        %1875 = vmatpush2.bf16.msra.mxu0 %v1804
        %1876 = vmatprep.mubr.bf16.mxu0 %v1677
        %1877 = vmatmul.mubr.bf16.gmra.mxu0 %v1676
        %v1878 = vpop.f32.mrf.mxu0
        %v1879 = vadd.f32 %v1606, %v1878
        %v1880 = vpop.f32.mrf.mxu0
        %v1881 = vpop.f32.mrf.mxu0
        %v1882 = vadd.f32 %v1609, %v1881
        %v1883 = vpop.f32.mrf.mxu0
        %1884 = vmatprep.mubr.bf16.mxu0 %v1680
        %1885 = vmatmul.mubr.bf16.gmra.mxu0 %v1679
        %v1886 = vpop.f32.mrf.mxu0
        %v1887 = vadd.f32 %v1614, %v1886
        %v1888 = vpop.f32.mrf.mxu0
        %v1889 = vpop.f32.mrf.mxu0
        %v1890 = vadd.f32 %v1617, %v1889
        %v1891 = vpop.f32.mrf.mxu0
        %1892 = vmatprep.mubr.bf16.mxu0 %v1683
        %1893 = vmatmul.mubr.bf16.gmra.mxu0 %v1682
        %v1894 = vpop.f32.mrf.mxu0
        %v1895 = vadd.f32 %v1622, %v1894
        %v1896 = vpop.f32.mrf.mxu0
        %v1897 = vpop.f32.mrf.mxu0
        %v1898 = vadd.f32 %v1625, %v1897
        %v1899 = vpop.f32.mrf.mxu0
        %1900 = vmatprep.mubr.bf16.mxu0 %v1686
        %1901 = vmatmul.mubr.bf16.gmra.mxu0 %v1685
        %v1902 = vpop.f32.mrf.mxu0
        %v1903 = vadd.f32 %v1630, %v1902
        %v1904 = vpop.f32.mrf.mxu0
        %v1905 = vpop.f32.mrf.mxu0
        %v1906 = vadd.f32 %v1633, %v1905
        %v1907 = vpop.f32.mrf.mxu0
        %1908 = vdwg.mxu0
        %1909 = vmatprep.subr.bf16.mxu0 0
        %1910 = vmatpush1.bf16.msra.mxu0 %v1819
        %1911 = vmatprep.subr.bf16.mxu0 0
        %1912 = vmatpush1.bf16.msra.mxu0 %v1818
        %1913 = vmatprep.subr.bf16.mxu0 0
        %1914 = vmatpush1.bf16.msra.mxu0 %v1817
        %1915 = vmatprep.subr.bf16.mxu0 0
        %1916 = vmatpush1.bf16.msra.mxu0 %v1816
        %1917 = vmatprep.subr.bf16.mxu0 0
        %1918 = vmatpush1.bf16.msra.mxu0 %v1815
        %1919 = vmatprep.subr.bf16.mxu0 0
        %1920 = vmatpush1.bf16.msra.mxu0 %v1814
        %1921 = vmatprep.subr.bf16.mxu0 0
        %1922 = vmatpush1.bf16.msra.mxu0 %v1813
        %1923 = vmatprep.subr.bf16.mxu0 0
        %1924 = vmatpush1.bf16.msra.mxu0 %v1812
        %1925 = vmatprep.subr.bf16.mxu0 0
        %1926 = vmatpush2.bf16.msra.mxu0 0
        %1927 = vmatprep.subr.bf16.mxu0 0
        %1928 = vmatpush2.bf16.msra.mxu0 0
        %1929 = vmatprep.subr.bf16.mxu0 0
        %1930 = vmatpush2.bf16.msra.mxu0 0
        %1931 = vmatprep.subr.bf16.mxu0 0
        %1932 = vmatpush2.bf16.msra.mxu0 0
        %1933 = vmatprep.subr.bf16.mxu0 0
        %1934 = vmatpush2.bf16.msra.mxu0 0
        %1935 = vmatprep.subr.bf16.mxu0 0
        %1936 = vmatpush2.bf16.msra.mxu0 0
        %1937 = vmatprep.subr.bf16.mxu0 0
        %1938 = vmatpush2.bf16.msra.mxu0 0
        %1939 = vmatprep.subr.bf16.mxu0 0
        %1940 = vmatpush2.bf16.msra.mxu0 0
        %1941 = vmatprep.mubr.bf16.mxu0 0
        %1942 = vmatmul.mubr.bf16.gmra.mxu0 %v1678
        %v1943 = vpop.f32.mrf.mxu0
        %v1944 = vadd.f32 %v1879, %v1943
        %v1945 = vpop.f32.mrf.mxu0
        %v1946 = vpop.f32.mrf.mxu0
        %v1947 = vadd.f32 %v1882, %v1946
        %v1948 = vpop.f32.mrf.mxu0
        %1949 = vmatprep.mubr.bf16.mxu0 0
        %1950 = vmatmul.mubr.bf16.gmra.mxu0 %v1681
        %v1951 = vpop.f32.mrf.mxu0
        %v1952 = vadd.f32 %v1887, %v1951
        %v1953 = vpop.f32.mrf.mxu0
        %v1954 = vpop.f32.mrf.mxu0
        %v1955 = vadd.f32 %v1890, %v1954
        %v1956 = vpop.f32.mrf.mxu0
        %1957 = vmatprep.mubr.bf16.mxu0 0
        %1958 = vmatmul.mubr.bf16.gmra.mxu0 %v1684
        %v1959 = vpop.f32.mrf.mxu0
        %v1960 = vadd.f32 %v1895, %v1959
        %v1961 = vpop.f32.mrf.mxu0
        %v1962 = vpop.f32.mrf.mxu0
        %v1963 = vadd.f32 %v1898, %v1962
        %v1964 = vpop.f32.mrf.mxu0
        %1965 = vmatprep.mubr.bf16.mxu0 0
        %1966 = vmatmul.mubr.bf16.gmra.mxu0 %v1687
        %v1967 = vpop.f32.mrf.mxu0
        %v1968 = vadd.f32 %v1903, %v1967
        %v1969 = vpop.f32.mrf.mxu0
        %v1970 = vpop.f32.mrf.mxu0
        %v1971 = vadd.f32 %v1906, %v1970
        %v1972 = vpop.f32.mrf.mxu0
        %1973 = vdwg.mxu0
        %s1974 = scalar_lea.vmem [#allocation2], 48
        %v1975 = vld [vmem:[%s1974] sm:$0xff]
        %v1976 = vld [vmem:[%s1974 + $0x8] sm:$0xf]
        %v1977 = vld [vmem:[%s1974 + $0xc] sm:$0xff]
        %v1978 = vld [vmem:[%s1974 + $0x14] sm:$0xf]
        %v1979 = vld [vmem:[%s1974 + $0x18] sm:$0xff]
        %v1980 = vld [vmem:[%s1974 + $0x20] sm:$0xf]
        %v1981 = vld [vmem:[%s1974 + $0x24] sm:$0xff]
        %v1982 = vld [vmem:[%s1974 + $0x2c] sm:$0xf]
        %v1983 = vld [vmem:[%s1974 + $0x30] sm:$0xff]
        %v1984 = vld [vmem:[%s1974 + $0x38] sm:$0xf]
        %v1985 = vld [vmem:[%s1974 + $0x3c] sm:$0xff]
        %v1986 = vld [vmem:[%s1974 + $0x44] sm:$0xf]
        %v1987 = vld [vmem:[%s1974 + $0x48] sm:$0xff]
        %v1988 = vld [vmem:[%s1974 + $0x50] sm:$0xf]
        %v1989 = vld [vmem:[%s1974 + $0x54] sm:$0xff]
        %v1990 = vld [vmem:[%s1974 + $0x5c] sm:$0xf]
        %s1991 = scalar_lea.vmem [#allocation6], 384
        %v1992 = vld [vmem:[%s1991] sm:$0xf]
        %v1993 = vld [vmem:[%s1991 + $0x4] sm:$0xf]
        %v1994 = vld [vmem:[%s1991 + $0x8] sm:$0xf]
        %v1995 = vld [vmem:[%s1991 + $0xc] sm:$0xf]
        %v1996 = vld [vmem:[%s1991 + $0x10] sm:$0xf]
        %v1997 = vld [vmem:[%s1991 + $0x14] sm:$0xf]
        %v1998 = vld [vmem:[%s1991 + $0x18] sm:$0xf]
        %v1999 = vld [vmem:[%s1991 + $0x1c] sm:$0xf]
        %v2000 = vld [vmem:[%s1991 + $0x20] sm:$0xf]
        %v2001 = vld [vmem:[%s1991 + $0x24] sm:$0xf]
        %v2002 = vld [vmem:[%s1991 + $0x28] sm:$0xf]
        %v2003 = vld [vmem:[%s1991 + $0x2c] sm:$0xf]
        %v2004 = vld [vmem:[%s1991 + $0x30] sm:$0xf]
        %v2005 = vld [vmem:[%s1991 + $0x34] sm:$0xf]
        %v2006 = vld [vmem:[%s1991 + $0x38] sm:$0xf]
        %v2007 = vld [vmem:[%s1991 + $0x3c] sm:$0xf]
        %v2008 = vld [vmem:[%s1991 + $0x40] sm:$0xf]
        %v2009 = vld [vmem:[%s1991 + $0x44] sm:$0xf]
        %v2010 = vld [vmem:[%s1991 + $0x48] sm:$0xf]
        %v2011 = vld [vmem:[%s1991 + $0x4c] sm:$0xf]
        %v2012 = vld [vmem:[%s1991 + $0x50] sm:$0xf]
        %v2013 = vld [vmem:[%s1991 + $0x54] sm:$0xf]
        %v2014 = vld [vmem:[%s1991 + $0x58] sm:$0xf]
        %v2015 = vld [vmem:[%s1991 + $0x5c] sm:$0xf]
        %v2016 = vld [vmem:[%s1991 + $0x60] sm:$0xf]
        %v2017 = vld [vmem:[%s1991 + $0x64] sm:$0xf]
        %v2018 = vld [vmem:[%s1991 + $0x68] sm:$0xf]
        %v2019 = vld [vmem:[%s1991 + $0x6c] sm:$0xf]
        %v2020 = vld [vmem:[%s1991 + $0x70] sm:$0xf]
        %v2021 = vld [vmem:[%s1991 + $0x74] sm:$0xf]
        %v2022 = vld [vmem:[%s1991 + $0x78] sm:$0xf]
        %v2023 = vld [vmem:[%s1991 + $0x7c] sm:$0xf]
        %v2024 = vld [vmem:[%s1991 + $0x80] sm:$0xf]
        %v2025 = vld [vmem:[%s1991 + $0x84] sm:$0xf]
        %v2026 = vld [vmem:[%s1991 + $0x88] sm:$0xf]
        %v2027 = vld [vmem:[%s1991 + $0x8c] sm:$0xf]
        %v2028 = vld [vmem:[%s1991 + $0x90] sm:$0xf]
        %v2029 = vld [vmem:[%s1991 + $0x94] sm:$0xf]
        %v2030 = vld [vmem:[%s1991 + $0x98] sm:$0xf]
        %v2031 = vld [vmem:[%s1991 + $0x9c] sm:$0xf]
        %v2032 = vld [vmem:[%s1991 + $0xa0] sm:$0xf]
        %v2033 = vld [vmem:[%s1991 + $0xa4] sm:$0xf]
        %v2034 = vld [vmem:[%s1991 + $0xa8] sm:$0xf]
        %v2035 = vld [vmem:[%s1991 + $0xac] sm:$0xf]
        %v2036 = vld [vmem:[%s1991 + $0xb0] sm:$0xf]
        %v2037 = vld [vmem:[%s1991 + $0xb4] sm:$0xf]
        %v2038 = vld [vmem:[%s1991 + $0xb8] sm:$0xf]
        %v2039 = vld [vmem:[%s1991 + $0xbc] sm:$0xf]
        %v2056 = vunpack.c.l.b16 %v1975
        %v2057 = vunpack.c.h.b16 %v1975
        %v2058 = vunpack.c.l.b16 %v1976
        %v2059 = vunpack.c.l.b16 %v1977
        %v2060 = vunpack.c.h.b16 %v1977
        %v2061 = vunpack.c.l.b16 %v1978
        %v2062 = vunpack.c.l.b16 %v1979
        %v2063 = vunpack.c.h.b16 %v1979
        %v2064 = vunpack.c.l.b16 %v1980
        %v2065 = vunpack.c.l.b16 %v1981
        %v2066 = vunpack.c.h.b16 %v1981
        %v2067 = vunpack.c.l.b16 %v1982
        %v2068 = vunpack.c.l.b16 %v1983
        %v2069 = vunpack.c.h.b16 %v1983
        %v2070 = vunpack.c.l.b16 %v1984
        %v2071 = vunpack.c.l.b16 %v1985
        %v2072 = vunpack.c.h.b16 %v1985
        %v2073 = vunpack.c.l.b16 %v1986
        %v2074 = vunpack.c.l.b16 %v1987
        %v2075 = vunpack.c.h.b16 %v1987
        %v2076 = vunpack.c.l.b16 %v1988
        %v2077 = vunpack.c.l.b16 %v1989
        %v2078 = vunpack.c.h.b16 %v1989
        %v2079 = vunpack.c.l.b16 %v1990
        %v2080 = vpack.c.b16 %v2059, %v2056
        %v2081 = vpack.c.b16 %v2060, %v2057
        %v2082 = vpack.c.b16 %v2061, %v2058
        %v2083 = vpack.c.b16 %v2065, %v2062
        %v2084 = vpack.c.b16 %v2066, %v2063
        %v2085 = vpack.c.b16 %v2067, %v2064
        %v2086 = vpack.c.b16 %v2071, %v2068
        %v2087 = vpack.c.b16 %v2072, %v2069
        %v2088 = vpack.c.b16 %v2073, %v2070
        %v2089 = vpack.c.b16 %v2077, %v2074
        %v2090 = vpack.c.b16 %v2078, %v2075
        %v2091 = vpack.c.b16 %v2079, %v2076
        %v2152 = vunpack.c.l.b16 %v1992
        %v2153 = vunpack.c.l.b16 %v1993
        %v2154 = vunpack.c.l.b16 %v1994
        %v2155 = vunpack.c.l.b16 %v1995
        %v2156 = vunpack.c.l.b16 %v1996
        %v2157 = vunpack.c.l.b16 %v1997
        %v2158 = vunpack.c.l.b16 %v1998
        %v2159 = vunpack.c.l.b16 %v1999
        %v2160 = vunpack.c.l.b16 %v2000
        %v2161 = vunpack.c.l.b16 %v2001
        %v2162 = vunpack.c.l.b16 %v2002
        %v2163 = vunpack.c.l.b16 %v2003
        %v2164 = vunpack.c.l.b16 %v2004
        %v2165 = vunpack.c.l.b16 %v2005
        %v2166 = vunpack.c.l.b16 %v2006
        %v2167 = vunpack.c.l.b16 %v2007
        %v2168 = vunpack.c.l.b16 %v2008
        %v2169 = vunpack.c.l.b16 %v2009
        %v2170 = vunpack.c.l.b16 %v2010
        %v2171 = vunpack.c.l.b16 %v2011
        %v2172 = vunpack.c.l.b16 %v2012
        %v2173 = vunpack.c.l.b16 %v2013
        %v2174 = vunpack.c.l.b16 %v2014
        %v2175 = vunpack.c.l.b16 %v2015
        %v2176 = vunpack.c.l.b16 %v2016
        %v2177 = vunpack.c.l.b16 %v2017
        %v2178 = vunpack.c.l.b16 %v2018
        %v2179 = vunpack.c.l.b16 %v2019
        %v2180 = vunpack.c.l.b16 %v2020
        %v2181 = vunpack.c.l.b16 %v2021
        %v2182 = vunpack.c.l.b16 %v2022
        %v2183 = vunpack.c.l.b16 %v2023
        %v2184 = vunpack.c.l.b16 %v2024
        %v2185 = vunpack.c.l.b16 %v2025
        %v2186 = vunpack.c.l.b16 %v2026
        %v2187 = vunpack.c.l.b16 %v2027
        %v2188 = vunpack.c.l.b16 %v2028
        %v2189 = vunpack.c.l.b16 %v2029
        %v2190 = vunpack.c.l.b16 %v2030
        %v2191 = vunpack.c.l.b16 %v2031
        %v2192 = vunpack.c.l.b16 %v2032
        %v2193 = vunpack.c.l.b16 %v2033
        %v2194 = vunpack.c.l.b16 %v2034
        %v2195 = vunpack.c.l.b16 %v2035
        %v2196 = vunpack.c.l.b16 %v2036
        %v2197 = vunpack.c.l.b16 %v2037
        %v2198 = vunpack.c.l.b16 %v2038
        %v2199 = vunpack.c.l.b16 %v2039
        %v2200 = vpack.c.b16 %v2153, %v2152
        %v2201 = vpack.c.b16 %v2155, %v2154
        %v2202 = vpack.c.b16 %v2157, %v2156
        %v2203 = vpack.c.b16 %v2159, %v2158
        %v2204 = vpack.c.b16 %v2161, %v2160
        %v2205 = vpack.c.b16 %v2163, %v2162
        %v2206 = vpack.c.b16 %v2165, %v2164
        %v2207 = vpack.c.b16 %v2167, %v2166
        %v2208 = vpack.c.b16 %v2169, %v2168
        %v2209 = vpack.c.b16 %v2171, %v2170
        %v2210 = vpack.c.b16 %v2173, %v2172
        %v2211 = vpack.c.b16 %v2175, %v2174
        %v2212 = vpack.c.b16 %v2177, %v2176
        %v2213 = vpack.c.b16 %v2179, %v2178
        %v2214 = vpack.c.b16 %v2181, %v2180
        %v2215 = vpack.c.b16 %v2183, %v2182
        %v2216 = vpack.c.b16 %v2185, %v2184
        %v2217 = vpack.c.b16 %v2187, %v2186
        %v2218 = vpack.c.b16 %v2189, %v2188
        %v2219 = vpack.c.b16 %v2191, %v2190
        %v2220 = vpack.c.b16 %v2193, %v2192
        %v2221 = vpack.c.b16 %v2195, %v2194
        %v2222 = vpack.c.b16 %v2197, %v2196
        %v2223 = vpack.c.b16 %v2199, %v2198
        %2248 = vmatprep.subr.bf16.mxu0 0
        %2249 = vmatpush1.bf16.msra.mxu0 %v2207
        %2250 = vmatprep.subr.bf16.mxu0 0
        %2251 = vmatpush1.bf16.msra.mxu0 %v2206
        %2252 = vmatprep.subr.bf16.mxu0 0
        %2253 = vmatpush1.bf16.msra.mxu0 %v2205
        %2254 = vmatprep.subr.bf16.mxu0 0
        %2255 = vmatpush1.bf16.msra.mxu0 %v2204
        %2256 = vmatprep.subr.bf16.mxu0 0
        %2257 = vmatpush1.bf16.msra.mxu0 %v2203
        %2258 = vmatprep.subr.bf16.mxu0 0
        %2259 = vmatpush1.bf16.msra.mxu0 %v2202
        %2260 = vmatprep.subr.bf16.mxu0 0
        %2261 = vmatpush1.bf16.msra.mxu0 %v2201
        %2262 = vmatprep.subr.bf16.mxu0 0
        %2263 = vmatpush1.bf16.msra.mxu0 %v2200
        %2264 = vmatprep.subr.bf16.mxu0 0
        %2265 = vmatpush2.bf16.msra.mxu0 %v2215
        %2266 = vmatprep.subr.bf16.mxu0 0
        %2267 = vmatpush2.bf16.msra.mxu0 %v2214
        %2268 = vmatprep.subr.bf16.mxu0 0
        %2269 = vmatpush2.bf16.msra.mxu0 %v2213
        %2270 = vmatprep.subr.bf16.mxu0 0
        %2271 = vmatpush2.bf16.msra.mxu0 %v2212
        %2272 = vmatprep.subr.bf16.mxu0 0
        %2273 = vmatpush2.bf16.msra.mxu0 %v2211
        %2274 = vmatprep.subr.bf16.mxu0 0
        %2275 = vmatpush2.bf16.msra.mxu0 %v2210
        %2276 = vmatprep.subr.bf16.mxu0 0
        %2277 = vmatpush2.bf16.msra.mxu0 %v2209
        %2278 = vmatprep.subr.bf16.mxu0 0
        %2279 = vmatpush2.bf16.msra.mxu0 %v2208
        %2280 = vmatprep.mubr.bf16.mxu0 %v2081
        %2281 = vmatmul.mubr.bf16.gmra.mxu0 %v2080
        %v2282 = vpop.f32.mrf.mxu0
        %v2283 = vadd.f32 0.0, %v2282
        %v2284 = vpop.f32.mrf.mxu0
        %v2285 = vpop.f32.mrf.mxu0
        %v2286 = vadd.f32 0.0, %v2285
        %v2287 = vpop.f32.mrf.mxu0
        %2288 = vmatprep.mubr.bf16.mxu0 %v2084
        %2289 = vmatmul.mubr.bf16.gmra.mxu0 %v2083
        %v2290 = vpop.f32.mrf.mxu0
        %v2291 = vadd.f32 0.0, %v2290
        %v2292 = vpop.f32.mrf.mxu0
        %v2293 = vpop.f32.mrf.mxu0
        %v2294 = vadd.f32 0.0, %v2293
        %v2295 = vpop.f32.mrf.mxu0
        %2296 = vmatprep.mubr.bf16.mxu0 %v2087
        %2297 = vmatmul.mubr.bf16.gmra.mxu0 %v2086
        %v2298 = vpop.f32.mrf.mxu0
        %v2299 = vadd.f32 0.0, %v2298
        %v2300 = vpop.f32.mrf.mxu0
        %v2301 = vpop.f32.mrf.mxu0
        %v2302 = vadd.f32 0.0, %v2301
        %v2303 = vpop.f32.mrf.mxu0
        %2304 = vmatprep.mubr.bf16.mxu0 %v2090
        %2305 = vmatmul.mubr.bf16.gmra.mxu0 %v2089
        %v2306 = vpop.f32.mrf.mxu0
        %v2307 = vadd.f32 0.0, %v2306
        %v2308 = vpop.f32.mrf.mxu0
        %v2309 = vpop.f32.mrf.mxu0
        %v2310 = vadd.f32 0.0, %v2309
        %v2311 = vpop.f32.mrf.mxu0
        %2312 = vdwg.mxu0
        %2313 = vmatprep.subr.bf16.mxu0 0
        %2314 = vmatpush1.bf16.msra.mxu0 %v2223
        %2315 = vmatprep.subr.bf16.mxu0 0
        %2316 = vmatpush1.bf16.msra.mxu0 %v2222
        %2317 = vmatprep.subr.bf16.mxu0 0
        %2318 = vmatpush1.bf16.msra.mxu0 %v2221
        %2319 = vmatprep.subr.bf16.mxu0 0
        %2320 = vmatpush1.bf16.msra.mxu0 %v2220
        %2321 = vmatprep.subr.bf16.mxu0 0
        %2322 = vmatpush1.bf16.msra.mxu0 %v2219
        %2323 = vmatprep.subr.bf16.mxu0 0
        %2324 = vmatpush1.bf16.msra.mxu0 %v2218
        %2325 = vmatprep.subr.bf16.mxu0 0
        %2326 = vmatpush1.bf16.msra.mxu0 %v2217
        %2327 = vmatprep.subr.bf16.mxu0 0
        %2328 = vmatpush1.bf16.msra.mxu0 %v2216
        %2329 = vmatprep.subr.bf16.mxu0 0
        %2330 = vmatpush2.bf16.msra.mxu0 0
        %2331 = vmatprep.subr.bf16.mxu0 0
        %2332 = vmatpush2.bf16.msra.mxu0 0
        %2333 = vmatprep.subr.bf16.mxu0 0
        %2334 = vmatpush2.bf16.msra.mxu0 0
        %2335 = vmatprep.subr.bf16.mxu0 0
        %2336 = vmatpush2.bf16.msra.mxu0 0
        %2337 = vmatprep.subr.bf16.mxu0 0
        %2338 = vmatpush2.bf16.msra.mxu0 0
        %2339 = vmatprep.subr.bf16.mxu0 0
        %2340 = vmatpush2.bf16.msra.mxu0 0
        %2341 = vmatprep.subr.bf16.mxu0 0
        %2342 = vmatpush2.bf16.msra.mxu0 0
        %2343 = vmatprep.subr.bf16.mxu0 0
        %2344 = vmatpush2.bf16.msra.mxu0 0
        %2345 = vmatprep.mubr.bf16.mxu0 0
        %2346 = vmatmul.mubr.bf16.gmra.mxu0 %v2082
        %v2347 = vpop.f32.mrf.mxu0
        %v2348 = vadd.f32 %v2283, %v2347
        %v2349 = vpop.f32.mrf.mxu0
        %v2350 = vpop.f32.mrf.mxu0
        %v2351 = vadd.f32 %v2286, %v2350
        %v2352 = vpop.f32.mrf.mxu0
        %2353 = vmatprep.mubr.bf16.mxu0 0
        %2354 = vmatmul.mubr.bf16.gmra.mxu0 %v2085
        %v2355 = vpop.f32.mrf.mxu0
        %v2356 = vadd.f32 %v2291, %v2355
        %v2357 = vpop.f32.mrf.mxu0
        %v2358 = vpop.f32.mrf.mxu0
        %v2359 = vadd.f32 %v2294, %v2358
        %v2360 = vpop.f32.mrf.mxu0
        %2361 = vmatprep.mubr.bf16.mxu0 0
        %2362 = vmatmul.mubr.bf16.gmra.mxu0 %v2088
        %v2363 = vpop.f32.mrf.mxu0
        %v2364 = vadd.f32 %v2299, %v2363
        %v2365 = vpop.f32.mrf.mxu0
        %v2366 = vpop.f32.mrf.mxu0
        %v2367 = vadd.f32 %v2302, %v2366
        %v2368 = vpop.f32.mrf.mxu0
        %2369 = vmatprep.mubr.bf16.mxu0 0
        %2370 = vmatmul.mubr.bf16.gmra.mxu0 %v2091
        %v2371 = vpop.f32.mrf.mxu0
        %v2372 = vadd.f32 %v2307, %v2371
        %v2373 = vpop.f32.mrf.mxu0
        %v2374 = vpop.f32.mrf.mxu0
        %v2375 = vadd.f32 %v2310, %v2374
        %v2376 = vpop.f32.mrf.mxu0
        %2377 = vdwg.mxu0
        %v2378 = vadd.f32 %v1944, %v2348
        %v2379 = vadd.f32 %v1947, %v2351
        %v2380 = vadd.f32 %v1952, %v2356
        %v2381 = vadd.f32 %v1955, %v2359
        %v2382 = vadd.f32 %v1960, %v2364
        %v2383 = vadd.f32 %v1963, %v2367
        %v2384 = vadd.f32 %v1968, %v2372
        %v2385 = vadd.f32 %v1971, %v2375
        %v2387 = vlaneseq
        %v2388 = vshrl.u32 %v2387, 7
        %v2389 = vsub.s32 0, %v2388
        %v2390 = vrot.slane %v1168, %v2389
        %v2392 = vadd.f32 %v2378, %v2390
        %v2393 = vadd.f32 %v2379, %v2390
        %v2394 = vadd.f32 %v2380, %v2390
        %v2395 = vadd.f32 %v2381, %v2390
        %v2396 = vadd.f32 %v2382, %v2390
        %v2397 = vadd.f32 %v2383, %v2390
        %v2398 = vadd.f32 %v2384, %v2390
        %v2399 = vadd.f32 %v2385, %v2390
        %v2400 = vmax.f32 %v2392, 0.0
        %v2401 = vmax.f32 %v2393, 0.0
        %v2402 = vmax.f32 %v2394, 0.0
        %v2403 = vmax.f32 %v2395, 0.0
        %v2404 = vmax.f32 %v2396, 0.0
        %v2405 = vmax.f32 %v2397, 0.0
        %v2406 = vmax.f32 %v2398, 0.0
        %v2407 = vmax.f32 %v2399, 0.0
        %2408 = vst [vmem:[%s203] sm:$0xff] %v2400
        %2409 = vst [vmem:[%s203 + $0x8] sm:$0xff] %v2401
        %2410 = vst [vmem:[%s203 + $0x10] sm:$0xff] %v2402
        %2411 = vst [vmem:[%s203 + $0x18] sm:$0xff] %v2403
        %2412 = vst [vmem:[%s203 + $0x20] sm:$0xff] %v2404
        %2413 = vst [vmem:[%s203 + $0x28] sm:$0xff] %v2405
        %2414 = vst [vmem:[%s203 + $0x30] sm:$0xff] %v2406
        %2415 = vst [vmem:[%s203 + $0x38] sm:$0xff] %v2407
        %s2416 = scalar_lea.vmem [#allocation2], 96
        %v2417 = vld [vmem:[%s2416] sm:$0xff]
        %v2418 = vld [vmem:[%s2416 + $0x8] sm:$0xf]
        %v2419 = vld [vmem:[%s2416 + $0xc] sm:$0xff]
        %v2420 = vld [vmem:[%s2416 + $0x14] sm:$0xf]
        %v2421 = vld [vmem:[%s2416 + $0x18] sm:$0xff]
        %v2422 = vld [vmem:[%s2416 + $0x20] sm:$0xf]
        %v2423 = vld [vmem:[%s2416 + $0x24] sm:$0xff]
        %v2424 = vld [vmem:[%s2416 + $0x2c] sm:$0xf]
        %v2425 = vld [vmem:[%s2416 + $0x30] sm:$0xff]
        %v2426 = vld [vmem:[%s2416 + $0x38] sm:$0xf]
        %v2427 = vld [vmem:[%s2416 + $0x3c] sm:$0xff]
        %v2428 = vld [vmem:[%s2416 + $0x44] sm:$0xf]
        %v2429 = vld [vmem:[%s2416 + $0x48] sm:$0xff]
        %v2430 = vld [vmem:[%s2416 + $0x50] sm:$0xf]
        %v2431 = vld [vmem:[%s2416 + $0x54] sm:$0xff]
        %v2432 = vld [vmem:[%s2416 + $0x5c] sm:$0xf]
        %v2433 = vld [vmem:[#allocation6] sm:$0xf]
        %v2434 = vld [vmem:[#allocation6 + $0x4] sm:$0xf]
        %v2435 = vld [vmem:[#allocation6 + $0x8] sm:$0xf]
        %v2436 = vld [vmem:[#allocation6 + $0xc] sm:$0xf]
        %v2437 = vld [vmem:[#allocation6 + $0x10] sm:$0xf]
        %v2438 = vld [vmem:[#allocation6 + $0x14] sm:$0xf]
        %v2439 = vld [vmem:[#allocation6 + $0x18] sm:$0xf]
        %v2440 = vld [vmem:[#allocation6 + $0x1c] sm:$0xf]
        %v2441 = vld [vmem:[#allocation6 + $0x20] sm:$0xf]
        %v2442 = vld [vmem:[#allocation6 + $0x24] sm:$0xf]
        %v2443 = vld [vmem:[#allocation6 + $0x28] sm:$0xf]
        %v2444 = vld [vmem:[#allocation6 + $0x2c] sm:$0xf]
        %v2445 = vld [vmem:[#allocation6 + $0x30] sm:$0xf]
        %v2446 = vld [vmem:[#allocation6 + $0x34] sm:$0xf]
        %v2447 = vld [vmem:[#allocation6 + $0x38] sm:$0xf]
        %v2448 = vld [vmem:[#allocation6 + $0x3c] sm:$0xf]
        %v2449 = vld [vmem:[#allocation6 + $0x40] sm:$0xf]
        %v2450 = vld [vmem:[#allocation6 + $0x44] sm:$0xf]
        %v2451 = vld [vmem:[#allocation6 + $0x48] sm:$0xf]
        %v2452 = vld [vmem:[#allocation6 + $0x4c] sm:$0xf]
        %v2453 = vld [vmem:[#allocation6 + $0x50] sm:$0xf]
        %v2454 = vld [vmem:[#allocation6 + $0x54] sm:$0xf]
        %v2455 = vld [vmem:[#allocation6 + $0x58] sm:$0xf]
        %v2456 = vld [vmem:[#allocation6 + $0x5c] sm:$0xf]
        %v2457 = vld [vmem:[#allocation6 + $0x60] sm:$0xf]
        %v2458 = vld [vmem:[#allocation6 + $0x64] sm:$0xf]
        %v2459 = vld [vmem:[#allocation6 + $0x68] sm:$0xf]
        %v2460 = vld [vmem:[#allocation6 + $0x6c] sm:$0xf]
        %v2461 = vld [vmem:[#allocation6 + $0x70] sm:$0xf]
        %v2462 = vld [vmem:[#allocation6 + $0x74] sm:$0xf]
        %v2463 = vld [vmem:[#allocation6 + $0x78] sm:$0xf]
        %v2464 = vld [vmem:[#allocation6 + $0x7c] sm:$0xf]
        %v2465 = vld [vmem:[#allocation6 + $0x80] sm:$0xf]
        %v2466 = vld [vmem:[#allocation6 + $0x84] sm:$0xf]
        %v2467 = vld [vmem:[#allocation6 + $0x88] sm:$0xf]
        %v2468 = vld [vmem:[#allocation6 + $0x8c] sm:$0xf]
        %v2469 = vld [vmem:[#allocation6 + $0x90] sm:$0xf]
        %v2470 = vld [vmem:[#allocation6 + $0x94] sm:$0xf]
        %v2471 = vld [vmem:[#allocation6 + $0x98] sm:$0xf]
        %v2472 = vld [vmem:[#allocation6 + $0x9c] sm:$0xf]
        %v2473 = vld [vmem:[#allocation6 + $0xa0] sm:$0xf]
        %v2474 = vld [vmem:[#allocation6 + $0xa4] sm:$0xf]
        %v2475 = vld [vmem:[#allocation6 + $0xa8] sm:$0xf]
        %v2476 = vld [vmem:[#allocation6 + $0xac] sm:$0xf]
        %v2477 = vld [vmem:[#allocation6 + $0xb0] sm:$0xf]
        %v2478 = vld [vmem:[#allocation6 + $0xb4] sm:$0xf]
        %v2479 = vld [vmem:[#allocation6 + $0xb8] sm:$0xf]
        %v2480 = vld [vmem:[#allocation6 + $0xbc] sm:$0xf]
        %s2481 = scalar_lea.vmem [#allocation2], 120
        %v2482 = vld [vmem:[%s2481] sm:$0xff]
        %v2483 = vld [vmem:[%s2481 + $0x8] sm:$0xf]
        %v2484 = vld [vmem:[%s2481 + $0xc] sm:$0xff]
        %v2485 = vld [vmem:[%s2481 + $0x14] sm:$0xf]
        %v2486 = vld [vmem:[%s2481 + $0x18] sm:$0xff]
        %v2487 = vld [vmem:[%s2481 + $0x20] sm:$0xf]
        %v2488 = vld [vmem:[%s2481 + $0x24] sm:$0xff]
        %v2489 = vld [vmem:[%s2481 + $0x2c] sm:$0xf]
        %v2490 = vld [vmem:[%s2481 + $0x30] sm:$0xff]
        %v2491 = vld [vmem:[%s2481 + $0x38] sm:$0xf]
        %v2492 = vld [vmem:[%s2481 + $0x3c] sm:$0xff]
        %v2493 = vld [vmem:[%s2481 + $0x44] sm:$0xf]
        %v2494 = vld [vmem:[%s2481 + $0x48] sm:$0xff]
        %v2495 = vld [vmem:[%s2481 + $0x50] sm:$0xf]
        %v2496 = vld [vmem:[%s2481 + $0x54] sm:$0xff]
        %v2497 = vld [vmem:[%s2481 + $0x5c] sm:$0xf]
        %v2498 = vld [vmem:[%s1249] sm:$0xf]
        %v2499 = vld [vmem:[%s1249 + $0x4] sm:$0xf]
        %v2500 = vld [vmem:[%s1249 + $0x8] sm:$0xf]
        %v2501 = vld [vmem:[%s1249 + $0xc] sm:$0xf]
        %v2502 = vld [vmem:[%s1249 + $0x10] sm:$0xf]
        %v2503 = vld [vmem:[%s1249 + $0x14] sm:$0xf]
        %v2504 = vld [vmem:[%s1249 + $0x18] sm:$0xf]
        %v2505 = vld [vmem:[%s1249 + $0x1c] sm:$0xf]
        %v2506 = vld [vmem:[%s1249 + $0x20] sm:$0xf]
        %v2507 = vld [vmem:[%s1249 + $0x24] sm:$0xf]
        %v2508 = vld [vmem:[%s1249 + $0x28] sm:$0xf]
        %v2509 = vld [vmem:[%s1249 + $0x2c] sm:$0xf]
        %v2510 = vld [vmem:[%s1249 + $0x30] sm:$0xf]
        %v2511 = vld [vmem:[%s1249 + $0x34] sm:$0xf]
        %v2512 = vld [vmem:[%s1249 + $0x38] sm:$0xf]
        %v2513 = vld [vmem:[%s1249 + $0x3c] sm:$0xf]
        %v2514 = vld [vmem:[%s1249 + $0x40] sm:$0xf]
        %v2515 = vld [vmem:[%s1249 + $0x44] sm:$0xf]
        %v2516 = vld [vmem:[%s1249 + $0x48] sm:$0xf]
        %v2517 = vld [vmem:[%s1249 + $0x4c] sm:$0xf]
        %v2518 = vld [vmem:[%s1249 + $0x50] sm:$0xf]
        %v2519 = vld [vmem:[%s1249 + $0x54] sm:$0xf]
        %v2520 = vld [vmem:[%s1249 + $0x58] sm:$0xf]
        %v2521 = vld [vmem:[%s1249 + $0x5c] sm:$0xf]
        %v2522 = vld [vmem:[%s1249 + $0x60] sm:$0xf]
        %v2523 = vld [vmem:[%s1249 + $0x64] sm:$0xf]
        %v2524 = vld [vmem:[%s1249 + $0x68] sm:$0xf]
        %v2525 = vld [vmem:[%s1249 + $0x6c] sm:$0xf]
        %v2526 = vld [vmem:[%s1249 + $0x70] sm:$0xf]
        %v2527 = vld [vmem:[%s1249 + $0x74] sm:$0xf]
        %v2528 = vld [vmem:[%s1249 + $0x78] sm:$0xf]
        %v2529 = vld [vmem:[%s1249 + $0x7c] sm:$0xf]
        %v2530 = vld [vmem:[%s1249 + $0x80] sm:$0xf]
        %v2531 = vld [vmem:[%s1249 + $0x84] sm:$0xf]
        %v2532 = vld [vmem:[%s1249 + $0x88] sm:$0xf]
        %v2533 = vld [vmem:[%s1249 + $0x8c] sm:$0xf]
        %v2534 = vld [vmem:[%s1249 + $0x90] sm:$0xf]
        %v2535 = vld [vmem:[%s1249 + $0x94] sm:$0xf]
        %v2536 = vld [vmem:[%s1249 + $0x98] sm:$0xf]
        %v2537 = vld [vmem:[%s1249 + $0x9c] sm:$0xf]
        %v2538 = vld [vmem:[%s1249 + $0xa0] sm:$0xf]
        %v2539 = vld [vmem:[%s1249 + $0xa4] sm:$0xf]
        %v2540 = vld [vmem:[%s1249 + $0xa8] sm:$0xf]
        %v2541 = vld [vmem:[%s1249 + $0xac] sm:$0xf]
        %v2542 = vld [vmem:[%s1249 + $0xb0] sm:$0xf]
        %v2543 = vld [vmem:[%s1249 + $0xb4] sm:$0xf]
        %v2544 = vld [vmem:[%s1249 + $0xb8] sm:$0xf]
        %v2545 = vld [vmem:[%s1249 + $0xbc] sm:$0xf]
        %v2562 = vunpack.c.l.b16 %v2482
        %v2563 = vunpack.c.h.b16 %v2482
        %v2564 = vunpack.c.l.b16 %v2483
        %v2565 = vunpack.c.l.b16 %v2484
        %v2566 = vunpack.c.h.b16 %v2484
        %v2567 = vunpack.c.l.b16 %v2485
        %v2568 = vunpack.c.l.b16 %v2486
        %v2569 = vunpack.c.h.b16 %v2486
        %v2570 = vunpack.c.l.b16 %v2487
        %v2571 = vunpack.c.l.b16 %v2488
        %v2572 = vunpack.c.h.b16 %v2488
        %v2573 = vunpack.c.l.b16 %v2489
        %v2574 = vunpack.c.l.b16 %v2490
        %v2575 = vunpack.c.h.b16 %v2490
        %v2576 = vunpack.c.l.b16 %v2491
        %v2577 = vunpack.c.l.b16 %v2492
        %v2578 = vunpack.c.h.b16 %v2492
        %v2579 = vunpack.c.l.b16 %v2493
        %v2580 = vunpack.c.l.b16 %v2494
        %v2581 = vunpack.c.h.b16 %v2494
        %v2582 = vunpack.c.l.b16 %v2495
        %v2583 = vunpack.c.l.b16 %v2496
        %v2584 = vunpack.c.h.b16 %v2496
        %v2585 = vunpack.c.l.b16 %v2497
        %v2586 = vpack.c.b16 %v2565, %v2562
        %v2587 = vpack.c.b16 %v2566, %v2563
        %v2588 = vpack.c.b16 %v2567, %v2564
        %v2589 = vpack.c.b16 %v2571, %v2568
        %v2590 = vpack.c.b16 %v2572, %v2569
        %v2591 = vpack.c.b16 %v2573, %v2570
        %v2592 = vpack.c.b16 %v2577, %v2574
        %v2593 = vpack.c.b16 %v2578, %v2575
        %v2594 = vpack.c.b16 %v2579, %v2576
        %v2595 = vpack.c.b16 %v2583, %v2580
        %v2596 = vpack.c.b16 %v2584, %v2581
        %v2597 = vpack.c.b16 %v2585, %v2582
        %v2658 = vunpack.c.l.b16 %v2498
        %v2659 = vunpack.c.l.b16 %v2499
        %v2660 = vunpack.c.l.b16 %v2500
        %v2661 = vunpack.c.l.b16 %v2501
        %v2662 = vunpack.c.l.b16 %v2502
        %v2663 = vunpack.c.l.b16 %v2503
        %v2664 = vunpack.c.l.b16 %v2504
        %v2665 = vunpack.c.l.b16 %v2505
        %v2666 = vunpack.c.l.b16 %v2506
        %v2667 = vunpack.c.l.b16 %v2507
        %v2668 = vunpack.c.l.b16 %v2508
        %v2669 = vunpack.c.l.b16 %v2509
        %v2670 = vunpack.c.l.b16 %v2510
        %v2671 = vunpack.c.l.b16 %v2511
        %v2672 = vunpack.c.l.b16 %v2512
        %v2673 = vunpack.c.l.b16 %v2513
        %v2674 = vunpack.c.l.b16 %v2514
        %v2675 = vunpack.c.l.b16 %v2515
        %v2676 = vunpack.c.l.b16 %v2516
        %v2677 = vunpack.c.l.b16 %v2517
        %v2678 = vunpack.c.l.b16 %v2518
        %v2679 = vunpack.c.l.b16 %v2519
        %v2680 = vunpack.c.l.b16 %v2520
        %v2681 = vunpack.c.l.b16 %v2521
        %v2682 = vunpack.c.l.b16 %v2522
        %v2683 = vunpack.c.l.b16 %v2523
        %v2684 = vunpack.c.l.b16 %v2524
        %v2685 = vunpack.c.l.b16 %v2525
        %v2686 = vunpack.c.l.b16 %v2526
        %v2687 = vunpack.c.l.b16 %v2527
        %v2688 = vunpack.c.l.b16 %v2528
        %v2689 = vunpack.c.l.b16 %v2529
        %v2690 = vunpack.c.l.b16 %v2530
        %v2691 = vunpack.c.l.b16 %v2531
        %v2692 = vunpack.c.l.b16 %v2532
        %v2693 = vunpack.c.l.b16 %v2533
        %v2694 = vunpack.c.l.b16 %v2534
        %v2695 = vunpack.c.l.b16 %v2535
        %v2696 = vunpack.c.l.b16 %v2536
        %v2697 = vunpack.c.l.b16 %v2537
        %v2698 = vunpack.c.l.b16 %v2538
        %v2699 = vunpack.c.l.b16 %v2539
        %v2700 = vunpack.c.l.b16 %v2540
        %v2701 = vunpack.c.l.b16 %v2541
        %v2702 = vunpack.c.l.b16 %v2542
        %v2703 = vunpack.c.l.b16 %v2543
        %v2704 = vunpack.c.l.b16 %v2544
        %v2705 = vunpack.c.l.b16 %v2545
        %v2706 = vpack.c.b16 %v2659, %v2658
        %v2707 = vpack.c.b16 %v2661, %v2660
        %v2708 = vpack.c.b16 %v2663, %v2662
        %v2709 = vpack.c.b16 %v2665, %v2664
        %v2710 = vpack.c.b16 %v2667, %v2666
        %v2711 = vpack.c.b16 %v2669, %v2668
        %v2712 = vpack.c.b16 %v2671, %v2670
        %v2713 = vpack.c.b16 %v2673, %v2672
        %v2714 = vpack.c.b16 %v2675, %v2674
        %v2715 = vpack.c.b16 %v2677, %v2676
        %v2716 = vpack.c.b16 %v2679, %v2678
        %v2717 = vpack.c.b16 %v2681, %v2680
        %v2718 = vpack.c.b16 %v2683, %v2682
        %v2719 = vpack.c.b16 %v2685, %v2684
        %v2720 = vpack.c.b16 %v2687, %v2686
        %v2721 = vpack.c.b16 %v2689, %v2688
        %v2722 = vpack.c.b16 %v2691, %v2690
        %v2723 = vpack.c.b16 %v2693, %v2692
        %v2724 = vpack.c.b16 %v2695, %v2694
        %v2725 = vpack.c.b16 %v2697, %v2696
        %v2726 = vpack.c.b16 %v2699, %v2698
        %v2727 = vpack.c.b16 %v2701, %v2700
        %v2728 = vpack.c.b16 %v2703, %v2702
        %v2729 = vpack.c.b16 %v2705, %v2704
        %2754 = vmatprep.subr.bf16.mxu0 0
        %2755 = vmatpush1.bf16.msra.mxu0 %v2713
        %2756 = vmatprep.subr.bf16.mxu0 0
        %2757 = vmatpush1.bf16.msra.mxu0 %v2712
        %2758 = vmatprep.subr.bf16.mxu0 0
        %2759 = vmatpush1.bf16.msra.mxu0 %v2711
        %2760 = vmatprep.subr.bf16.mxu0 0
        %2761 = vmatpush1.bf16.msra.mxu0 %v2710
        %2762 = vmatprep.subr.bf16.mxu0 0
        %2763 = vmatpush1.bf16.msra.mxu0 %v2709
        %2764 = vmatprep.subr.bf16.mxu0 0
        %2765 = vmatpush1.bf16.msra.mxu0 %v2708
        %2766 = vmatprep.subr.bf16.mxu0 0
        %2767 = vmatpush1.bf16.msra.mxu0 %v2707
        %2768 = vmatprep.subr.bf16.mxu0 0
        %2769 = vmatpush1.bf16.msra.mxu0 %v2706
        %2770 = vmatprep.subr.bf16.mxu0 0
        %2771 = vmatpush2.bf16.msra.mxu0 %v2721
        %2772 = vmatprep.subr.bf16.mxu0 0
        %2773 = vmatpush2.bf16.msra.mxu0 %v2720
        %2774 = vmatprep.subr.bf16.mxu0 0
        %2775 = vmatpush2.bf16.msra.mxu0 %v2719
        %2776 = vmatprep.subr.bf16.mxu0 0
        %2777 = vmatpush2.bf16.msra.mxu0 %v2718
        %2778 = vmatprep.subr.bf16.mxu0 0
        %2779 = vmatpush2.bf16.msra.mxu0 %v2717
        %2780 = vmatprep.subr.bf16.mxu0 0
        %2781 = vmatpush2.bf16.msra.mxu0 %v2716
        %2782 = vmatprep.subr.bf16.mxu0 0
        %2783 = vmatpush2.bf16.msra.mxu0 %v2715
        %2784 = vmatprep.subr.bf16.mxu0 0
        %2785 = vmatpush2.bf16.msra.mxu0 %v2714
        %2786 = vmatprep.mubr.bf16.mxu0 %v2587
        %2787 = vmatmul.mubr.bf16.gmra.mxu0 %v2586
        %v2788 = vpop.f32.mrf.mxu0
        %v2789 = vadd.f32 0.0, %v2788
        %v2790 = vpop.f32.mrf.mxu0
        %v2791 = vpop.f32.mrf.mxu0
        %v2792 = vadd.f32 0.0, %v2791
        %v2793 = vpop.f32.mrf.mxu0
        %2794 = vmatprep.mubr.bf16.mxu0 %v2590
        %2795 = vmatmul.mubr.bf16.gmra.mxu0 %v2589
        %v2796 = vpop.f32.mrf.mxu0
        %v2797 = vadd.f32 0.0, %v2796
        %v2798 = vpop.f32.mrf.mxu0
        %v2799 = vpop.f32.mrf.mxu0
        %v2800 = vadd.f32 0.0, %v2799
        %v2801 = vpop.f32.mrf.mxu0
        %2802 = vmatprep.mubr.bf16.mxu0 %v2593
        %2803 = vmatmul.mubr.bf16.gmra.mxu0 %v2592
        %v2804 = vpop.f32.mrf.mxu0
        %v2805 = vadd.f32 0.0, %v2804
        %v2806 = vpop.f32.mrf.mxu0
        %v2807 = vpop.f32.mrf.mxu0
        %v2808 = vadd.f32 0.0, %v2807
        %v2809 = vpop.f32.mrf.mxu0
        %2810 = vmatprep.mubr.bf16.mxu0 %v2596
        %2811 = vmatmul.mubr.bf16.gmra.mxu0 %v2595
        %v2812 = vpop.f32.mrf.mxu0
        %v2813 = vadd.f32 0.0, %v2812
        %v2814 = vpop.f32.mrf.mxu0
        %v2815 = vpop.f32.mrf.mxu0
        %v2816 = vadd.f32 0.0, %v2815
        %v2817 = vpop.f32.mrf.mxu0
        %2818 = vdwg.mxu0
        %2819 = vmatprep.subr.bf16.mxu0 0
        %2820 = vmatpush1.bf16.msra.mxu0 %v2729
        %2821 = vmatprep.subr.bf16.mxu0 0
        %2822 = vmatpush1.bf16.msra.mxu0 %v2728
        %2823 = vmatprep.subr.bf16.mxu0 0
        %2824 = vmatpush1.bf16.msra.mxu0 %v2727
        %2825 = vmatprep.subr.bf16.mxu0 0
        %2826 = vmatpush1.bf16.msra.mxu0 %v2726
        %2827 = vmatprep.subr.bf16.mxu0 0
        %2828 = vmatpush1.bf16.msra.mxu0 %v2725
        %2829 = vmatprep.subr.bf16.mxu0 0
        %2830 = vmatpush1.bf16.msra.mxu0 %v2724
        %2831 = vmatprep.subr.bf16.mxu0 0
        %2832 = vmatpush1.bf16.msra.mxu0 %v2723
        %2833 = vmatprep.subr.bf16.mxu0 0
        %2834 = vmatpush1.bf16.msra.mxu0 %v2722
        %2835 = vmatprep.subr.bf16.mxu0 0
        %2836 = vmatpush2.bf16.msra.mxu0 0
        %2837 = vmatprep.subr.bf16.mxu0 0
        %2838 = vmatpush2.bf16.msra.mxu0 0
        %2839 = vmatprep.subr.bf16.mxu0 0
        %2840 = vmatpush2.bf16.msra.mxu0 0
        %2841 = vmatprep.subr.bf16.mxu0 0
        %2842 = vmatpush2.bf16.msra.mxu0 0
        %2843 = vmatprep.subr.bf16.mxu0 0
        %2844 = vmatpush2.bf16.msra.mxu0 0
        %2845 = vmatprep.subr.bf16.mxu0 0
        %2846 = vmatpush2.bf16.msra.mxu0 0
        %2847 = vmatprep.subr.bf16.mxu0 0
        %2848 = vmatpush2.bf16.msra.mxu0 0
        %2849 = vmatprep.subr.bf16.mxu0 0
        %2850 = vmatpush2.bf16.msra.mxu0 0
        %2851 = vmatprep.mubr.bf16.mxu0 0
        %2852 = vmatmul.mubr.bf16.gmra.mxu0 %v2588
        %v2853 = vpop.f32.mrf.mxu0
        %v2854 = vadd.f32 %v2789, %v2853
        %v2855 = vpop.f32.mrf.mxu0
        %v2856 = vpop.f32.mrf.mxu0
        %v2857 = vadd.f32 %v2792, %v2856
        %v2858 = vpop.f32.mrf.mxu0
        %2859 = vmatprep.mubr.bf16.mxu0 0
        %2860 = vmatmul.mubr.bf16.gmra.mxu0 %v2591
        %v2861 = vpop.f32.mrf.mxu0
        %v2862 = vadd.f32 %v2797, %v2861
        %v2863 = vpop.f32.mrf.mxu0
        %v2864 = vpop.f32.mrf.mxu0
        %v2865 = vadd.f32 %v2800, %v2864
        %v2866 = vpop.f32.mrf.mxu0
        %2867 = vmatprep.mubr.bf16.mxu0 0
        %2868 = vmatmul.mubr.bf16.gmra.mxu0 %v2594
        %v2869 = vpop.f32.mrf.mxu0
        %v2870 = vadd.f32 %v2805, %v2869
        %v2871 = vpop.f32.mrf.mxu0
        %v2872 = vpop.f32.mrf.mxu0
        %v2873 = vadd.f32 %v2808, %v2872
        %v2874 = vpop.f32.mrf.mxu0
        %2875 = vmatprep.mubr.bf16.mxu0 0
        %2876 = vmatmul.mubr.bf16.gmra.mxu0 %v2597
        %v2877 = vpop.f32.mrf.mxu0
        %v2878 = vadd.f32 %v2813, %v2877
        %v2879 = vpop.f32.mrf.mxu0
        %v2880 = vpop.f32.mrf.mxu0
        %v2881 = vadd.f32 %v2816, %v2880
        %v2882 = vpop.f32.mrf.mxu0
        %2883 = vdwg.mxu0
        %v2900 = vunpack.c.l.b16 %v2417
        %v2901 = vunpack.c.h.b16 %v2417
        %v2902 = vunpack.c.l.b16 %v2418
        %v2903 = vunpack.c.l.b16 %v2419
        %v2904 = vunpack.c.h.b16 %v2419
        %v2905 = vunpack.c.l.b16 %v2420
        %v2906 = vunpack.c.l.b16 %v2421
        %v2907 = vunpack.c.h.b16 %v2421
        %v2908 = vunpack.c.l.b16 %v2422
        %v2909 = vunpack.c.l.b16 %v2423
        %v2910 = vunpack.c.h.b16 %v2423
        %v2911 = vunpack.c.l.b16 %v2424
        %v2912 = vunpack.c.l.b16 %v2425
        %v2913 = vunpack.c.h.b16 %v2425
        %v2914 = vunpack.c.l.b16 %v2426
        %v2915 = vunpack.c.l.b16 %v2427
        %v2916 = vunpack.c.h.b16 %v2427
        %v2917 = vunpack.c.l.b16 %v2428
        %v2918 = vunpack.c.l.b16 %v2429
        %v2919 = vunpack.c.h.b16 %v2429
        %v2920 = vunpack.c.l.b16 %v2430
        %v2921 = vunpack.c.l.b16 %v2431
        %v2922 = vunpack.c.h.b16 %v2431
        %v2923 = vunpack.c.l.b16 %v2432
        %v2924 = vpack.c.b16 %v2903, %v2900
        %v2925 = vpack.c.b16 %v2904, %v2901
        %v2926 = vpack.c.b16 %v2905, %v2902
        %v2927 = vpack.c.b16 %v2909, %v2906
        %v2928 = vpack.c.b16 %v2910, %v2907
        %v2929 = vpack.c.b16 %v2911, %v2908
        %v2930 = vpack.c.b16 %v2915, %v2912
        %v2931 = vpack.c.b16 %v2916, %v2913
        %v2932 = vpack.c.b16 %v2917, %v2914
        %v2933 = vpack.c.b16 %v2921, %v2918
        %v2934 = vpack.c.b16 %v2922, %v2919
        %v2935 = vpack.c.b16 %v2923, %v2920
        %v2996 = vunpack.c.l.b16 %v2433
        %v2997 = vunpack.c.l.b16 %v2434
        %v2998 = vunpack.c.l.b16 %v2435
        %v2999 = vunpack.c.l.b16 %v2436
        %v3000 = vunpack.c.l.b16 %v2437
        %v3001 = vunpack.c.l.b16 %v2438
        %v3002 = vunpack.c.l.b16 %v2439
        %v3003 = vunpack.c.l.b16 %v2440
        %v3004 = vunpack.c.l.b16 %v2441
        %v3005 = vunpack.c.l.b16 %v2442
        %v3006 = vunpack.c.l.b16 %v2443
        %v3007 = vunpack.c.l.b16 %v2444
        %v3008 = vunpack.c.l.b16 %v2445
        %v3009 = vunpack.c.l.b16 %v2446
        %v3010 = vunpack.c.l.b16 %v2447
        %v3011 = vunpack.c.l.b16 %v2448
        %v3012 = vunpack.c.l.b16 %v2449
        %v3013 = vunpack.c.l.b16 %v2450
        %v3014 = vunpack.c.l.b16 %v2451
        %v3015 = vunpack.c.l.b16 %v2452
        %v3016 = vunpack.c.l.b16 %v2453
        %v3017 = vunpack.c.l.b16 %v2454
        %v3018 = vunpack.c.l.b16 %v2455
        %v3019 = vunpack.c.l.b16 %v2456
        %v3020 = vunpack.c.l.b16 %v2457
        %v3021 = vunpack.c.l.b16 %v2458
        %v3022 = vunpack.c.l.b16 %v2459
        %v3023 = vunpack.c.l.b16 %v2460
        %v3024 = vunpack.c.l.b16 %v2461
        %v3025 = vunpack.c.l.b16 %v2462
        %v3026 = vunpack.c.l.b16 %v2463
        %v3027 = vunpack.c.l.b16 %v2464
        %v3028 = vunpack.c.l.b16 %v2465
        %v3029 = vunpack.c.l.b16 %v2466
        %v3030 = vunpack.c.l.b16 %v2467
        %v3031 = vunpack.c.l.b16 %v2468
        %v3032 = vunpack.c.l.b16 %v2469
        %v3033 = vunpack.c.l.b16 %v2470
        %v3034 = vunpack.c.l.b16 %v2471
        %v3035 = vunpack.c.l.b16 %v2472
        %v3036 = vunpack.c.l.b16 %v2473
        %v3037 = vunpack.c.l.b16 %v2474
        %v3038 = vunpack.c.l.b16 %v2475
        %v3039 = vunpack.c.l.b16 %v2476
        %v3040 = vunpack.c.l.b16 %v2477
        %v3041 = vunpack.c.l.b16 %v2478
        %v3042 = vunpack.c.l.b16 %v2479
        %v3043 = vunpack.c.l.b16 %v2480
        %v3044 = vpack.c.b16 %v2997, %v2996
        %v3045 = vpack.c.b16 %v2999, %v2998
        %v3046 = vpack.c.b16 %v3001, %v3000
        %v3047 = vpack.c.b16 %v3003, %v3002
        %v3048 = vpack.c.b16 %v3005, %v3004
        %v3049 = vpack.c.b16 %v3007, %v3006
        %v3050 = vpack.c.b16 %v3009, %v3008
        %v3051 = vpack.c.b16 %v3011, %v3010
        %v3052 = vpack.c.b16 %v3013, %v3012
        %v3053 = vpack.c.b16 %v3015, %v3014
        %v3054 = vpack.c.b16 %v3017, %v3016
        %v3055 = vpack.c.b16 %v3019, %v3018
        %v3056 = vpack.c.b16 %v3021, %v3020
        %v3057 = vpack.c.b16 %v3023, %v3022
        %v3058 = vpack.c.b16 %v3025, %v3024
        %v3059 = vpack.c.b16 %v3027, %v3026
        %v3060 = vpack.c.b16 %v3029, %v3028
        %v3061 = vpack.c.b16 %v3031, %v3030
        %v3062 = vpack.c.b16 %v3033, %v3032
        %v3063 = vpack.c.b16 %v3035, %v3034
        %v3064 = vpack.c.b16 %v3037, %v3036
        %v3065 = vpack.c.b16 %v3039, %v3038
        %v3066 = vpack.c.b16 %v3041, %v3040
        %v3067 = vpack.c.b16 %v3043, %v3042
        %3092 = vmatprep.subr.bf16.mxu0 0
        %3093 = vmatpush1.bf16.msra.mxu0 %v3051
        %3094 = vmatprep.subr.bf16.mxu0 0
        %3095 = vmatpush1.bf16.msra.mxu0 %v3050
        %3096 = vmatprep.subr.bf16.mxu0 0
        %3097 = vmatpush1.bf16.msra.mxu0 %v3049
        %3098 = vmatprep.subr.bf16.mxu0 0
        %3099 = vmatpush1.bf16.msra.mxu0 %v3048
        %3100 = vmatprep.subr.bf16.mxu0 0
        %3101 = vmatpush1.bf16.msra.mxu0 %v3047
        %3102 = vmatprep.subr.bf16.mxu0 0
        %3103 = vmatpush1.bf16.msra.mxu0 %v3046
        %3104 = vmatprep.subr.bf16.mxu0 0
        %3105 = vmatpush1.bf16.msra.mxu0 %v3045
        %3106 = vmatprep.subr.bf16.mxu0 0
        %3107 = vmatpush1.bf16.msra.mxu0 %v3044
        %3108 = vmatprep.subr.bf16.mxu0 0
        %3109 = vmatpush2.bf16.msra.mxu0 %v3059
        %3110 = vmatprep.subr.bf16.mxu0 0
        %3111 = vmatpush2.bf16.msra.mxu0 %v3058
        %3112 = vmatprep.subr.bf16.mxu0 0
        %3113 = vmatpush2.bf16.msra.mxu0 %v3057
        %3114 = vmatprep.subr.bf16.mxu0 0
        %3115 = vmatpush2.bf16.msra.mxu0 %v3056
        %3116 = vmatprep.subr.bf16.mxu0 0
        %3117 = vmatpush2.bf16.msra.mxu0 %v3055
        %3118 = vmatprep.subr.bf16.mxu0 0
        %3119 = vmatpush2.bf16.msra.mxu0 %v3054
        %3120 = vmatprep.subr.bf16.mxu0 0
        %3121 = vmatpush2.bf16.msra.mxu0 %v3053
        %3122 = vmatprep.subr.bf16.mxu0 0
        %3123 = vmatpush2.bf16.msra.mxu0 %v3052
        %3124 = vmatprep.mubr.bf16.mxu0 %v2925
        %3125 = vmatmul.mubr.bf16.gmra.mxu0 %v2924
        %v3126 = vpop.f32.mrf.mxu0
        %v3127 = vadd.f32 %v2854, %v3126
        %v3128 = vpop.f32.mrf.mxu0
        %v3129 = vpop.f32.mrf.mxu0
        %v3130 = vadd.f32 %v2857, %v3129
        %v3131 = vpop.f32.mrf.mxu0
        %3132 = vmatprep.mubr.bf16.mxu0 %v2928
        %3133 = vmatmul.mubr.bf16.gmra.mxu0 %v2927
        %v3134 = vpop.f32.mrf.mxu0
        %v3135 = vadd.f32 %v2862, %v3134
        %v3136 = vpop.f32.mrf.mxu0
        %v3137 = vpop.f32.mrf.mxu0
        %v3138 = vadd.f32 %v2865, %v3137
        %v3139 = vpop.f32.mrf.mxu0
        %3140 = vmatprep.mubr.bf16.mxu0 %v2931
        %3141 = vmatmul.mubr.bf16.gmra.mxu0 %v2930
        %v3142 = vpop.f32.mrf.mxu0
        %v3143 = vadd.f32 %v2870, %v3142
        %v3144 = vpop.f32.mrf.mxu0
        %v3145 = vpop.f32.mrf.mxu0
        %v3146 = vadd.f32 %v2873, %v3145
        %v3147 = vpop.f32.mrf.mxu0
        %3148 = vmatprep.mubr.bf16.mxu0 %v2934
        %3149 = vmatmul.mubr.bf16.gmra.mxu0 %v2933
        %v3150 = vpop.f32.mrf.mxu0
        %v3151 = vadd.f32 %v2878, %v3150
        %v3152 = vpop.f32.mrf.mxu0
        %v3153 = vpop.f32.mrf.mxu0
        %v3154 = vadd.f32 %v2881, %v3153
        %v3155 = vpop.f32.mrf.mxu0
        %3156 = vdwg.mxu0
        %3157 = vmatprep.subr.bf16.mxu0 0
        %3158 = vmatpush1.bf16.msra.mxu0 %v3067
        %3159 = vmatprep.subr.bf16.mxu0 0
        %3160 = vmatpush1.bf16.msra.mxu0 %v3066
        %3161 = vmatprep.subr.bf16.mxu0 0
        %3162 = vmatpush1.bf16.msra.mxu0 %v3065
        %3163 = vmatprep.subr.bf16.mxu0 0
        %3164 = vmatpush1.bf16.msra.mxu0 %v3064
        %3165 = vmatprep.subr.bf16.mxu0 0
        %3166 = vmatpush1.bf16.msra.mxu0 %v3063
        %3167 = vmatprep.subr.bf16.mxu0 0
        %3168 = vmatpush1.bf16.msra.mxu0 %v3062
        %3169 = vmatprep.subr.bf16.mxu0 0
        %3170 = vmatpush1.bf16.msra.mxu0 %v3061
        %3171 = vmatprep.subr.bf16.mxu0 0
        %3172 = vmatpush1.bf16.msra.mxu0 %v3060
        %3173 = vmatprep.subr.bf16.mxu0 0
        %3174 = vmatpush2.bf16.msra.mxu0 0
        %3175 = vmatprep.subr.bf16.mxu0 0
        %3176 = vmatpush2.bf16.msra.mxu0 0
        %3177 = vmatprep.subr.bf16.mxu0 0
        %3178 = vmatpush2.bf16.msra.mxu0 0
        %3179 = vmatprep.subr.bf16.mxu0 0
        %3180 = vmatpush2.bf16.msra.mxu0 0
        %3181 = vmatprep.subr.bf16.mxu0 0
        %3182 = vmatpush2.bf16.msra.mxu0 0
        %3183 = vmatprep.subr.bf16.mxu0 0
        %3184 = vmatpush2.bf16.msra.mxu0 0
        %3185 = vmatprep.subr.bf16.mxu0 0
        %3186 = vmatpush2.bf16.msra.mxu0 0
        %3187 = vmatprep.subr.bf16.mxu0 0
        %3188 = vmatpush2.bf16.msra.mxu0 0
        %3189 = vmatprep.mubr.bf16.mxu0 0
        %3190 = vmatmul.mubr.bf16.gmra.mxu0 %v2926
        %v3191 = vpop.f32.mrf.mxu0
        %v3192 = vadd.f32 %v3127, %v3191
        %v3193 = vpop.f32.mrf.mxu0
        %v3194 = vpop.f32.mrf.mxu0
        %v3195 = vadd.f32 %v3130, %v3194
        %v3196 = vpop.f32.mrf.mxu0
        %3197 = vmatprep.mubr.bf16.mxu0 0
        %3198 = vmatmul.mubr.bf16.gmra.mxu0 %v2929
        %v3199 = vpop.f32.mrf.mxu0
        %v3200 = vadd.f32 %v3135, %v3199
        %v3201 = vpop.f32.mrf.mxu0
        %v3202 = vpop.f32.mrf.mxu0
        %v3203 = vadd.f32 %v3138, %v3202
        %v3204 = vpop.f32.mrf.mxu0
        %3205 = vmatprep.mubr.bf16.mxu0 0
        %3206 = vmatmul.mubr.bf16.gmra.mxu0 %v2932
        %v3207 = vpop.f32.mrf.mxu0
        %v3208 = vadd.f32 %v3143, %v3207
        %v3209 = vpop.f32.mrf.mxu0
        %v3210 = vpop.f32.mrf.mxu0
        %v3211 = vadd.f32 %v3146, %v3210
        %v3212 = vpop.f32.mrf.mxu0
        %3213 = vmatprep.mubr.bf16.mxu0 0
        %3214 = vmatmul.mubr.bf16.gmra.mxu0 %v2935
        %v3215 = vpop.f32.mrf.mxu0
        %v3216 = vadd.f32 %v3151, %v3215
        %v3217 = vpop.f32.mrf.mxu0
        %v3218 = vpop.f32.mrf.mxu0
        %v3219 = vadd.f32 %v3154, %v3218
        %v3220 = vpop.f32.mrf.mxu0
        %3221 = vdwg.mxu0
        %s3222 = scalar_lea.vmem [#allocation2], 144
        %v3223 = vld [vmem:[%s3222] sm:$0xff]
        %v3224 = vld [vmem:[%s3222 + $0x8] sm:$0xf]
        %v3225 = vld [vmem:[%s3222 + $0xc] sm:$0xff]
        %v3226 = vld [vmem:[%s3222 + $0x14] sm:$0xf]
        %v3227 = vld [vmem:[%s3222 + $0x18] sm:$0xff]
        %v3228 = vld [vmem:[%s3222 + $0x20] sm:$0xf]
        %v3229 = vld [vmem:[%s3222 + $0x24] sm:$0xff]
        %v3230 = vld [vmem:[%s3222 + $0x2c] sm:$0xf]
        %v3231 = vld [vmem:[%s3222 + $0x30] sm:$0xff]
        %v3232 = vld [vmem:[%s3222 + $0x38] sm:$0xf]
        %v3233 = vld [vmem:[%s3222 + $0x3c] sm:$0xff]
        %v3234 = vld [vmem:[%s3222 + $0x44] sm:$0xf]
        %v3235 = vld [vmem:[%s3222 + $0x48] sm:$0xff]
        %v3236 = vld [vmem:[%s3222 + $0x50] sm:$0xf]
        %v3237 = vld [vmem:[%s3222 + $0x54] sm:$0xff]
        %v3238 = vld [vmem:[%s3222 + $0x5c] sm:$0xf]
        %v3239 = vld [vmem:[%s1991] sm:$0xf]
        %v3240 = vld [vmem:[%s1991 + $0x4] sm:$0xf]
        %v3241 = vld [vmem:[%s1991 + $0x8] sm:$0xf]
        %v3242 = vld [vmem:[%s1991 + $0xc] sm:$0xf]
        %v3243 = vld [vmem:[%s1991 + $0x10] sm:$0xf]
        %v3244 = vld [vmem:[%s1991 + $0x14] sm:$0xf]
        %v3245 = vld [vmem:[%s1991 + $0x18] sm:$0xf]
        %v3246 = vld [vmem:[%s1991 + $0x1c] sm:$0xf]
        %v3247 = vld [vmem:[%s1991 + $0x20] sm:$0xf]
        %v3248 = vld [vmem:[%s1991 + $0x24] sm:$0xf]
        %v3249 = vld [vmem:[%s1991 + $0x28] sm:$0xf]
        %v3250 = vld [vmem:[%s1991 + $0x2c] sm:$0xf]
        %v3251 = vld [vmem:[%s1991 + $0x30] sm:$0xf]
        %v3252 = vld [vmem:[%s1991 + $0x34] sm:$0xf]
        %v3253 = vld [vmem:[%s1991 + $0x38] sm:$0xf]
        %v3254 = vld [vmem:[%s1991 + $0x3c] sm:$0xf]
        %v3255 = vld [vmem:[%s1991 + $0x40] sm:$0xf]
        %v3256 = vld [vmem:[%s1991 + $0x44] sm:$0xf]
        %v3257 = vld [vmem:[%s1991 + $0x48] sm:$0xf]
        %v3258 = vld [vmem:[%s1991 + $0x4c] sm:$0xf]
        %v3259 = vld [vmem:[%s1991 + $0x50] sm:$0xf]
        %v3260 = vld [vmem:[%s1991 + $0x54] sm:$0xf]
        %v3261 = vld [vmem:[%s1991 + $0x58] sm:$0xf]
        %v3262 = vld [vmem:[%s1991 + $0x5c] sm:$0xf]
        %v3263 = vld [vmem:[%s1991 + $0x60] sm:$0xf]
        %v3264 = vld [vmem:[%s1991 + $0x64] sm:$0xf]
        %v3265 = vld [vmem:[%s1991 + $0x68] sm:$0xf]
        %v3266 = vld [vmem:[%s1991 + $0x6c] sm:$0xf]
        %v3267 = vld [vmem:[%s1991 + $0x70] sm:$0xf]
        %v3268 = vld [vmem:[%s1991 + $0x74] sm:$0xf]
        %v3269 = vld [vmem:[%s1991 + $0x78] sm:$0xf]
        %v3270 = vld [vmem:[%s1991 + $0x7c] sm:$0xf]
        %v3271 = vld [vmem:[%s1991 + $0x80] sm:$0xf]
        %v3272 = vld [vmem:[%s1991 + $0x84] sm:$0xf]
        %v3273 = vld [vmem:[%s1991 + $0x88] sm:$0xf]
        %v3274 = vld [vmem:[%s1991 + $0x8c] sm:$0xf]
        %v3275 = vld [vmem:[%s1991 + $0x90] sm:$0xf]
        %v3276 = vld [vmem:[%s1991 + $0x94] sm:$0xf]
        %v3277 = vld [vmem:[%s1991 + $0x98] sm:$0xf]
        %v3278 = vld [vmem:[%s1991 + $0x9c] sm:$0xf]
        %v3279 = vld [vmem:[%s1991 + $0xa0] sm:$0xf]
        %v3280 = vld [vmem:[%s1991 + $0xa4] sm:$0xf]
        %v3281 = vld [vmem:[%s1991 + $0xa8] sm:$0xf]
        %v3282 = vld [vmem:[%s1991 + $0xac] sm:$0xf]
        %v3283 = vld [vmem:[%s1991 + $0xb0] sm:$0xf]
        %v3284 = vld [vmem:[%s1991 + $0xb4] sm:$0xf]
        %v3285 = vld [vmem:[%s1991 + $0xb8] sm:$0xf]
        %v3286 = vld [vmem:[%s1991 + $0xbc] sm:$0xf]
        %v3303 = vunpack.c.l.b16 %v3223
        %v3304 = vunpack.c.h.b16 %v3223
        %v3305 = vunpack.c.l.b16 %v3224
        %v3306 = vunpack.c.l.b16 %v3225
        %v3307 = vunpack.c.h.b16 %v3225
        %v3308 = vunpack.c.l.b16 %v3226
        %v3309 = vunpack.c.l.b16 %v3227
        %v3310 = vunpack.c.h.b16 %v3227
        %v3311 = vunpack.c.l.b16 %v3228
        %v3312 = vunpack.c.l.b16 %v3229
        %v3313 = vunpack.c.h.b16 %v3229
        %v3314 = vunpack.c.l.b16 %v3230
        %v3315 = vunpack.c.l.b16 %v3231
        %v3316 = vunpack.c.h.b16 %v3231
        %v3317 = vunpack.c.l.b16 %v3232
        %v3318 = vunpack.c.l.b16 %v3233
        %v3319 = vunpack.c.h.b16 %v3233
        %v3320 = vunpack.c.l.b16 %v3234
        %v3321 = vunpack.c.l.b16 %v3235
        %v3322 = vunpack.c.h.b16 %v3235
        %v3323 = vunpack.c.l.b16 %v3236
        %v3324 = vunpack.c.l.b16 %v3237
        %v3325 = vunpack.c.h.b16 %v3237
        %v3326 = vunpack.c.l.b16 %v3238
        %v3327 = vpack.c.b16 %v3306, %v3303
        %v3328 = vpack.c.b16 %v3307, %v3304
        %v3329 = vpack.c.b16 %v3308, %v3305
        %v3330 = vpack.c.b16 %v3312, %v3309
        %v3331 = vpack.c.b16 %v3313, %v3310
        %v3332 = vpack.c.b16 %v3314, %v3311
        %v3333 = vpack.c.b16 %v3318, %v3315
        %v3334 = vpack.c.b16 %v3319, %v3316
        %v3335 = vpack.c.b16 %v3320, %v3317
        %v3336 = vpack.c.b16 %v3324, %v3321
        %v3337 = vpack.c.b16 %v3325, %v3322
        %v3338 = vpack.c.b16 %v3326, %v3323
        %v3399 = vunpack.c.l.b16 %v3239
        %v3400 = vunpack.c.l.b16 %v3240
        %v3401 = vunpack.c.l.b16 %v3241
        %v3402 = vunpack.c.l.b16 %v3242
        %v3403 = vunpack.c.l.b16 %v3243
        %v3404 = vunpack.c.l.b16 %v3244
        %v3405 = vunpack.c.l.b16 %v3245
        %v3406 = vunpack.c.l.b16 %v3246
        %v3407 = vunpack.c.l.b16 %v3247
        %v3408 = vunpack.c.l.b16 %v3248
        %v3409 = vunpack.c.l.b16 %v3249
        %v3410 = vunpack.c.l.b16 %v3250
        %v3411 = vunpack.c.l.b16 %v3251
        %v3412 = vunpack.c.l.b16 %v3252
        %v3413 = vunpack.c.l.b16 %v3253
        %v3414 = vunpack.c.l.b16 %v3254
        %v3415 = vunpack.c.l.b16 %v3255
        %v3416 = vunpack.c.l.b16 %v3256
        %v3417 = vunpack.c.l.b16 %v3257
        %v3418 = vunpack.c.l.b16 %v3258
        %v3419 = vunpack.c.l.b16 %v3259
        %v3420 = vunpack.c.l.b16 %v3260
        %v3421 = vunpack.c.l.b16 %v3261
        %v3422 = vunpack.c.l.b16 %v3262
        %v3423 = vunpack.c.l.b16 %v3263
        %v3424 = vunpack.c.l.b16 %v3264
        %v3425 = vunpack.c.l.b16 %v3265
        %v3426 = vunpack.c.l.b16 %v3266
        %v3427 = vunpack.c.l.b16 %v3267
        %v3428 = vunpack.c.l.b16 %v3268
        %v3429 = vunpack.c.l.b16 %v3269
        %v3430 = vunpack.c.l.b16 %v3270
        %v3431 = vunpack.c.l.b16 %v3271
        %v3432 = vunpack.c.l.b16 %v3272
        %v3433 = vunpack.c.l.b16 %v3273
        %v3434 = vunpack.c.l.b16 %v3274
        %v3435 = vunpack.c.l.b16 %v3275
        %v3436 = vunpack.c.l.b16 %v3276
        %v3437 = vunpack.c.l.b16 %v3277
        %v3438 = vunpack.c.l.b16 %v3278
        %v3439 = vunpack.c.l.b16 %v3279
        %v3440 = vunpack.c.l.b16 %v3280
        %v3441 = vunpack.c.l.b16 %v3281
        %v3442 = vunpack.c.l.b16 %v3282
        %v3443 = vunpack.c.l.b16 %v3283
        %v3444 = vunpack.c.l.b16 %v3284
        %v3445 = vunpack.c.l.b16 %v3285
        %v3446 = vunpack.c.l.b16 %v3286
        %v3447 = vpack.c.b16 %v3400, %v3399
        %v3448 = vpack.c.b16 %v3402, %v3401
        %v3449 = vpack.c.b16 %v3404, %v3403
        %v3450 = vpack.c.b16 %v3406, %v3405
        %v3451 = vpack.c.b16 %v3408, %v3407
        %v3452 = vpack.c.b16 %v3410, %v3409
        %v3453 = vpack.c.b16 %v3412, %v3411
        %v3454 = vpack.c.b16 %v3414, %v3413
        %v3455 = vpack.c.b16 %v3416, %v3415
        %v3456 = vpack.c.b16 %v3418, %v3417
        %v3457 = vpack.c.b16 %v3420, %v3419
        %v3458 = vpack.c.b16 %v3422, %v3421
        %v3459 = vpack.c.b16 %v3424, %v3423
        %v3460 = vpack.c.b16 %v3426, %v3425
        %v3461 = vpack.c.b16 %v3428, %v3427
        %v3462 = vpack.c.b16 %v3430, %v3429
        %v3463 = vpack.c.b16 %v3432, %v3431
        %v3464 = vpack.c.b16 %v3434, %v3433
        %v3465 = vpack.c.b16 %v3436, %v3435
        %v3466 = vpack.c.b16 %v3438, %v3437
        %v3467 = vpack.c.b16 %v3440, %v3439
        %v3468 = vpack.c.b16 %v3442, %v3441
        %v3469 = vpack.c.b16 %v3444, %v3443
        %v3470 = vpack.c.b16 %v3446, %v3445
        %3495 = vmatprep.subr.bf16.mxu0 0
        %3496 = vmatpush1.bf16.msra.mxu0 %v3454
        %3497 = vmatprep.subr.bf16.mxu0 0
        %3498 = vmatpush1.bf16.msra.mxu0 %v3453
        %3499 = vmatprep.subr.bf16.mxu0 0
        %3500 = vmatpush1.bf16.msra.mxu0 %v3452
        %3501 = vmatprep.subr.bf16.mxu0 0
        %3502 = vmatpush1.bf16.msra.mxu0 %v3451
        %3503 = vmatprep.subr.bf16.mxu0 0
        %3504 = vmatpush1.bf16.msra.mxu0 %v3450
        %3505 = vmatprep.subr.bf16.mxu0 0
        %3506 = vmatpush1.bf16.msra.mxu0 %v3449
        %3507 = vmatprep.subr.bf16.mxu0 0
        %3508 = vmatpush1.bf16.msra.mxu0 %v3448
        %3509 = vmatprep.subr.bf16.mxu0 0
        %3510 = vmatpush1.bf16.msra.mxu0 %v3447
        %3511 = vmatprep.subr.bf16.mxu0 0
        %3512 = vmatpush2.bf16.msra.mxu0 %v3462
        %3513 = vmatprep.subr.bf16.mxu0 0
        %3514 = vmatpush2.bf16.msra.mxu0 %v3461
        %3515 = vmatprep.subr.bf16.mxu0 0
        %3516 = vmatpush2.bf16.msra.mxu0 %v3460
        %3517 = vmatprep.subr.bf16.mxu0 0
        %3518 = vmatpush2.bf16.msra.mxu0 %v3459
        %3519 = vmatprep.subr.bf16.mxu0 0
        %3520 = vmatpush2.bf16.msra.mxu0 %v3458
        %3521 = vmatprep.subr.bf16.mxu0 0
        %3522 = vmatpush2.bf16.msra.mxu0 %v3457
        %3523 = vmatprep.subr.bf16.mxu0 0
        %3524 = vmatpush2.bf16.msra.mxu0 %v3456
        %3525 = vmatprep.subr.bf16.mxu0 0
        %3526 = vmatpush2.bf16.msra.mxu0 %v3455
        %3527 = vmatprep.mubr.bf16.mxu0 %v3328
        %3528 = vmatmul.mubr.bf16.gmra.mxu0 %v3327
        %v3529 = vpop.f32.mrf.mxu0
        %v3530 = vadd.f32 0.0, %v3529
        %v3531 = vpop.f32.mrf.mxu0
        %v3532 = vpop.f32.mrf.mxu0
        %v3533 = vadd.f32 0.0, %v3532
        %v3534 = vpop.f32.mrf.mxu0
        %3535 = vmatprep.mubr.bf16.mxu0 %v3331
        %3536 = vmatmul.mubr.bf16.gmra.mxu0 %v3330
        %v3537 = vpop.f32.mrf.mxu0
        %v3538 = vadd.f32 0.0, %v3537
        %v3539 = vpop.f32.mrf.mxu0
        %v3540 = vpop.f32.mrf.mxu0
        %v3541 = vadd.f32 0.0, %v3540
        %v3542 = vpop.f32.mrf.mxu0
        %3543 = vmatprep.mubr.bf16.mxu0 %v3334
        %3544 = vmatmul.mubr.bf16.gmra.mxu0 %v3333
        %v3545 = vpop.f32.mrf.mxu0
        %v3546 = vadd.f32 0.0, %v3545
        %v3547 = vpop.f32.mrf.mxu0
        %v3548 = vpop.f32.mrf.mxu0
        %v3549 = vadd.f32 0.0, %v3548
        %v3550 = vpop.f32.mrf.mxu0
        %3551 = vmatprep.mubr.bf16.mxu0 %v3337
        %3552 = vmatmul.mubr.bf16.gmra.mxu0 %v3336
        %v3553 = vpop.f32.mrf.mxu0
        %v3554 = vadd.f32 0.0, %v3553
        %v3555 = vpop.f32.mrf.mxu0
        %v3556 = vpop.f32.mrf.mxu0
        %v3557 = vadd.f32 0.0, %v3556
        %v3558 = vpop.f32.mrf.mxu0
        %3559 = vdwg.mxu0
        %3560 = vmatprep.subr.bf16.mxu0 0
        %3561 = vmatpush1.bf16.msra.mxu0 %v3470
        %3562 = vmatprep.subr.bf16.mxu0 0
        %3563 = vmatpush1.bf16.msra.mxu0 %v3469
        %3564 = vmatprep.subr.bf16.mxu0 0
        %3565 = vmatpush1.bf16.msra.mxu0 %v3468
        %3566 = vmatprep.subr.bf16.mxu0 0
        %3567 = vmatpush1.bf16.msra.mxu0 %v3467
        %3568 = vmatprep.subr.bf16.mxu0 0
        %3569 = vmatpush1.bf16.msra.mxu0 %v3466
        %3570 = vmatprep.subr.bf16.mxu0 0
        %3571 = vmatpush1.bf16.msra.mxu0 %v3465
        %3572 = vmatprep.subr.bf16.mxu0 0
        %3573 = vmatpush1.bf16.msra.mxu0 %v3464
        %3574 = vmatprep.subr.bf16.mxu0 0
        %3575 = vmatpush1.bf16.msra.mxu0 %v3463
        %3576 = vmatprep.subr.bf16.mxu0 0
        %3577 = vmatpush2.bf16.msra.mxu0 0
        %3578 = vmatprep.subr.bf16.mxu0 0
        %3579 = vmatpush2.bf16.msra.mxu0 0
        %3580 = vmatprep.subr.bf16.mxu0 0
        %3581 = vmatpush2.bf16.msra.mxu0 0
        %3582 = vmatprep.subr.bf16.mxu0 0
        %3583 = vmatpush2.bf16.msra.mxu0 0
        %3584 = vmatprep.subr.bf16.mxu0 0
        %3585 = vmatpush2.bf16.msra.mxu0 0
        %3586 = vmatprep.subr.bf16.mxu0 0
        %3587 = vmatpush2.bf16.msra.mxu0 0
        %3588 = vmatprep.subr.bf16.mxu0 0
        %3589 = vmatpush2.bf16.msra.mxu0 0
        %3590 = vmatprep.subr.bf16.mxu0 0
        %3591 = vmatpush2.bf16.msra.mxu0 0
        %3592 = vmatprep.mubr.bf16.mxu0 0
        %3593 = vmatmul.mubr.bf16.gmra.mxu0 %v3329
        %v3594 = vpop.f32.mrf.mxu0
        %v3595 = vadd.f32 %v3530, %v3594
        %v3596 = vpop.f32.mrf.mxu0
        %v3597 = vpop.f32.mrf.mxu0
        %v3598 = vadd.f32 %v3533, %v3597
        %v3599 = vpop.f32.mrf.mxu0
        %3600 = vmatprep.mubr.bf16.mxu0 0
        %3601 = vmatmul.mubr.bf16.gmra.mxu0 %v3332
        %v3602 = vpop.f32.mrf.mxu0
        %v3603 = vadd.f32 %v3538, %v3602
        %v3604 = vpop.f32.mrf.mxu0
        %v3605 = vpop.f32.mrf.mxu0
        %v3606 = vadd.f32 %v3541, %v3605
        %v3607 = vpop.f32.mrf.mxu0
        %3608 = vmatprep.mubr.bf16.mxu0 0
        %3609 = vmatmul.mubr.bf16.gmra.mxu0 %v3335
        %v3610 = vpop.f32.mrf.mxu0
        %v3611 = vadd.f32 %v3546, %v3610
        %v3612 = vpop.f32.mrf.mxu0
        %v3613 = vpop.f32.mrf.mxu0
        %v3614 = vadd.f32 %v3549, %v3613
        %v3615 = vpop.f32.mrf.mxu0
        %3616 = vmatprep.mubr.bf16.mxu0 0
        %3617 = vmatmul.mubr.bf16.gmra.mxu0 %v3338
        %v3618 = vpop.f32.mrf.mxu0
        %v3619 = vadd.f32 %v3554, %v3618
        %v3620 = vpop.f32.mrf.mxu0
        %v3621 = vpop.f32.mrf.mxu0
        %v3622 = vadd.f32 %v3557, %v3621
        %v3623 = vpop.f32.mrf.mxu0
        %3624 = vdwg.mxu0
        %v3625 = vadd.f32 %v3192, %v3595
        %v3626 = vadd.f32 %v3195, %v3598
        %v3627 = vadd.f32 %v3200, %v3603
        %v3628 = vadd.f32 %v3203, %v3606
        %v3629 = vadd.f32 %v3208, %v3611
        %v3630 = vadd.f32 %v3211, %v3614
        %v3631 = vadd.f32 %v3216, %v3619
        %v3632 = vadd.f32 %v3219, %v3622
        %v3633 = vadd.f32 %v3625, %v2390
        %v3634 = vadd.f32 %v3626, %v2390
        %v3635 = vadd.f32 %v3627, %v2390
        %v3636 = vadd.f32 %v3628, %v2390
        %v3637 = vadd.f32 %v3629, %v2390
        %v3638 = vadd.f32 %v3630, %v2390
        %v3639 = vadd.f32 %v3631, %v2390
        %v3640 = vadd.f32 %v3632, %v2390
        %v3641 = vmax.f32 %v3633, 0.0
        %v3642 = vmax.f32 %v3634, 0.0
        %v3643 = vmax.f32 %v3635, 0.0
        %v3644 = vmax.f32 %v3636, 0.0
        %v3645 = vmax.f32 %v3637, 0.0
        %v3646 = vmax.f32 %v3638, 0.0
        %v3647 = vmax.f32 %v3639, 0.0
        %v3648 = vmax.f32 %v3640, 0.0
        %s3649 = scalar_lea.vmem %s203, 64 [#allocation8]
        %3650 = vst [vmem:[%s3649] sm:$0xff] %v3641
        %3651 = vst [vmem:[%s3649 + $0x8] sm:$0xff] %v3642
        %3652 = vst [vmem:[%s3649 + $0x10] sm:$0xff] %v3643
        %3653 = vst [vmem:[%s3649 + $0x18] sm:$0xff] %v3644
        %3654 = vst [vmem:[%s3649 + $0x20] sm:$0xff] %v3645
        %3655 = vst [vmem:[%s3649 + $0x28] sm:$0xff] %v3646
        %3656 = vst [vmem:[%s3649 + $0x30] sm:$0xff] %v3647
        %3657 = vst [vmem:[%s3649 + $0x38] sm:$0xff] %v3648
        %s3658 = scalar_lea.vmem [#allocation2], 192
        %v3659 = vld [vmem:[%s3658] sm:$0xff]
        %v3660 = vld [vmem:[%s3658 + $0x8] sm:$0xf]
        %v3661 = vld [vmem:[%s3658 + $0xc] sm:$0xff]
        %v3662 = vld [vmem:[%s3658 + $0x14] sm:$0xf]
        %v3663 = vld [vmem:[%s3658 + $0x18] sm:$0xff]
        %v3664 = vld [vmem:[%s3658 + $0x20] sm:$0xf]
        %v3665 = vld [vmem:[%s3658 + $0x24] sm:$0xff]
        %v3666 = vld [vmem:[%s3658 + $0x2c] sm:$0xf]
        %v3667 = vld [vmem:[%s3658 + $0x30] sm:$0xff]
        %v3668 = vld [vmem:[%s3658 + $0x38] sm:$0xf]
        %v3669 = vld [vmem:[%s3658 + $0x3c] sm:$0xff]
        %v3670 = vld [vmem:[%s3658 + $0x44] sm:$0xf]
        %v3671 = vld [vmem:[%s3658 + $0x48] sm:$0xff]
        %v3672 = vld [vmem:[%s3658 + $0x50] sm:$0xf]
        %v3673 = vld [vmem:[%s3658 + $0x54] sm:$0xff]
        %v3674 = vld [vmem:[%s3658 + $0x5c] sm:$0xf]
        %v3675 = vld [vmem:[#allocation6] sm:$0xf]
        %v3676 = vld [vmem:[#allocation6 + $0x4] sm:$0xf]
        %v3677 = vld [vmem:[#allocation6 + $0x8] sm:$0xf]
        %v3678 = vld [vmem:[#allocation6 + $0xc] sm:$0xf]
        %v3679 = vld [vmem:[#allocation6 + $0x10] sm:$0xf]
        %v3680 = vld [vmem:[#allocation6 + $0x14] sm:$0xf]
        %v3681 = vld [vmem:[#allocation6 + $0x18] sm:$0xf]
        %v3682 = vld [vmem:[#allocation6 + $0x1c] sm:$0xf]
        %v3683 = vld [vmem:[#allocation6 + $0x20] sm:$0xf]
        %v3684 = vld [vmem:[#allocation6 + $0x24] sm:$0xf]
        %v3685 = vld [vmem:[#allocation6 + $0x28] sm:$0xf]
        %v3686 = vld [vmem:[#allocation6 + $0x2c] sm:$0xf]
        %v3687 = vld [vmem:[#allocation6 + $0x30] sm:$0xf]
        %v3688 = vld [vmem:[#allocation6 + $0x34] sm:$0xf]
        %v3689 = vld [vmem:[#allocation6 + $0x38] sm:$0xf]
        %v3690 = vld [vmem:[#allocation6 + $0x3c] sm:$0xf]
        %v3691 = vld [vmem:[#allocation6 + $0x40] sm:$0xf]
        %v3692 = vld [vmem:[#allocation6 + $0x44] sm:$0xf]
        %v3693 = vld [vmem:[#allocation6 + $0x48] sm:$0xf]
        %v3694 = vld [vmem:[#allocation6 + $0x4c] sm:$0xf]
        %v3695 = vld [vmem:[#allocation6 + $0x50] sm:$0xf]
        %v3696 = vld [vmem:[#allocation6 + $0x54] sm:$0xf]
        %v3697 = vld [vmem:[#allocation6 + $0x58] sm:$0xf]
        %v3698 = vld [vmem:[#allocation6 + $0x5c] sm:$0xf]
        %v3699 = vld [vmem:[#allocation6 + $0x60] sm:$0xf]
        %v3700 = vld [vmem:[#allocation6 + $0x64] sm:$0xf]
        %v3701 = vld [vmem:[#allocation6 + $0x68] sm:$0xf]
        %v3702 = vld [vmem:[#allocation6 + $0x6c] sm:$0xf]
        %v3703 = vld [vmem:[#allocation6 + $0x70] sm:$0xf]
        %v3704 = vld [vmem:[#allocation6 + $0x74] sm:$0xf]
        %v3705 = vld [vmem:[#allocation6 + $0x78] sm:$0xf]
        %v3706 = vld [vmem:[#allocation6 + $0x7c] sm:$0xf]
        %v3707 = vld [vmem:[#allocation6 + $0x80] sm:$0xf]
        %v3708 = vld [vmem:[#allocation6 + $0x84] sm:$0xf]
        %v3709 = vld [vmem:[#allocation6 + $0x88] sm:$0xf]
        %v3710 = vld [vmem:[#allocation6 + $0x8c] sm:$0xf]
        %v3711 = vld [vmem:[#allocation6 + $0x90] sm:$0xf]
        %v3712 = vld [vmem:[#allocation6 + $0x94] sm:$0xf]
        %v3713 = vld [vmem:[#allocation6 + $0x98] sm:$0xf]
        %v3714 = vld [vmem:[#allocation6 + $0x9c] sm:$0xf]
        %v3715 = vld [vmem:[#allocation6 + $0xa0] sm:$0xf]
        %v3716 = vld [vmem:[#allocation6 + $0xa4] sm:$0xf]
        %v3717 = vld [vmem:[#allocation6 + $0xa8] sm:$0xf]
        %v3718 = vld [vmem:[#allocation6 + $0xac] sm:$0xf]
        %v3719 = vld [vmem:[#allocation6 + $0xb0] sm:$0xf]
        %v3720 = vld [vmem:[#allocation6 + $0xb4] sm:$0xf]
        %v3721 = vld [vmem:[#allocation6 + $0xb8] sm:$0xf]
        %v3722 = vld [vmem:[#allocation6 + $0xbc] sm:$0xf]
        %s3723 = scalar_lea.vmem [#allocation2], 216
        %v3724 = vld [vmem:[%s3723] sm:$0xff]
        %v3725 = vld [vmem:[%s3723 + $0x8] sm:$0xf]
        %v3726 = vld [vmem:[%s3723 + $0xc] sm:$0xff]
        %v3727 = vld [vmem:[%s3723 + $0x14] sm:$0xf]
        %v3728 = vld [vmem:[%s3723 + $0x18] sm:$0xff]
        %v3729 = vld [vmem:[%s3723 + $0x20] sm:$0xf]
        %v3730 = vld [vmem:[%s3723 + $0x24] sm:$0xff]
        %v3731 = vld [vmem:[%s3723 + $0x2c] sm:$0xf]
        %v3732 = vld [vmem:[%s3723 + $0x30] sm:$0xff]
        %v3733 = vld [vmem:[%s3723 + $0x38] sm:$0xf]
        %v3734 = vld [vmem:[%s3723 + $0x3c] sm:$0xff]
        %v3735 = vld [vmem:[%s3723 + $0x44] sm:$0xf]
        %v3736 = vld [vmem:[%s3723 + $0x48] sm:$0xff]
        %v3737 = vld [vmem:[%s3723 + $0x50] sm:$0xf]
        %v3738 = vld [vmem:[%s3723 + $0x54] sm:$0xff]
        %v3739 = vld [vmem:[%s3723 + $0x5c] sm:$0xf]
        %v3740 = vld [vmem:[%s1249] sm:$0xf]
        %v3741 = vld [vmem:[%s1249 + $0x4] sm:$0xf]
        %v3742 = vld [vmem:[%s1249 + $0x8] sm:$0xf]
        %v3743 = vld [vmem:[%s1249 + $0xc] sm:$0xf]
        %v3744 = vld [vmem:[%s1249 + $0x10] sm:$0xf]
        %v3745 = vld [vmem:[%s1249 + $0x14] sm:$0xf]
        %v3746 = vld [vmem:[%s1249 + $0x18] sm:$0xf]
        %v3747 = vld [vmem:[%s1249 + $0x1c] sm:$0xf]
        %v3748 = vld [vmem:[%s1249 + $0x20] sm:$0xf]
        %v3749 = vld [vmem:[%s1249 + $0x24] sm:$0xf]
        %v3750 = vld [vmem:[%s1249 + $0x28] sm:$0xf]
        %v3751 = vld [vmem:[%s1249 + $0x2c] sm:$0xf]
        %v3752 = vld [vmem:[%s1249 + $0x30] sm:$0xf]
        %v3753 = vld [vmem:[%s1249 + $0x34] sm:$0xf]
        %v3754 = vld [vmem:[%s1249 + $0x38] sm:$0xf]
        %v3755 = vld [vmem:[%s1249 + $0x3c] sm:$0xf]
        %v3756 = vld [vmem:[%s1249 + $0x40] sm:$0xf]
        %v3757 = vld [vmem:[%s1249 + $0x44] sm:$0xf]
        %v3758 = vld [vmem:[%s1249 + $0x48] sm:$0xf]
        %v3759 = vld [vmem:[%s1249 + $0x4c] sm:$0xf]
        %v3760 = vld [vmem:[%s1249 + $0x50] sm:$0xf]
        %v3761 = vld [vmem:[%s1249 + $0x54] sm:$0xf]
        %v3762 = vld [vmem:[%s1249 + $0x58] sm:$0xf]
        %v3763 = vld [vmem:[%s1249 + $0x5c] sm:$0xf]
        %v3764 = vld [vmem:[%s1249 + $0x60] sm:$0xf]
        %v3765 = vld [vmem:[%s1249 + $0x64] sm:$0xf]
        %v3766 = vld [vmem:[%s1249 + $0x68] sm:$0xf]
        %v3767 = vld [vmem:[%s1249 + $0x6c] sm:$0xf]
        %v3768 = vld [vmem:[%s1249 + $0x70] sm:$0xf]
        %v3769 = vld [vmem:[%s1249 + $0x74] sm:$0xf]
        %v3770 = vld [vmem:[%s1249 + $0x78] sm:$0xf]
        %v3771 = vld [vmem:[%s1249 + $0x7c] sm:$0xf]
        %v3772 = vld [vmem:[%s1249 + $0x80] sm:$0xf]
        %v3773 = vld [vmem:[%s1249 + $0x84] sm:$0xf]
        %v3774 = vld [vmem:[%s1249 + $0x88] sm:$0xf]
        %v3775 = vld [vmem:[%s1249 + $0x8c] sm:$0xf]
        %v3776 = vld [vmem:[%s1249 + $0x90] sm:$0xf]
        %v3777 = vld [vmem:[%s1249 + $0x94] sm:$0xf]
        %v3778 = vld [vmem:[%s1249 + $0x98] sm:$0xf]
        %v3779 = vld [vmem:[%s1249 + $0x9c] sm:$0xf]
        %v3780 = vld [vmem:[%s1249 + $0xa0] sm:$0xf]
        %v3781 = vld [vmem:[%s1249 + $0xa4] sm:$0xf]
        %v3782 = vld [vmem:[%s1249 + $0xa8] sm:$0xf]
        %v3783 = vld [vmem:[%s1249 + $0xac] sm:$0xf]
        %v3784 = vld [vmem:[%s1249 + $0xb0] sm:$0xf]
        %v3785 = vld [vmem:[%s1249 + $0xb4] sm:$0xf]
        %v3786 = vld [vmem:[%s1249 + $0xb8] sm:$0xf]
        %v3787 = vld [vmem:[%s1249 + $0xbc] sm:$0xf]
        %v3804 = vunpack.c.l.b16 %v3724
        %v3805 = vunpack.c.h.b16 %v3724
        %v3806 = vunpack.c.l.b16 %v3725
        %v3807 = vunpack.c.l.b16 %v3726
        %v3808 = vunpack.c.h.b16 %v3726
        %v3809 = vunpack.c.l.b16 %v3727
        %v3810 = vunpack.c.l.b16 %v3728
        %v3811 = vunpack.c.h.b16 %v3728
        %v3812 = vunpack.c.l.b16 %v3729
        %v3813 = vunpack.c.l.b16 %v3730
        %v3814 = vunpack.c.h.b16 %v3730
        %v3815 = vunpack.c.l.b16 %v3731
        %v3816 = vunpack.c.l.b16 %v3732
        %v3817 = vunpack.c.h.b16 %v3732
        %v3818 = vunpack.c.l.b16 %v3733
        %v3819 = vunpack.c.l.b16 %v3734
        %v3820 = vunpack.c.h.b16 %v3734
        %v3821 = vunpack.c.l.b16 %v3735
        %v3822 = vunpack.c.l.b16 %v3736
        %v3823 = vunpack.c.h.b16 %v3736
        %v3824 = vunpack.c.l.b16 %v3737
        %v3825 = vunpack.c.l.b16 %v3738
        %v3826 = vunpack.c.h.b16 %v3738
        %v3827 = vunpack.c.l.b16 %v3739
        %v3828 = vpack.c.b16 %v3807, %v3804
        %v3829 = vpack.c.b16 %v3808, %v3805
        %v3830 = vpack.c.b16 %v3809, %v3806
        %v3831 = vpack.c.b16 %v3813, %v3810
        %v3832 = vpack.c.b16 %v3814, %v3811
        %v3833 = vpack.c.b16 %v3815, %v3812
        %v3834 = vpack.c.b16 %v3819, %v3816
        %v3835 = vpack.c.b16 %v3820, %v3817
        %v3836 = vpack.c.b16 %v3821, %v3818
        %v3837 = vpack.c.b16 %v3825, %v3822
        %v3838 = vpack.c.b16 %v3826, %v3823
        %v3839 = vpack.c.b16 %v3827, %v3824
        %v3900 = vunpack.c.l.b16 %v3740
        %v3901 = vunpack.c.l.b16 %v3741
        %v3902 = vunpack.c.l.b16 %v3742
        %v3903 = vunpack.c.l.b16 %v3743
        %v3904 = vunpack.c.l.b16 %v3744
        %v3905 = vunpack.c.l.b16 %v3745
        %v3906 = vunpack.c.l.b16 %v3746
        %v3907 = vunpack.c.l.b16 %v3747
        %v3908 = vunpack.c.l.b16 %v3748
        %v3909 = vunpack.c.l.b16 %v3749
        %v3910 = vunpack.c.l.b16 %v3750
        %v3911 = vunpack.c.l.b16 %v3751
        %v3912 = vunpack.c.l.b16 %v3752
        %v3913 = vunpack.c.l.b16 %v3753
        %v3914 = vunpack.c.l.b16 %v3754
        %v3915 = vunpack.c.l.b16 %v3755
        %v3916 = vunpack.c.l.b16 %v3756
        %v3917 = vunpack.c.l.b16 %v3757
        %v3918 = vunpack.c.l.b16 %v3758
        %v3919 = vunpack.c.l.b16 %v3759
        %v3920 = vunpack.c.l.b16 %v3760
        %v3921 = vunpack.c.l.b16 %v3761
        %v3922 = vunpack.c.l.b16 %v3762
        %v3923 = vunpack.c.l.b16 %v3763
        %v3924 = vunpack.c.l.b16 %v3764
        %v3925 = vunpack.c.l.b16 %v3765
        %v3926 = vunpack.c.l.b16 %v3766
        %v3927 = vunpack.c.l.b16 %v3767
        %v3928 = vunpack.c.l.b16 %v3768
        %v3929 = vunpack.c.l.b16 %v3769
        %v3930 = vunpack.c.l.b16 %v3770
        %v3931 = vunpack.c.l.b16 %v3771
        %v3932 = vunpack.c.l.b16 %v3772
        %v3933 = vunpack.c.l.b16 %v3773
        %v3934 = vunpack.c.l.b16 %v3774
        %v3935 = vunpack.c.l.b16 %v3775
        %v3936 = vunpack.c.l.b16 %v3776
        %v3937 = vunpack.c.l.b16 %v3777
        %v3938 = vunpack.c.l.b16 %v3778
        %v3939 = vunpack.c.l.b16 %v3779
        %v3940 = vunpack.c.l.b16 %v3780
        %v3941 = vunpack.c.l.b16 %v3781
        %v3942 = vunpack.c.l.b16 %v3782
        %v3943 = vunpack.c.l.b16 %v3783
        %v3944 = vunpack.c.l.b16 %v3784
        %v3945 = vunpack.c.l.b16 %v3785
        %v3946 = vunpack.c.l.b16 %v3786
        %v3947 = vunpack.c.l.b16 %v3787
        %v3948 = vpack.c.b16 %v3901, %v3900
        %v3949 = vpack.c.b16 %v3903, %v3902
        %v3950 = vpack.c.b16 %v3905, %v3904
        %v3951 = vpack.c.b16 %v3907, %v3906
        %v3952 = vpack.c.b16 %v3909, %v3908
        %v3953 = vpack.c.b16 %v3911, %v3910
        %v3954 = vpack.c.b16 %v3913, %v3912
        %v3955 = vpack.c.b16 %v3915, %v3914
        %v3956 = vpack.c.b16 %v3917, %v3916
        %v3957 = vpack.c.b16 %v3919, %v3918
        %v3958 = vpack.c.b16 %v3921, %v3920
        %v3959 = vpack.c.b16 %v3923, %v3922
        %v3960 = vpack.c.b16 %v3925, %v3924
        %v3961 = vpack.c.b16 %v3927, %v3926
        %v3962 = vpack.c.b16 %v3929, %v3928
        %v3963 = vpack.c.b16 %v3931, %v3930
        %v3964 = vpack.c.b16 %v3933, %v3932
        %v3965 = vpack.c.b16 %v3935, %v3934
        %v3966 = vpack.c.b16 %v3937, %v3936
        %v3967 = vpack.c.b16 %v3939, %v3938
        %v3968 = vpack.c.b16 %v3941, %v3940
        %v3969 = vpack.c.b16 %v3943, %v3942
        %v3970 = vpack.c.b16 %v3945, %v3944
        %v3971 = vpack.c.b16 %v3947, %v3946
        %3996 = vmatprep.subr.bf16.mxu0 0
        %3997 = vmatpush1.bf16.msra.mxu0 %v3955
        %3998 = vmatprep.subr.bf16.mxu0 0
        %3999 = vmatpush1.bf16.msra.mxu0 %v3954
        %4000 = vmatprep.subr.bf16.mxu0 0
        %4001 = vmatpush1.bf16.msra.mxu0 %v3953
        %4002 = vmatprep.subr.bf16.mxu0 0
        %4003 = vmatpush1.bf16.msra.mxu0 %v3952
        %4004 = vmatprep.subr.bf16.mxu0 0
        %4005 = vmatpush1.bf16.msra.mxu0 %v3951
        %4006 = vmatprep.subr.bf16.mxu0 0
        %4007 = vmatpush1.bf16.msra.mxu0 %v3950
        %4008 = vmatprep.subr.bf16.mxu0 0
        %4009 = vmatpush1.bf16.msra.mxu0 %v3949
        %4010 = vmatprep.subr.bf16.mxu0 0
        %4011 = vmatpush1.bf16.msra.mxu0 %v3948
        %4012 = vmatprep.subr.bf16.mxu0 0
        %4013 = vmatpush2.bf16.msra.mxu0 %v3963
        %4014 = vmatprep.subr.bf16.mxu0 0
        %4015 = vmatpush2.bf16.msra.mxu0 %v3962
        %4016 = vmatprep.subr.bf16.mxu0 0
        %4017 = vmatpush2.bf16.msra.mxu0 %v3961
        %4018 = vmatprep.subr.bf16.mxu0 0
        %4019 = vmatpush2.bf16.msra.mxu0 %v3960
        %4020 = vmatprep.subr.bf16.mxu0 0
        %4021 = vmatpush2.bf16.msra.mxu0 %v3959
        %4022 = vmatprep.subr.bf16.mxu0 0
        %4023 = vmatpush2.bf16.msra.mxu0 %v3958
        %4024 = vmatprep.subr.bf16.mxu0 0
        %4025 = vmatpush2.bf16.msra.mxu0 %v3957
        %4026 = vmatprep.subr.bf16.mxu0 0
        %4027 = vmatpush2.bf16.msra.mxu0 %v3956
        %4028 = vmatprep.mubr.bf16.mxu0 %v3829
        %4029 = vmatmul.mubr.bf16.gmra.mxu0 %v3828
        %v4030 = vpop.f32.mrf.mxu0
        %v4031 = vadd.f32 0.0, %v4030
        %v4032 = vpop.f32.mrf.mxu0
        %v4033 = vpop.f32.mrf.mxu0
        %v4034 = vadd.f32 0.0, %v4033
        %v4035 = vpop.f32.mrf.mxu0
        %4036 = vmatprep.mubr.bf16.mxu0 %v3832
        %4037 = vmatmul.mubr.bf16.gmra.mxu0 %v3831
        %v4038 = vpop.f32.mrf.mxu0
        %v4039 = vadd.f32 0.0, %v4038
        %v4040 = vpop.f32.mrf.mxu0
        %v4041 = vpop.f32.mrf.mxu0
        %v4042 = vadd.f32 0.0, %v4041
        %v4043 = vpop.f32.mrf.mxu0
        %4044 = vmatprep.mubr.bf16.mxu0 %v3835
        %4045 = vmatmul.mubr.bf16.gmra.mxu0 %v3834
        %v4046 = vpop.f32.mrf.mxu0
        %v4047 = vadd.f32 0.0, %v4046
        %v4048 = vpop.f32.mrf.mxu0
        %v4049 = vpop.f32.mrf.mxu0
        %v4050 = vadd.f32 0.0, %v4049
        %v4051 = vpop.f32.mrf.mxu0
        %4052 = vmatprep.mubr.bf16.mxu0 %v3838
        %4053 = vmatmul.mubr.bf16.gmra.mxu0 %v3837
        %v4054 = vpop.f32.mrf.mxu0
        %v4055 = vadd.f32 0.0, %v4054
        %v4056 = vpop.f32.mrf.mxu0
        %v4057 = vpop.f32.mrf.mxu0
        %v4058 = vadd.f32 0.0, %v4057
        %v4059 = vpop.f32.mrf.mxu0
        %4060 = vdwg.mxu0
        %4061 = vmatprep.subr.bf16.mxu0 0
        %4062 = vmatpush1.bf16.msra.mxu0 %v3971
        %4063 = vmatprep.subr.bf16.mxu0 0
        %4064 = vmatpush1.bf16.msra.mxu0 %v3970
        %4065 = vmatprep.subr.bf16.mxu0 0
        %4066 = vmatpush1.bf16.msra.mxu0 %v3969
        %4067 = vmatprep.subr.bf16.mxu0 0
        %4068 = vmatpush1.bf16.msra.mxu0 %v3968
        %4069 = vmatprep.subr.bf16.mxu0 0
        %4070 = vmatpush1.bf16.msra.mxu0 %v3967
        %4071 = vmatprep.subr.bf16.mxu0 0
        %4072 = vmatpush1.bf16.msra.mxu0 %v3966
        %4073 = vmatprep.subr.bf16.mxu0 0
        %4074 = vmatpush1.bf16.msra.mxu0 %v3965
        %4075 = vmatprep.subr.bf16.mxu0 0
        %4076 = vmatpush1.bf16.msra.mxu0 %v3964
        %4077 = vmatprep.subr.bf16.mxu0 0
        %4078 = vmatpush2.bf16.msra.mxu0 0
        %4079 = vmatprep.subr.bf16.mxu0 0
        %4080 = vmatpush2.bf16.msra.mxu0 0
        %4081 = vmatprep.subr.bf16.mxu0 0
        %4082 = vmatpush2.bf16.msra.mxu0 0
        %4083 = vmatprep.subr.bf16.mxu0 0
        %4084 = vmatpush2.bf16.msra.mxu0 0
        %4085 = vmatprep.subr.bf16.mxu0 0
        %4086 = vmatpush2.bf16.msra.mxu0 0
        %4087 = vmatprep.subr.bf16.mxu0 0
        %4088 = vmatpush2.bf16.msra.mxu0 0
        %4089 = vmatprep.subr.bf16.mxu0 0
        %4090 = vmatpush2.bf16.msra.mxu0 0
        %4091 = vmatprep.subr.bf16.mxu0 0
        %4092 = vmatpush2.bf16.msra.mxu0 0
        %4093 = vmatprep.mubr.bf16.mxu0 0
        %4094 = vmatmul.mubr.bf16.gmra.mxu0 %v3830
        %v4095 = vpop.f32.mrf.mxu0
        %v4096 = vadd.f32 %v4031, %v4095
        %v4097 = vpop.f32.mrf.mxu0
        %v4098 = vpop.f32.mrf.mxu0
        %v4099 = vadd.f32 %v4034, %v4098
        %v4100 = vpop.f32.mrf.mxu0
        %4101 = vmatprep.mubr.bf16.mxu0 0
        %4102 = vmatmul.mubr.bf16.gmra.mxu0 %v3833
        %v4103 = vpop.f32.mrf.mxu0
        %v4104 = vadd.f32 %v4039, %v4103
        %v4105 = vpop.f32.mrf.mxu0
        %v4106 = vpop.f32.mrf.mxu0
        %v4107 = vadd.f32 %v4042, %v4106
        %v4108 = vpop.f32.mrf.mxu0
        %4109 = vmatprep.mubr.bf16.mxu0 0
        %4110 = vmatmul.mubr.bf16.gmra.mxu0 %v3836
        %v4111 = vpop.f32.mrf.mxu0
        %v4112 = vadd.f32 %v4047, %v4111
        %v4113 = vpop.f32.mrf.mxu0
        %v4114 = vpop.f32.mrf.mxu0
        %v4115 = vadd.f32 %v4050, %v4114
        %v4116 = vpop.f32.mrf.mxu0
        %4117 = vmatprep.mubr.bf16.mxu0 0
        %4118 = vmatmul.mubr.bf16.gmra.mxu0 %v3839
        %v4119 = vpop.f32.mrf.mxu0
        %v4120 = vadd.f32 %v4055, %v4119
        %v4121 = vpop.f32.mrf.mxu0
        %v4122 = vpop.f32.mrf.mxu0
        %v4123 = vadd.f32 %v4058, %v4122
        %v4124 = vpop.f32.mrf.mxu0
        %4125 = vdwg.mxu0
        %v4142 = vunpack.c.l.b16 %v3659
        %v4143 = vunpack.c.h.b16 %v3659
        %v4144 = vunpack.c.l.b16 %v3660
        %v4145 = vunpack.c.l.b16 %v3661
        %v4146 = vunpack.c.h.b16 %v3661
        %v4147 = vunpack.c.l.b16 %v3662
        %v4148 = vunpack.c.l.b16 %v3663
        %v4149 = vunpack.c.h.b16 %v3663
        %v4150 = vunpack.c.l.b16 %v3664
        %v4151 = vunpack.c.l.b16 %v3665
        %v4152 = vunpack.c.h.b16 %v3665
        %v4153 = vunpack.c.l.b16 %v3666
        %v4154 = vunpack.c.l.b16 %v3667
        %v4155 = vunpack.c.h.b16 %v3667
        %v4156 = vunpack.c.l.b16 %v3668
        %v4157 = vunpack.c.l.b16 %v3669
        %v4158 = vunpack.c.h.b16 %v3669
        %v4159 = vunpack.c.l.b16 %v3670
        %v4160 = vunpack.c.l.b16 %v3671
        %v4161 = vunpack.c.h.b16 %v3671
        %v4162 = vunpack.c.l.b16 %v3672
        %v4163 = vunpack.c.l.b16 %v3673
        %v4164 = vunpack.c.h.b16 %v3673
        %v4165 = vunpack.c.l.b16 %v3674
        %v4166 = vpack.c.b16 %v4145, %v4142
        %v4167 = vpack.c.b16 %v4146, %v4143
        %v4168 = vpack.c.b16 %v4147, %v4144
        %v4169 = vpack.c.b16 %v4151, %v4148
        %v4170 = vpack.c.b16 %v4152, %v4149
        %v4171 = vpack.c.b16 %v4153, %v4150
        %v4172 = vpack.c.b16 %v4157, %v4154
        %v4173 = vpack.c.b16 %v4158, %v4155
        %v4174 = vpack.c.b16 %v4159, %v4156
        %v4175 = vpack.c.b16 %v4163, %v4160
        %v4176 = vpack.c.b16 %v4164, %v4161
        %v4177 = vpack.c.b16 %v4165, %v4162
        %v4238 = vunpack.c.l.b16 %v3675
        %v4239 = vunpack.c.l.b16 %v3676
        %v4240 = vunpack.c.l.b16 %v3677
        %v4241 = vunpack.c.l.b16 %v3678
        %v4242 = vunpack.c.l.b16 %v3679
        %v4243 = vunpack.c.l.b16 %v3680
        %v4244 = vunpack.c.l.b16 %v3681
        %v4245 = vunpack.c.l.b16 %v3682
        %v4246 = vunpack.c.l.b16 %v3683
        %v4247 = vunpack.c.l.b16 %v3684
        %v4248 = vunpack.c.l.b16 %v3685
        %v4249 = vunpack.c.l.b16 %v3686
        %v4250 = vunpack.c.l.b16 %v3687
        %v4251 = vunpack.c.l.b16 %v3688
        %v4252 = vunpack.c.l.b16 %v3689
        %v4253 = vunpack.c.l.b16 %v3690
        %v4254 = vunpack.c.l.b16 %v3691
        %v4255 = vunpack.c.l.b16 %v3692
        %v4256 = vunpack.c.l.b16 %v3693
        %v4257 = vunpack.c.l.b16 %v3694
        %v4258 = vunpack.c.l.b16 %v3695
        %v4259 = vunpack.c.l.b16 %v3696
        %v4260 = vunpack.c.l.b16 %v3697
        %v4261 = vunpack.c.l.b16 %v3698
        %v4262 = vunpack.c.l.b16 %v3699
        %v4263 = vunpack.c.l.b16 %v3700
        %v4264 = vunpack.c.l.b16 %v3701
        %v4265 = vunpack.c.l.b16 %v3702
        %v4266 = vunpack.c.l.b16 %v3703
        %v4267 = vunpack.c.l.b16 %v3704
        %v4268 = vunpack.c.l.b16 %v3705
        %v4269 = vunpack.c.l.b16 %v3706
        %v4270 = vunpack.c.l.b16 %v3707
        %v4271 = vunpack.c.l.b16 %v3708
        %v4272 = vunpack.c.l.b16 %v3709
        %v4273 = vunpack.c.l.b16 %v3710
        %v4274 = vunpack.c.l.b16 %v3711
        %v4275 = vunpack.c.l.b16 %v3712
        %v4276 = vunpack.c.l.b16 %v3713
        %v4277 = vunpack.c.l.b16 %v3714
        %v4278 = vunpack.c.l.b16 %v3715
        %v4279 = vunpack.c.l.b16 %v3716
        %v4280 = vunpack.c.l.b16 %v3717
        %v4281 = vunpack.c.l.b16 %v3718
        %v4282 = vunpack.c.l.b16 %v3719
        %v4283 = vunpack.c.l.b16 %v3720
        %v4284 = vunpack.c.l.b16 %v3721
        %v4285 = vunpack.c.l.b16 %v3722
        %v4286 = vpack.c.b16 %v4239, %v4238
        %v4287 = vpack.c.b16 %v4241, %v4240
        %v4288 = vpack.c.b16 %v4243, %v4242
        %v4289 = vpack.c.b16 %v4245, %v4244
        %v4290 = vpack.c.b16 %v4247, %v4246
        %v4291 = vpack.c.b16 %v4249, %v4248
        %v4292 = vpack.c.b16 %v4251, %v4250
        %v4293 = vpack.c.b16 %v4253, %v4252
        %v4294 = vpack.c.b16 %v4255, %v4254
        %v4295 = vpack.c.b16 %v4257, %v4256
        %v4296 = vpack.c.b16 %v4259, %v4258
        %v4297 = vpack.c.b16 %v4261, %v4260
        %v4298 = vpack.c.b16 %v4263, %v4262
        %v4299 = vpack.c.b16 %v4265, %v4264
        %v4300 = vpack.c.b16 %v4267, %v4266
        %v4301 = vpack.c.b16 %v4269, %v4268
        %v4302 = vpack.c.b16 %v4271, %v4270
        %v4303 = vpack.c.b16 %v4273, %v4272
        %v4304 = vpack.c.b16 %v4275, %v4274
        %v4305 = vpack.c.b16 %v4277, %v4276
        %v4306 = vpack.c.b16 %v4279, %v4278
        %v4307 = vpack.c.b16 %v4281, %v4280
        %v4308 = vpack.c.b16 %v4283, %v4282
        %v4309 = vpack.c.b16 %v4285, %v4284
        %4334 = vmatprep.subr.bf16.mxu0 0
        %4335 = vmatpush1.bf16.msra.mxu0 %v4293
        %4336 = vmatprep.subr.bf16.mxu0 0
        %4337 = vmatpush1.bf16.msra.mxu0 %v4292
        %4338 = vmatprep.subr.bf16.mxu0 0
        %4339 = vmatpush1.bf16.msra.mxu0 %v4291
        %4340 = vmatprep.subr.bf16.mxu0 0
        %4341 = vmatpush1.bf16.msra.mxu0 %v4290
        %4342 = vmatprep.subr.bf16.mxu0 0
        %4343 = vmatpush1.bf16.msra.mxu0 %v4289
        %4344 = vmatprep.subr.bf16.mxu0 0
        %4345 = vmatpush1.bf16.msra.mxu0 %v4288
        %4346 = vmatprep.subr.bf16.mxu0 0
        %4347 = vmatpush1.bf16.msra.mxu0 %v4287
        %4348 = vmatprep.subr.bf16.mxu0 0
        %4349 = vmatpush1.bf16.msra.mxu0 %v4286
        %4350 = vmatprep.subr.bf16.mxu0 0
        %4351 = vmatpush2.bf16.msra.mxu0 %v4301
        %4352 = vmatprep.subr.bf16.mxu0 0
        %4353 = vmatpush2.bf16.msra.mxu0 %v4300
        %4354 = vmatprep.subr.bf16.mxu0 0
        %4355 = vmatpush2.bf16.msra.mxu0 %v4299
        %4356 = vmatprep.subr.bf16.mxu0 0
        %4357 = vmatpush2.bf16.msra.mxu0 %v4298
        %4358 = vmatprep.subr.bf16.mxu0 0
        %4359 = vmatpush2.bf16.msra.mxu0 %v4297
        %4360 = vmatprep.subr.bf16.mxu0 0
        %4361 = vmatpush2.bf16.msra.mxu0 %v4296
        %4362 = vmatprep.subr.bf16.mxu0 0
        %4363 = vmatpush2.bf16.msra.mxu0 %v4295
        %4364 = vmatprep.subr.bf16.mxu0 0
        %4365 = vmatpush2.bf16.msra.mxu0 %v4294
        %4366 = vmatprep.mubr.bf16.mxu0 %v4167
        %4367 = vmatmul.mubr.bf16.gmra.mxu0 %v4166
        %v4368 = vpop.f32.mrf.mxu0
        %v4369 = vadd.f32 %v4096, %v4368
        %v4370 = vpop.f32.mrf.mxu0
        %v4371 = vpop.f32.mrf.mxu0
        %v4372 = vadd.f32 %v4099, %v4371
        %v4373 = vpop.f32.mrf.mxu0
        %4374 = vmatprep.mubr.bf16.mxu0 %v4170
        %4375 = vmatmul.mubr.bf16.gmra.mxu0 %v4169
        %v4376 = vpop.f32.mrf.mxu0
        %v4377 = vadd.f32 %v4104, %v4376
        %v4378 = vpop.f32.mrf.mxu0
        %v4379 = vpop.f32.mrf.mxu0
        %v4380 = vadd.f32 %v4107, %v4379
        %v4381 = vpop.f32.mrf.mxu0
        %4382 = vmatprep.mubr.bf16.mxu0 %v4173
        %4383 = vmatmul.mubr.bf16.gmra.mxu0 %v4172
        %v4384 = vpop.f32.mrf.mxu0
        %v4385 = vadd.f32 %v4112, %v4384
        %v4386 = vpop.f32.mrf.mxu0
        %v4387 = vpop.f32.mrf.mxu0
        %v4388 = vadd.f32 %v4115, %v4387
        %v4389 = vpop.f32.mrf.mxu0
        %4390 = vmatprep.mubr.bf16.mxu0 %v4176
        %4391 = vmatmul.mubr.bf16.gmra.mxu0 %v4175
        %v4392 = vpop.f32.mrf.mxu0
        %v4393 = vadd.f32 %v4120, %v4392
        %v4394 = vpop.f32.mrf.mxu0
        %v4395 = vpop.f32.mrf.mxu0
        %v4396 = vadd.f32 %v4123, %v4395
        %v4397 = vpop.f32.mrf.mxu0
        %4398 = vdwg.mxu0
        %4399 = vmatprep.subr.bf16.mxu0 0
        %4400 = vmatpush1.bf16.msra.mxu0 %v4309
        %4401 = vmatprep.subr.bf16.mxu0 0
        %4402 = vmatpush1.bf16.msra.mxu0 %v4308
        %4403 = vmatprep.subr.bf16.mxu0 0
        %4404 = vmatpush1.bf16.msra.mxu0 %v4307
        %4405 = vmatprep.subr.bf16.mxu0 0
        %4406 = vmatpush1.bf16.msra.mxu0 %v4306
        %4407 = vmatprep.subr.bf16.mxu0 0
        %4408 = vmatpush1.bf16.msra.mxu0 %v4305
        %4409 = vmatprep.subr.bf16.mxu0 0
        %4410 = vmatpush1.bf16.msra.mxu0 %v4304
        %4411 = vmatprep.subr.bf16.mxu0 0
        %4412 = vmatpush1.bf16.msra.mxu0 %v4303
        %4413 = vmatprep.subr.bf16.mxu0 0
        %4414 = vmatpush1.bf16.msra.mxu0 %v4302
        %4415 = vmatprep.subr.bf16.mxu0 0
        %4416 = vmatpush2.bf16.msra.mxu0 0
        %4417 = vmatprep.subr.bf16.mxu0 0
        %4418 = vmatpush2.bf16.msra.mxu0 0
        %4419 = vmatprep.subr.bf16.mxu0 0
        %4420 = vmatpush2.bf16.msra.mxu0 0
        %4421 = vmatprep.subr.bf16.mxu0 0
        %4422 = vmatpush2.bf16.msra.mxu0 0
        %4423 = vmatprep.subr.bf16.mxu0 0
        %4424 = vmatpush2.bf16.msra.mxu0 0
        %4425 = vmatprep.subr.bf16.mxu0 0
        %4426 = vmatpush2.bf16.msra.mxu0 0
        %4427 = vmatprep.subr.bf16.mxu0 0
        %4428 = vmatpush2.bf16.msra.mxu0 0
        %4429 = vmatprep.subr.bf16.mxu0 0
        %4430 = vmatpush2.bf16.msra.mxu0 0
        %4431 = vmatprep.mubr.bf16.mxu0 0
        %4432 = vmatmul.mubr.bf16.gmra.mxu0 %v4168
        %v4433 = vpop.f32.mrf.mxu0
        %v4434 = vadd.f32 %v4369, %v4433
        %v4435 = vpop.f32.mrf.mxu0
        %v4436 = vpop.f32.mrf.mxu0
        %v4437 = vadd.f32 %v4372, %v4436
        %v4438 = vpop.f32.mrf.mxu0
        %4439 = vmatprep.mubr.bf16.mxu0 0
        %4440 = vmatmul.mubr.bf16.gmra.mxu0 %v4171
        %v4441 = vpop.f32.mrf.mxu0
        %v4442 = vadd.f32 %v4377, %v4441
        %v4443 = vpop.f32.mrf.mxu0
        %v4444 = vpop.f32.mrf.mxu0
        %v4445 = vadd.f32 %v4380, %v4444
        %v4446 = vpop.f32.mrf.mxu0
        %4447 = vmatprep.mubr.bf16.mxu0 0
        %4448 = vmatmul.mubr.bf16.gmra.mxu0 %v4174
        %v4449 = vpop.f32.mrf.mxu0
        %v4450 = vadd.f32 %v4385, %v4449
        %v4451 = vpop.f32.mrf.mxu0
        %v4452 = vpop.f32.mrf.mxu0
        %v4453 = vadd.f32 %v4388, %v4452
        %v4454 = vpop.f32.mrf.mxu0
        %4455 = vmatprep.mubr.bf16.mxu0 0
        %4456 = vmatmul.mubr.bf16.gmra.mxu0 %v4177
        %v4457 = vpop.f32.mrf.mxu0
        %v4458 = vadd.f32 %v4393, %v4457
        %v4459 = vpop.f32.mrf.mxu0
        %v4460 = vpop.f32.mrf.mxu0
        %v4461 = vadd.f32 %v4396, %v4460
        %v4462 = vpop.f32.mrf.mxu0
        %4463 = vdwg.mxu0
        %s4464 = scalar_lea.vmem [#allocation2], 240
        %v4465 = vld [vmem:[%s4464] sm:$0xff]
        %v4466 = vld [vmem:[%s4464 + $0x8] sm:$0xf]
        %v4467 = vld [vmem:[%s4464 + $0xc] sm:$0xff]
        %v4468 = vld [vmem:[%s4464 + $0x14] sm:$0xf]
        %v4469 = vld [vmem:[%s4464 + $0x18] sm:$0xff]
        %v4470 = vld [vmem:[%s4464 + $0x20] sm:$0xf]
        %v4471 = vld [vmem:[%s4464 + $0x24] sm:$0xff]
        %v4472 = vld [vmem:[%s4464 + $0x2c] sm:$0xf]
        %v4473 = vld [vmem:[%s4464 + $0x30] sm:$0xff]
        %v4474 = vld [vmem:[%s4464 + $0x38] sm:$0xf]
        %v4475 = vld [vmem:[%s4464 + $0x3c] sm:$0xff]
        %v4476 = vld [vmem:[%s4464 + $0x44] sm:$0xf]
        %v4477 = vld [vmem:[%s4464 + $0x48] sm:$0xff]
        %v4478 = vld [vmem:[%s4464 + $0x50] sm:$0xf]
        %v4479 = vld [vmem:[%s4464 + $0x54] sm:$0xff]
        %v4480 = vld [vmem:[%s4464 + $0x5c] sm:$0xf]
        %v4481 = vld [vmem:[%s1991] sm:$0xf]
        %v4482 = vld [vmem:[%s1991 + $0x4] sm:$0xf]
        %v4483 = vld [vmem:[%s1991 + $0x8] sm:$0xf]
        %v4484 = vld [vmem:[%s1991 + $0xc] sm:$0xf]
        %v4485 = vld [vmem:[%s1991 + $0x10] sm:$0xf]
        %v4486 = vld [vmem:[%s1991 + $0x14] sm:$0xf]
        %v4487 = vld [vmem:[%s1991 + $0x18] sm:$0xf]
        %v4488 = vld [vmem:[%s1991 + $0x1c] sm:$0xf]
        %v4489 = vld [vmem:[%s1991 + $0x20] sm:$0xf]
        %v4490 = vld [vmem:[%s1991 + $0x24] sm:$0xf]
        %v4491 = vld [vmem:[%s1991 + $0x28] sm:$0xf]
        %v4492 = vld [vmem:[%s1991 + $0x2c] sm:$0xf]
        %v4493 = vld [vmem:[%s1991 + $0x30] sm:$0xf]
        %v4494 = vld [vmem:[%s1991 + $0x34] sm:$0xf]
        %v4495 = vld [vmem:[%s1991 + $0x38] sm:$0xf]
        %v4496 = vld [vmem:[%s1991 + $0x3c] sm:$0xf]
        %v4497 = vld [vmem:[%s1991 + $0x40] sm:$0xf]
        %v4498 = vld [vmem:[%s1991 + $0x44] sm:$0xf]
        %v4499 = vld [vmem:[%s1991 + $0x48] sm:$0xf]
        %v4500 = vld [vmem:[%s1991 + $0x4c] sm:$0xf]
        %v4501 = vld [vmem:[%s1991 + $0x50] sm:$0xf]
        %v4502 = vld [vmem:[%s1991 + $0x54] sm:$0xf]
        %v4503 = vld [vmem:[%s1991 + $0x58] sm:$0xf]
        %v4504 = vld [vmem:[%s1991 + $0x5c] sm:$0xf]
        %v4505 = vld [vmem:[%s1991 + $0x60] sm:$0xf]
        %v4506 = vld [vmem:[%s1991 + $0x64] sm:$0xf]
        %v4507 = vld [vmem:[%s1991 + $0x68] sm:$0xf]
        %v4508 = vld [vmem:[%s1991 + $0x6c] sm:$0xf]
        %v4509 = vld [vmem:[%s1991 + $0x70] sm:$0xf]
        %v4510 = vld [vmem:[%s1991 + $0x74] sm:$0xf]
        %v4511 = vld [vmem:[%s1991 + $0x78] sm:$0xf]
        %v4512 = vld [vmem:[%s1991 + $0x7c] sm:$0xf]
        %v4513 = vld [vmem:[%s1991 + $0x80] sm:$0xf]
        %v4514 = vld [vmem:[%s1991 + $0x84] sm:$0xf]
        %v4515 = vld [vmem:[%s1991 + $0x88] sm:$0xf]
        %v4516 = vld [vmem:[%s1991 + $0x8c] sm:$0xf]
        %v4517 = vld [vmem:[%s1991 + $0x90] sm:$0xf]
        %v4518 = vld [vmem:[%s1991 + $0x94] sm:$0xf]
        %v4519 = vld [vmem:[%s1991 + $0x98] sm:$0xf]
        %v4520 = vld [vmem:[%s1991 + $0x9c] sm:$0xf]
        %v4521 = vld [vmem:[%s1991 + $0xa0] sm:$0xf]
        %v4522 = vld [vmem:[%s1991 + $0xa4] sm:$0xf]
        %v4523 = vld [vmem:[%s1991 + $0xa8] sm:$0xf]
        %v4524 = vld [vmem:[%s1991 + $0xac] sm:$0xf]
        %v4525 = vld [vmem:[%s1991 + $0xb0] sm:$0xf]
        %v4526 = vld [vmem:[%s1991 + $0xb4] sm:$0xf]
        %v4527 = vld [vmem:[%s1991 + $0xb8] sm:$0xf]
        %v4528 = vld [vmem:[%s1991 + $0xbc] sm:$0xf]
        %v4545 = vunpack.c.l.b16 %v4465
        %v4546 = vunpack.c.h.b16 %v4465
        %v4547 = vunpack.c.l.b16 %v4466
        %v4548 = vunpack.c.l.b16 %v4467
        %v4549 = vunpack.c.h.b16 %v4467
        %v4550 = vunpack.c.l.b16 %v4468
        %v4551 = vunpack.c.l.b16 %v4469
        %v4552 = vunpack.c.h.b16 %v4469
        %v4553 = vunpack.c.l.b16 %v4470
        %v4554 = vunpack.c.l.b16 %v4471
        %v4555 = vunpack.c.h.b16 %v4471
        %v4556 = vunpack.c.l.b16 %v4472
        %v4557 = vunpack.c.l.b16 %v4473
        %v4558 = vunpack.c.h.b16 %v4473
        %v4559 = vunpack.c.l.b16 %v4474
        %v4560 = vunpack.c.l.b16 %v4475
        %v4561 = vunpack.c.h.b16 %v4475
        %v4562 = vunpack.c.l.b16 %v4476
        %v4563 = vunpack.c.l.b16 %v4477
        %v4564 = vunpack.c.h.b16 %v4477
        %v4565 = vunpack.c.l.b16 %v4478
        %v4566 = vunpack.c.l.b16 %v4479
        %v4567 = vunpack.c.h.b16 %v4479
        %v4568 = vunpack.c.l.b16 %v4480
        %v4569 = vpack.c.b16 %v4548, %v4545
        %v4570 = vpack.c.b16 %v4549, %v4546
        %v4571 = vpack.c.b16 %v4550, %v4547
        %v4572 = vpack.c.b16 %v4554, %v4551
        %v4573 = vpack.c.b16 %v4555, %v4552
        %v4574 = vpack.c.b16 %v4556, %v4553
        %v4575 = vpack.c.b16 %v4560, %v4557
        %v4576 = vpack.c.b16 %v4561, %v4558
        %v4577 = vpack.c.b16 %v4562, %v4559
        %v4578 = vpack.c.b16 %v4566, %v4563
        %v4579 = vpack.c.b16 %v4567, %v4564
        %v4580 = vpack.c.b16 %v4568, %v4565
        %v4641 = vunpack.c.l.b16 %v4481
        %v4642 = vunpack.c.l.b16 %v4482
        %v4643 = vunpack.c.l.b16 %v4483
        %v4644 = vunpack.c.l.b16 %v4484
        %v4645 = vunpack.c.l.b16 %v4485
        %v4646 = vunpack.c.l.b16 %v4486
        %v4647 = vunpack.c.l.b16 %v4487
        %v4648 = vunpack.c.l.b16 %v4488
        %v4649 = vunpack.c.l.b16 %v4489
        %v4650 = vunpack.c.l.b16 %v4490
        %v4651 = vunpack.c.l.b16 %v4491
        %v4652 = vunpack.c.l.b16 %v4492
        %v4653 = vunpack.c.l.b16 %v4493
        %v4654 = vunpack.c.l.b16 %v4494
        %v4655 = vunpack.c.l.b16 %v4495
        %v4656 = vunpack.c.l.b16 %v4496
        %v4657 = vunpack.c.l.b16 %v4497
        %v4658 = vunpack.c.l.b16 %v4498
        %v4659 = vunpack.c.l.b16 %v4499
        %v4660 = vunpack.c.l.b16 %v4500
        %v4661 = vunpack.c.l.b16 %v4501
        %v4662 = vunpack.c.l.b16 %v4502
        %v4663 = vunpack.c.l.b16 %v4503
        %v4664 = vunpack.c.l.b16 %v4504
        %v4665 = vunpack.c.l.b16 %v4505
        %v4666 = vunpack.c.l.b16 %v4506
        %v4667 = vunpack.c.l.b16 %v4507
        %v4668 = vunpack.c.l.b16 %v4508
        %v4669 = vunpack.c.l.b16 %v4509
        %v4670 = vunpack.c.l.b16 %v4510
        %v4671 = vunpack.c.l.b16 %v4511
        %v4672 = vunpack.c.l.b16 %v4512
        %v4673 = vunpack.c.l.b16 %v4513
        %v4674 = vunpack.c.l.b16 %v4514
        %v4675 = vunpack.c.l.b16 %v4515
        %v4676 = vunpack.c.l.b16 %v4516
        %v4677 = vunpack.c.l.b16 %v4517
        %v4678 = vunpack.c.l.b16 %v4518
        %v4679 = vunpack.c.l.b16 %v4519
        %v4680 = vunpack.c.l.b16 %v4520
        %v4681 = vunpack.c.l.b16 %v4521
        %v4682 = vunpack.c.l.b16 %v4522
        %v4683 = vunpack.c.l.b16 %v4523
        %v4684 = vunpack.c.l.b16 %v4524
        %v4685 = vunpack.c.l.b16 %v4525
        %v4686 = vunpack.c.l.b16 %v4526
        %v4687 = vunpack.c.l.b16 %v4527
        %v4688 = vunpack.c.l.b16 %v4528
        %v4689 = vpack.c.b16 %v4642, %v4641
        %v4690 = vpack.c.b16 %v4644, %v4643
        %v4691 = vpack.c.b16 %v4646, %v4645
        %v4692 = vpack.c.b16 %v4648, %v4647
        %v4693 = vpack.c.b16 %v4650, %v4649
        %v4694 = vpack.c.b16 %v4652, %v4651
        %v4695 = vpack.c.b16 %v4654, %v4653
        %v4696 = vpack.c.b16 %v4656, %v4655
        %v4697 = vpack.c.b16 %v4658, %v4657
        %v4698 = vpack.c.b16 %v4660, %v4659
        %v4699 = vpack.c.b16 %v4662, %v4661
        %v4700 = vpack.c.b16 %v4664, %v4663
        %v4701 = vpack.c.b16 %v4666, %v4665
        %v4702 = vpack.c.b16 %v4668, %v4667
        %v4703 = vpack.c.b16 %v4670, %v4669
        %v4704 = vpack.c.b16 %v4672, %v4671
        %v4705 = vpack.c.b16 %v4674, %v4673
        %v4706 = vpack.c.b16 %v4676, %v4675
        %v4707 = vpack.c.b16 %v4678, %v4677
        %v4708 = vpack.c.b16 %v4680, %v4679
        %v4709 = vpack.c.b16 %v4682, %v4681
        %v4710 = vpack.c.b16 %v4684, %v4683
        %v4711 = vpack.c.b16 %v4686, %v4685
        %v4712 = vpack.c.b16 %v4688, %v4687
        %4737 = vmatprep.subr.bf16.mxu0 0
        %4738 = vmatpush1.bf16.msra.mxu0 %v4696
        %4739 = vmatprep.subr.bf16.mxu0 0
        %4740 = vmatpush1.bf16.msra.mxu0 %v4695
        %4741 = vmatprep.subr.bf16.mxu0 0
        %4742 = vmatpush1.bf16.msra.mxu0 %v4694
        %4743 = vmatprep.subr.bf16.mxu0 0
        %4744 = vmatpush1.bf16.msra.mxu0 %v4693
        %4745 = vmatprep.subr.bf16.mxu0 0
        %4746 = vmatpush1.bf16.msra.mxu0 %v4692
        %4747 = vmatprep.subr.bf16.mxu0 0
        %4748 = vmatpush1.bf16.msra.mxu0 %v4691
        %4749 = vmatprep.subr.bf16.mxu0 0
        %4750 = vmatpush1.bf16.msra.mxu0 %v4690
        %4751 = vmatprep.subr.bf16.mxu0 0
        %4752 = vmatpush1.bf16.msra.mxu0 %v4689
        %4753 = vmatprep.subr.bf16.mxu0 0
        %4754 = vmatpush2.bf16.msra.mxu0 %v4704
        %4755 = vmatprep.subr.bf16.mxu0 0
        %4756 = vmatpush2.bf16.msra.mxu0 %v4703
        %4757 = vmatprep.subr.bf16.mxu0 0
        %4758 = vmatpush2.bf16.msra.mxu0 %v4702
        %4759 = vmatprep.subr.bf16.mxu0 0
        %4760 = vmatpush2.bf16.msra.mxu0 %v4701
        %4761 = vmatprep.subr.bf16.mxu0 0
        %4762 = vmatpush2.bf16.msra.mxu0 %v4700
        %4763 = vmatprep.subr.bf16.mxu0 0
        %4764 = vmatpush2.bf16.msra.mxu0 %v4699
        %4765 = vmatprep.subr.bf16.mxu0 0
        %4766 = vmatpush2.bf16.msra.mxu0 %v4698
        %4767 = vmatprep.subr.bf16.mxu0 0
        %4768 = vmatpush2.bf16.msra.mxu0 %v4697
        %4769 = vmatprep.mubr.bf16.mxu0 %v4570
        %4770 = vmatmul.mubr.bf16.gmra.mxu0 %v4569
        %v4771 = vpop.f32.mrf.mxu0
        %v4772 = vadd.f32 0.0, %v4771
        %v4773 = vpop.f32.mrf.mxu0
        %v4774 = vpop.f32.mrf.mxu0
        %v4775 = vadd.f32 0.0, %v4774
        %v4776 = vpop.f32.mrf.mxu0
        %4777 = vmatprep.mubr.bf16.mxu0 %v4573
        %4778 = vmatmul.mubr.bf16.gmra.mxu0 %v4572
        %v4779 = vpop.f32.mrf.mxu0
        %v4780 = vadd.f32 0.0, %v4779
        %v4781 = vpop.f32.mrf.mxu0
        %v4782 = vpop.f32.mrf.mxu0
        %v4783 = vadd.f32 0.0, %v4782
        %v4784 = vpop.f32.mrf.mxu0
        %4785 = vmatprep.mubr.bf16.mxu0 %v4576
        %4786 = vmatmul.mubr.bf16.gmra.mxu0 %v4575
        %v4787 = vpop.f32.mrf.mxu0
        %v4788 = vadd.f32 0.0, %v4787
        %v4789 = vpop.f32.mrf.mxu0
        %v4790 = vpop.f32.mrf.mxu0
        %v4791 = vadd.f32 0.0, %v4790
        %v4792 = vpop.f32.mrf.mxu0
        %4793 = vmatprep.mubr.bf16.mxu0 %v4579
        %4794 = vmatmul.mubr.bf16.gmra.mxu0 %v4578
        %v4795 = vpop.f32.mrf.mxu0
        %v4796 = vadd.f32 0.0, %v4795
        %v4797 = vpop.f32.mrf.mxu0
        %v4798 = vpop.f32.mrf.mxu0
        %v4799 = vadd.f32 0.0, %v4798
        %v4800 = vpop.f32.mrf.mxu0
        %4801 = vdwg.mxu0
        %4802 = vmatprep.subr.bf16.mxu0 0
        %4803 = vmatpush1.bf16.msra.mxu0 %v4712
        %4804 = vmatprep.subr.bf16.mxu0 0
        %4805 = vmatpush1.bf16.msra.mxu0 %v4711
        %4806 = vmatprep.subr.bf16.mxu0 0
        %4807 = vmatpush1.bf16.msra.mxu0 %v4710
        %4808 = vmatprep.subr.bf16.mxu0 0
        %4809 = vmatpush1.bf16.msra.mxu0 %v4709
        %4810 = vmatprep.subr.bf16.mxu0 0
        %4811 = vmatpush1.bf16.msra.mxu0 %v4708
        %4812 = vmatprep.subr.bf16.mxu0 0
        %4813 = vmatpush1.bf16.msra.mxu0 %v4707
        %4814 = vmatprep.subr.bf16.mxu0 0
        %4815 = vmatpush1.bf16.msra.mxu0 %v4706
        %4816 = vmatprep.subr.bf16.mxu0 0
        %4817 = vmatpush1.bf16.msra.mxu0 %v4705
        %4818 = vmatprep.subr.bf16.mxu0 0
        %4819 = vmatpush2.bf16.msra.mxu0 0
        %4820 = vmatprep.subr.bf16.mxu0 0
        %4821 = vmatpush2.bf16.msra.mxu0 0
        %4822 = vmatprep.subr.bf16.mxu0 0
        %4823 = vmatpush2.bf16.msra.mxu0 0
        %4824 = vmatprep.subr.bf16.mxu0 0
        %4825 = vmatpush2.bf16.msra.mxu0 0
        %4826 = vmatprep.subr.bf16.mxu0 0
        %4827 = vmatpush2.bf16.msra.mxu0 0
        %4828 = vmatprep.subr.bf16.mxu0 0
        %4829 = vmatpush2.bf16.msra.mxu0 0
        %4830 = vmatprep.subr.bf16.mxu0 0
        %4831 = vmatpush2.bf16.msra.mxu0 0
        %4832 = vmatprep.subr.bf16.mxu0 0
        %4833 = vmatpush2.bf16.msra.mxu0 0
        %4834 = vmatprep.mubr.bf16.mxu0 0
        %4835 = vmatmul.mubr.bf16.gmra.mxu0 %v4571
        %v4836 = vpop.f32.mrf.mxu0
        %v4837 = vadd.f32 %v4772, %v4836
        %v4838 = vpop.f32.mrf.mxu0
        %v4839 = vpop.f32.mrf.mxu0
        %v4840 = vadd.f32 %v4775, %v4839
        %v4841 = vpop.f32.mrf.mxu0
        %4842 = vmatprep.mubr.bf16.mxu0 0
        %4843 = vmatmul.mubr.bf16.gmra.mxu0 %v4574
        %v4844 = vpop.f32.mrf.mxu0
        %v4845 = vadd.f32 %v4780, %v4844
        %v4846 = vpop.f32.mrf.mxu0
        %v4847 = vpop.f32.mrf.mxu0
        %v4848 = vadd.f32 %v4783, %v4847
        %v4849 = vpop.f32.mrf.mxu0
        %4850 = vmatprep.mubr.bf16.mxu0 0
        %4851 = vmatmul.mubr.bf16.gmra.mxu0 %v4577
        %v4852 = vpop.f32.mrf.mxu0
        %v4853 = vadd.f32 %v4788, %v4852
        %v4854 = vpop.f32.mrf.mxu0
        %v4855 = vpop.f32.mrf.mxu0
        %v4856 = vadd.f32 %v4791, %v4855
        %v4857 = vpop.f32.mrf.mxu0
        %4858 = vmatprep.mubr.bf16.mxu0 0
        %4859 = vmatmul.mubr.bf16.gmra.mxu0 %v4580
        %v4860 = vpop.f32.mrf.mxu0
        %v4861 = vadd.f32 %v4796, %v4860
        %v4862 = vpop.f32.mrf.mxu0
        %v4863 = vpop.f32.mrf.mxu0
        %v4864 = vadd.f32 %v4799, %v4863
        %v4865 = vpop.f32.mrf.mxu0
        %4866 = vdwg.mxu0
        %v4867 = vadd.f32 %v4434, %v4837
        %v4868 = vadd.f32 %v4437, %v4840
        %v4869 = vadd.f32 %v4442, %v4845
        %v4870 = vadd.f32 %v4445, %v4848
        %v4871 = vadd.f32 %v4450, %v4853
        %v4872 = vadd.f32 %v4453, %v4856
        %v4873 = vadd.f32 %v4458, %v4861
        %v4874 = vadd.f32 %v4461, %v4864
        %v4875 = vadd.f32 %v4867, %v2390
        %v4876 = vadd.f32 %v4868, %v2390
        %v4877 = vadd.f32 %v4869, %v2390
        %v4878 = vadd.f32 %v4870, %v2390
        %v4879 = vadd.f32 %v4871, %v2390
        %v4880 = vadd.f32 %v4872, %v2390
        %v4881 = vadd.f32 %v4873, %v2390
        %v4882 = vadd.f32 %v4874, %v2390
        %v4883 = vmax.f32 %v4875, 0.0
        %v4884 = vmax.f32 %v4876, 0.0
        %v4885 = vmax.f32 %v4877, 0.0
        %v4886 = vmax.f32 %v4878, 0.0
        %v4887 = vmax.f32 %v4879, 0.0
        %v4888 = vmax.f32 %v4880, 0.0
        %v4889 = vmax.f32 %v4881, 0.0
        %v4890 = vmax.f32 %v4882, 0.0
        %s4891 = scalar_lea.vmem %s203, 128 [#allocation8]
        %4892 = vst [vmem:[%s4891] sm:$0xff] %v4883
        %4893 = vst [vmem:[%s4891 + $0x8] sm:$0xff] %v4884
        %4894 = vst [vmem:[%s4891 + $0x10] sm:$0xff] %v4885
        %4895 = vst [vmem:[%s4891 + $0x18] sm:$0xff] %v4886
        %4896 = vst [vmem:[%s4891 + $0x20] sm:$0xff] %v4887
        %4897 = vst [vmem:[%s4891 + $0x28] sm:$0xff] %v4888
        %4898 = vst [vmem:[%s4891 + $0x30] sm:$0xff] %v4889
        %4899 = vst [vmem:[%s4891 + $0x38] sm:$0xff] %v4890
        %s4900 = scalar_lea.vmem [#allocation2], 288
        %v4901 = vld [vmem:[%s4900] sm:$0xff]
        %v4902 = vld [vmem:[%s4900 + $0x8] sm:$0xf]
        %v4903 = vld [vmem:[%s4900 + $0xc] sm:$0xff]
        %v4904 = vld [vmem:[%s4900 + $0x14] sm:$0xf]
        %v4905 = vld [vmem:[%s4900 + $0x18] sm:$0xff]
        %v4906 = vld [vmem:[%s4900 + $0x20] sm:$0xf]
        %v4907 = vld [vmem:[%s4900 + $0x24] sm:$0xff]
        %v4908 = vld [vmem:[%s4900 + $0x2c] sm:$0xf]
        %v4909 = vld [vmem:[%s4900 + $0x30] sm:$0xff]
        %v4910 = vld [vmem:[%s4900 + $0x38] sm:$0xf]
        %v4911 = vld [vmem:[%s4900 + $0x3c] sm:$0xff]
        %v4912 = vld [vmem:[%s4900 + $0x44] sm:$0xf]
        %v4913 = vld [vmem:[%s4900 + $0x48] sm:$0xff]
        %v4914 = vld [vmem:[%s4900 + $0x50] sm:$0xf]
        %v4915 = vld [vmem:[%s4900 + $0x54] sm:$0xff]
        %v4916 = vld [vmem:[%s4900 + $0x5c] sm:$0xf]
        %v4917 = vld [vmem:[#allocation6] sm:$0xf]
        %v4918 = vld [vmem:[#allocation6 + $0x4] sm:$0xf]
        %v4919 = vld [vmem:[#allocation6 + $0x8] sm:$0xf]
        %v4920 = vld [vmem:[#allocation6 + $0xc] sm:$0xf]
        %v4921 = vld [vmem:[#allocation6 + $0x10] sm:$0xf]
        %v4922 = vld [vmem:[#allocation6 + $0x14] sm:$0xf]
        %v4923 = vld [vmem:[#allocation6 + $0x18] sm:$0xf]
        %v4924 = vld [vmem:[#allocation6 + $0x1c] sm:$0xf]
        %v4925 = vld [vmem:[#allocation6 + $0x20] sm:$0xf]
        %v4926 = vld [vmem:[#allocation6 + $0x24] sm:$0xf]
        %v4927 = vld [vmem:[#allocation6 + $0x28] sm:$0xf]
        %v4928 = vld [vmem:[#allocation6 + $0x2c] sm:$0xf]
        %v4929 = vld [vmem:[#allocation6 + $0x30] sm:$0xf]
        %v4930 = vld [vmem:[#allocation6 + $0x34] sm:$0xf]
        %v4931 = vld [vmem:[#allocation6 + $0x38] sm:$0xf]
        %v4932 = vld [vmem:[#allocation6 + $0x3c] sm:$0xf]
        %v4933 = vld [vmem:[#allocation6 + $0x40] sm:$0xf]
        %v4934 = vld [vmem:[#allocation6 + $0x44] sm:$0xf]
        %v4935 = vld [vmem:[#allocation6 + $0x48] sm:$0xf]
        %v4936 = vld [vmem:[#allocation6 + $0x4c] sm:$0xf]
        %v4937 = vld [vmem:[#allocation6 + $0x50] sm:$0xf]
        %v4938 = vld [vmem:[#allocation6 + $0x54] sm:$0xf]
        %v4939 = vld [vmem:[#allocation6 + $0x58] sm:$0xf]
        %v4940 = vld [vmem:[#allocation6 + $0x5c] sm:$0xf]
        %v4941 = vld [vmem:[#allocation6 + $0x60] sm:$0xf]
        %v4942 = vld [vmem:[#allocation6 + $0x64] sm:$0xf]
        %v4943 = vld [vmem:[#allocation6 + $0x68] sm:$0xf]
        %v4944 = vld [vmem:[#allocation6 + $0x6c] sm:$0xf]
        %v4945 = vld [vmem:[#allocation6 + $0x70] sm:$0xf]
        %v4946 = vld [vmem:[#allocation6 + $0x74] sm:$0xf]
        %v4947 = vld [vmem:[#allocation6 + $0x78] sm:$0xf]
        %v4948 = vld [vmem:[#allocation6 + $0x7c] sm:$0xf]
        %v4949 = vld [vmem:[#allocation6 + $0x80] sm:$0xf]
        %v4950 = vld [vmem:[#allocation6 + $0x84] sm:$0xf]
        %v4951 = vld [vmem:[#allocation6 + $0x88] sm:$0xf]
        %v4952 = vld [vmem:[#allocation6 + $0x8c] sm:$0xf]
        %v4953 = vld [vmem:[#allocation6 + $0x90] sm:$0xf]
        %v4954 = vld [vmem:[#allocation6 + $0x94] sm:$0xf]
        %v4955 = vld [vmem:[#allocation6 + $0x98] sm:$0xf]
        %v4956 = vld [vmem:[#allocation6 + $0x9c] sm:$0xf]
        %v4957 = vld [vmem:[#allocation6 + $0xa0] sm:$0xf]
        %v4958 = vld [vmem:[#allocation6 + $0xa4] sm:$0xf]
        %v4959 = vld [vmem:[#allocation6 + $0xa8] sm:$0xf]
        %v4960 = vld [vmem:[#allocation6 + $0xac] sm:$0xf]
        %v4961 = vld [vmem:[#allocation6 + $0xb0] sm:$0xf]
        %v4962 = vld [vmem:[#allocation6 + $0xb4] sm:$0xf]
        %v4963 = vld [vmem:[#allocation6 + $0xb8] sm:$0xf]
        %v4964 = vld [vmem:[#allocation6 + $0xbc] sm:$0xf]
        %s4965 = scalar_lea.vmem [#allocation2], 312
        %v4966 = vld [vmem:[%s4965] sm:$0xff]
        %v4967 = vld [vmem:[%s4965 + $0x8] sm:$0xf]
        %v4968 = vld [vmem:[%s4965 + $0xc] sm:$0xff]
        %v4969 = vld [vmem:[%s4965 + $0x14] sm:$0xf]
        %v4970 = vld [vmem:[%s4965 + $0x18] sm:$0xff]
        %v4971 = vld [vmem:[%s4965 + $0x20] sm:$0xf]
        %v4972 = vld [vmem:[%s4965 + $0x24] sm:$0xff]
        %v4973 = vld [vmem:[%s4965 + $0x2c] sm:$0xf]
        %v4974 = vld [vmem:[%s4965 + $0x30] sm:$0xff]
        %v4975 = vld [vmem:[%s4965 + $0x38] sm:$0xf]
        %v4976 = vld [vmem:[%s4965 + $0x3c] sm:$0xff]
        %v4977 = vld [vmem:[%s4965 + $0x44] sm:$0xf]
        %v4978 = vld [vmem:[%s4965 + $0x48] sm:$0xff]
        %v4979 = vld [vmem:[%s4965 + $0x50] sm:$0xf]
        %v4980 = vld [vmem:[%s4965 + $0x54] sm:$0xff]
        %v4981 = vld [vmem:[%s4965 + $0x5c] sm:$0xf]
        %v4982 = vld [vmem:[%s1249] sm:$0xf]
        %v4983 = vld [vmem:[%s1249 + $0x4] sm:$0xf]
        %v4984 = vld [vmem:[%s1249 + $0x8] sm:$0xf]
        %v4985 = vld [vmem:[%s1249 + $0xc] sm:$0xf]
        %v4986 = vld [vmem:[%s1249 + $0x10] sm:$0xf]
        %v4987 = vld [vmem:[%s1249 + $0x14] sm:$0xf]
        %v4988 = vld [vmem:[%s1249 + $0x18] sm:$0xf]
        %v4989 = vld [vmem:[%s1249 + $0x1c] sm:$0xf]
        %v4990 = vld [vmem:[%s1249 + $0x20] sm:$0xf]
        %v4991 = vld [vmem:[%s1249 + $0x24] sm:$0xf]
        %v4992 = vld [vmem:[%s1249 + $0x28] sm:$0xf]
        %v4993 = vld [vmem:[%s1249 + $0x2c] sm:$0xf]
        %v4994 = vld [vmem:[%s1249 + $0x30] sm:$0xf]
        %v4995 = vld [vmem:[%s1249 + $0x34] sm:$0xf]
        %v4996 = vld [vmem:[%s1249 + $0x38] sm:$0xf]
        %v4997 = vld [vmem:[%s1249 + $0x3c] sm:$0xf]
        %v4998 = vld [vmem:[%s1249 + $0x40] sm:$0xf]
        %v4999 = vld [vmem:[%s1249 + $0x44] sm:$0xf]
        %v5000 = vld [vmem:[%s1249 + $0x48] sm:$0xf]
        %v5001 = vld [vmem:[%s1249 + $0x4c] sm:$0xf]
        %v5002 = vld [vmem:[%s1249 + $0x50] sm:$0xf]
        %v5003 = vld [vmem:[%s1249 + $0x54] sm:$0xf]
        %v5004 = vld [vmem:[%s1249 + $0x58] sm:$0xf]
        %v5005 = vld [vmem:[%s1249 + $0x5c] sm:$0xf]
        %v5006 = vld [vmem:[%s1249 + $0x60] sm:$0xf]
        %v5007 = vld [vmem:[%s1249 + $0x64] sm:$0xf]
        %v5008 = vld [vmem:[%s1249 + $0x68] sm:$0xf]
        %v5009 = vld [vmem:[%s1249 + $0x6c] sm:$0xf]
        %v5010 = vld [vmem:[%s1249 + $0x70] sm:$0xf]
        %v5011 = vld [vmem:[%s1249 + $0x74] sm:$0xf]
        %v5012 = vld [vmem:[%s1249 + $0x78] sm:$0xf]
        %v5013 = vld [vmem:[%s1249 + $0x7c] sm:$0xf]
        %v5014 = vld [vmem:[%s1249 + $0x80] sm:$0xf]
        %v5015 = vld [vmem:[%s1249 + $0x84] sm:$0xf]
        %v5016 = vld [vmem:[%s1249 + $0x88] sm:$0xf]
        %v5017 = vld [vmem:[%s1249 + $0x8c] sm:$0xf]
        %v5018 = vld [vmem:[%s1249 + $0x90] sm:$0xf]
        %v5019 = vld [vmem:[%s1249 + $0x94] sm:$0xf]
        %v5020 = vld [vmem:[%s1249 + $0x98] sm:$0xf]
        %v5021 = vld [vmem:[%s1249 + $0x9c] sm:$0xf]
        %v5022 = vld [vmem:[%s1249 + $0xa0] sm:$0xf]
        %v5023 = vld [vmem:[%s1249 + $0xa4] sm:$0xf]
        %v5024 = vld [vmem:[%s1249 + $0xa8] sm:$0xf]
        %v5025 = vld [vmem:[%s1249 + $0xac] sm:$0xf]
        %v5026 = vld [vmem:[%s1249 + $0xb0] sm:$0xf]
        %v5027 = vld [vmem:[%s1249 + $0xb4] sm:$0xf]
        %v5028 = vld [vmem:[%s1249 + $0xb8] sm:$0xf]
        %v5029 = vld [vmem:[%s1249 + $0xbc] sm:$0xf]
        %v5046 = vunpack.c.l.b16 %v4966
        %v5047 = vunpack.c.h.b16 %v4966
        %v5048 = vunpack.c.l.b16 %v4967
        %v5049 = vunpack.c.l.b16 %v4968
        %v5050 = vunpack.c.h.b16 %v4968
        %v5051 = vunpack.c.l.b16 %v4969
        %v5052 = vunpack.c.l.b16 %v4970
        %v5053 = vunpack.c.h.b16 %v4970
        %v5054 = vunpack.c.l.b16 %v4971
        %v5055 = vunpack.c.l.b16 %v4972
        %v5056 = vunpack.c.h.b16 %v4972
        %v5057 = vunpack.c.l.b16 %v4973
        %v5058 = vunpack.c.l.b16 %v4974
        %v5059 = vunpack.c.h.b16 %v4974
        %v5060 = vunpack.c.l.b16 %v4975
        %v5061 = vunpack.c.l.b16 %v4976
        %v5062 = vunpack.c.h.b16 %v4976
        %v5063 = vunpack.c.l.b16 %v4977
        %v5064 = vunpack.c.l.b16 %v4978
        %v5065 = vunpack.c.h.b16 %v4978
        %v5066 = vunpack.c.l.b16 %v4979
        %v5067 = vunpack.c.l.b16 %v4980
        %v5068 = vunpack.c.h.b16 %v4980
        %v5069 = vunpack.c.l.b16 %v4981
        %v5070 = vpack.c.b16 %v5049, %v5046
        %v5071 = vpack.c.b16 %v5050, %v5047
        %v5072 = vpack.c.b16 %v5051, %v5048
        %v5073 = vpack.c.b16 %v5055, %v5052
        %v5074 = vpack.c.b16 %v5056, %v5053
        %v5075 = vpack.c.b16 %v5057, %v5054
        %v5076 = vpack.c.b16 %v5061, %v5058
        %v5077 = vpack.c.b16 %v5062, %v5059
        %v5078 = vpack.c.b16 %v5063, %v5060
        %v5079 = vpack.c.b16 %v5067, %v5064
        %v5080 = vpack.c.b16 %v5068, %v5065
        %v5081 = vpack.c.b16 %v5069, %v5066
        %v5142 = vunpack.c.l.b16 %v4982
        %v5143 = vunpack.c.l.b16 %v4983
        %v5144 = vunpack.c.l.b16 %v4984
        %v5145 = vunpack.c.l.b16 %v4985
        %v5146 = vunpack.c.l.b16 %v4986
        %v5147 = vunpack.c.l.b16 %v4987
        %v5148 = vunpack.c.l.b16 %v4988
        %v5149 = vunpack.c.l.b16 %v4989
        %v5150 = vunpack.c.l.b16 %v4990
        %v5151 = vunpack.c.l.b16 %v4991
        %v5152 = vunpack.c.l.b16 %v4992
        %v5153 = vunpack.c.l.b16 %v4993
        %v5154 = vunpack.c.l.b16 %v4994
        %v5155 = vunpack.c.l.b16 %v4995
        %v5156 = vunpack.c.l.b16 %v4996
        %v5157 = vunpack.c.l.b16 %v4997
        %v5158 = vunpack.c.l.b16 %v4998
        %v5159 = vunpack.c.l.b16 %v4999
        %v5160 = vunpack.c.l.b16 %v5000
        %v5161 = vunpack.c.l.b16 %v5001
        %v5162 = vunpack.c.l.b16 %v5002
        %v5163 = vunpack.c.l.b16 %v5003
        %v5164 = vunpack.c.l.b16 %v5004
        %v5165 = vunpack.c.l.b16 %v5005
        %v5166 = vunpack.c.l.b16 %v5006
        %v5167 = vunpack.c.l.b16 %v5007
        %v5168 = vunpack.c.l.b16 %v5008
        %v5169 = vunpack.c.l.b16 %v5009
        %v5170 = vunpack.c.l.b16 %v5010
        %v5171 = vunpack.c.l.b16 %v5011
        %v5172 = vunpack.c.l.b16 %v5012
        %v5173 = vunpack.c.l.b16 %v5013
        %v5174 = vunpack.c.l.b16 %v5014
        %v5175 = vunpack.c.l.b16 %v5015
        %v5176 = vunpack.c.l.b16 %v5016
        %v5177 = vunpack.c.l.b16 %v5017
        %v5178 = vunpack.c.l.b16 %v5018
        %v5179 = vunpack.c.l.b16 %v5019
        %v5180 = vunpack.c.l.b16 %v5020
        %v5181 = vunpack.c.l.b16 %v5021
        %v5182 = vunpack.c.l.b16 %v5022
        %v5183 = vunpack.c.l.b16 %v5023
        %v5184 = vunpack.c.l.b16 %v5024
        %v5185 = vunpack.c.l.b16 %v5025
        %v5186 = vunpack.c.l.b16 %v5026
        %v5187 = vunpack.c.l.b16 %v5027
        %v5188 = vunpack.c.l.b16 %v5028
        %v5189 = vunpack.c.l.b16 %v5029
        %v5190 = vpack.c.b16 %v5143, %v5142
        %v5191 = vpack.c.b16 %v5145, %v5144
        %v5192 = vpack.c.b16 %v5147, %v5146
        %v5193 = vpack.c.b16 %v5149, %v5148
        %v5194 = vpack.c.b16 %v5151, %v5150
        %v5195 = vpack.c.b16 %v5153, %v5152
        %v5196 = vpack.c.b16 %v5155, %v5154
        %v5197 = vpack.c.b16 %v5157, %v5156
        %v5198 = vpack.c.b16 %v5159, %v5158
        %v5199 = vpack.c.b16 %v5161, %v5160
        %v5200 = vpack.c.b16 %v5163, %v5162
        %v5201 = vpack.c.b16 %v5165, %v5164
        %v5202 = vpack.c.b16 %v5167, %v5166
        %v5203 = vpack.c.b16 %v5169, %v5168
        %v5204 = vpack.c.b16 %v5171, %v5170
        %v5205 = vpack.c.b16 %v5173, %v5172
        %v5206 = vpack.c.b16 %v5175, %v5174
        %v5207 = vpack.c.b16 %v5177, %v5176
        %v5208 = vpack.c.b16 %v5179, %v5178
        %v5209 = vpack.c.b16 %v5181, %v5180
        %v5210 = vpack.c.b16 %v5183, %v5182
        %v5211 = vpack.c.b16 %v5185, %v5184
        %v5212 = vpack.c.b16 %v5187, %v5186
        %v5213 = vpack.c.b16 %v5189, %v5188
        %5238 = vmatprep.subr.bf16.mxu0 0
        %5239 = vmatpush1.bf16.msra.mxu0 %v5197
        %5240 = vmatprep.subr.bf16.mxu0 0
        %5241 = vmatpush1.bf16.msra.mxu0 %v5196
        %5242 = vmatprep.subr.bf16.mxu0 0
        %5243 = vmatpush1.bf16.msra.mxu0 %v5195
        %5244 = vmatprep.subr.bf16.mxu0 0
        %5245 = vmatpush1.bf16.msra.mxu0 %v5194
        %5246 = vmatprep.subr.bf16.mxu0 0
        %5247 = vmatpush1.bf16.msra.mxu0 %v5193
        %5248 = vmatprep.subr.bf16.mxu0 0
        %5249 = vmatpush1.bf16.msra.mxu0 %v5192
        %5250 = vmatprep.subr.bf16.mxu0 0
        %5251 = vmatpush1.bf16.msra.mxu0 %v5191
        %5252 = vmatprep.subr.bf16.mxu0 0
        %5253 = vmatpush1.bf16.msra.mxu0 %v5190
        %5254 = vmatprep.subr.bf16.mxu0 0
        %5255 = vmatpush2.bf16.msra.mxu0 %v5205
        %5256 = vmatprep.subr.bf16.mxu0 0
        %5257 = vmatpush2.bf16.msra.mxu0 %v5204
        %5258 = vmatprep.subr.bf16.mxu0 0
        %5259 = vmatpush2.bf16.msra.mxu0 %v5203
        %5260 = vmatprep.subr.bf16.mxu0 0
        %5261 = vmatpush2.bf16.msra.mxu0 %v5202
        %5262 = vmatprep.subr.bf16.mxu0 0
        %5263 = vmatpush2.bf16.msra.mxu0 %v5201
        %5264 = vmatprep.subr.bf16.mxu0 0
        %5265 = vmatpush2.bf16.msra.mxu0 %v5200
        %5266 = vmatprep.subr.bf16.mxu0 0
        %5267 = vmatpush2.bf16.msra.mxu0 %v5199
        %5268 = vmatprep.subr.bf16.mxu0 0
        %5269 = vmatpush2.bf16.msra.mxu0 %v5198
        %5270 = vmatprep.mubr.bf16.mxu0 %v5071
        %5271 = vmatmul.mubr.bf16.gmra.mxu0 %v5070
        %v5272 = vpop.f32.mrf.mxu0
        %v5273 = vadd.f32 0.0, %v5272
        %v5274 = vpop.f32.mrf.mxu0
        %v5275 = vpop.f32.mrf.mxu0
        %v5276 = vadd.f32 0.0, %v5275
        %v5277 = vpop.f32.mrf.mxu0
        %5278 = vmatprep.mubr.bf16.mxu0 %v5074
        %5279 = vmatmul.mubr.bf16.gmra.mxu0 %v5073
        %v5280 = vpop.f32.mrf.mxu0
        %v5281 = vadd.f32 0.0, %v5280
        %v5282 = vpop.f32.mrf.mxu0
        %v5283 = vpop.f32.mrf.mxu0
        %v5284 = vadd.f32 0.0, %v5283
        %v5285 = vpop.f32.mrf.mxu0
        %5286 = vmatprep.mubr.bf16.mxu0 %v5077
        %5287 = vmatmul.mubr.bf16.gmra.mxu0 %v5076
        %v5288 = vpop.f32.mrf.mxu0
        %v5289 = vadd.f32 0.0, %v5288
        %v5290 = vpop.f32.mrf.mxu0
        %v5291 = vpop.f32.mrf.mxu0
        %v5292 = vadd.f32 0.0, %v5291
        %v5293 = vpop.f32.mrf.mxu0
        %5294 = vmatprep.mubr.bf16.mxu0 %v5080
        %5295 = vmatmul.mubr.bf16.gmra.mxu0 %v5079
        %v5296 = vpop.f32.mrf.mxu0
        %v5297 = vadd.f32 0.0, %v5296
        %v5298 = vpop.f32.mrf.mxu0
        %v5299 = vpop.f32.mrf.mxu0
        %v5300 = vadd.f32 0.0, %v5299
        %v5301 = vpop.f32.mrf.mxu0
        %5302 = vdwg.mxu0
        %5303 = vmatprep.subr.bf16.mxu0 0
        %5304 = vmatpush1.bf16.msra.mxu0 %v5213
        %5305 = vmatprep.subr.bf16.mxu0 0
        %5306 = vmatpush1.bf16.msra.mxu0 %v5212
        %5307 = vmatprep.subr.bf16.mxu0 0
        %5308 = vmatpush1.bf16.msra.mxu0 %v5211
        %5309 = vmatprep.subr.bf16.mxu0 0
        %5310 = vmatpush1.bf16.msra.mxu0 %v5210
        %5311 = vmatprep.subr.bf16.mxu0 0
        %5312 = vmatpush1.bf16.msra.mxu0 %v5209
        %5313 = vmatprep.subr.bf16.mxu0 0
        %5314 = vmatpush1.bf16.msra.mxu0 %v5208
        %5315 = vmatprep.subr.bf16.mxu0 0
        %5316 = vmatpush1.bf16.msra.mxu0 %v5207
        %5317 = vmatprep.subr.bf16.mxu0 0
        %5318 = vmatpush1.bf16.msra.mxu0 %v5206
        %5319 = vmatprep.subr.bf16.mxu0 0
        %5320 = vmatpush2.bf16.msra.mxu0 0
        %5321 = vmatprep.subr.bf16.mxu0 0
        %5322 = vmatpush2.bf16.msra.mxu0 0
        %5323 = vmatprep.subr.bf16.mxu0 0
        %5324 = vmatpush2.bf16.msra.mxu0 0
        %5325 = vmatprep.subr.bf16.mxu0 0
        %5326 = vmatpush2.bf16.msra.mxu0 0
        %5327 = vmatprep.subr.bf16.mxu0 0
        %5328 = vmatpush2.bf16.msra.mxu0 0
        %5329 = vmatprep.subr.bf16.mxu0 0
        %5330 = vmatpush2.bf16.msra.mxu0 0
        %5331 = vmatprep.subr.bf16.mxu0 0
        %5332 = vmatpush2.bf16.msra.mxu0 0
        %5333 = vmatprep.subr.bf16.mxu0 0
        %5334 = vmatpush2.bf16.msra.mxu0 0
        %5335 = vmatprep.mubr.bf16.mxu0 0
        %5336 = vmatmul.mubr.bf16.gmra.mxu0 %v5072
        %v5337 = vpop.f32.mrf.mxu0
        %v5338 = vadd.f32 %v5273, %v5337
        %v5339 = vpop.f32.mrf.mxu0
        %v5340 = vpop.f32.mrf.mxu0
        %v5341 = vadd.f32 %v5276, %v5340
        %v5342 = vpop.f32.mrf.mxu0
        %5343 = vmatprep.mubr.bf16.mxu0 0
        %5344 = vmatmul.mubr.bf16.gmra.mxu0 %v5075
        %v5345 = vpop.f32.mrf.mxu0
        %v5346 = vadd.f32 %v5281, %v5345
        %v5347 = vpop.f32.mrf.mxu0
        %v5348 = vpop.f32.mrf.mxu0
        %v5349 = vadd.f32 %v5284, %v5348
        %v5350 = vpop.f32.mrf.mxu0
        %5351 = vmatprep.mubr.bf16.mxu0 0
        %5352 = vmatmul.mubr.bf16.gmra.mxu0 %v5078
        %v5353 = vpop.f32.mrf.mxu0
        %v5354 = vadd.f32 %v5289, %v5353
        %v5355 = vpop.f32.mrf.mxu0
        %v5356 = vpop.f32.mrf.mxu0
        %v5357 = vadd.f32 %v5292, %v5356
        %v5358 = vpop.f32.mrf.mxu0
        %5359 = vmatprep.mubr.bf16.mxu0 0
        %5360 = vmatmul.mubr.bf16.gmra.mxu0 %v5081
        %v5361 = vpop.f32.mrf.mxu0
        %v5362 = vadd.f32 %v5297, %v5361
        %v5363 = vpop.f32.mrf.mxu0
        %v5364 = vpop.f32.mrf.mxu0
        %v5365 = vadd.f32 %v5300, %v5364
        %v5366 = vpop.f32.mrf.mxu0
        %5367 = vdwg.mxu0
        %v5384 = vunpack.c.l.b16 %v4901
        %v5385 = vunpack.c.h.b16 %v4901
        %v5386 = vunpack.c.l.b16 %v4902
        %v5387 = vunpack.c.l.b16 %v4903
        %v5388 = vunpack.c.h.b16 %v4903
        %v5389 = vunpack.c.l.b16 %v4904
        %v5390 = vunpack.c.l.b16 %v4905
        %v5391 = vunpack.c.h.b16 %v4905
        %v5392 = vunpack.c.l.b16 %v4906
        %v5393 = vunpack.c.l.b16 %v4907
        %v5394 = vunpack.c.h.b16 %v4907
        %v5395 = vunpack.c.l.b16 %v4908
        %v5396 = vunpack.c.l.b16 %v4909
        %v5397 = vunpack.c.h.b16 %v4909
        %v5398 = vunpack.c.l.b16 %v4910
        %v5399 = vunpack.c.l.b16 %v4911
        %v5400 = vunpack.c.h.b16 %v4911
        %v5401 = vunpack.c.l.b16 %v4912
        %v5402 = vunpack.c.l.b16 %v4913
        %v5403 = vunpack.c.h.b16 %v4913
        %v5404 = vunpack.c.l.b16 %v4914
        %v5405 = vunpack.c.l.b16 %v4915
        %v5406 = vunpack.c.h.b16 %v4915
        %v5407 = vunpack.c.l.b16 %v4916
        %v5408 = vpack.c.b16 %v5387, %v5384
        %v5409 = vpack.c.b16 %v5388, %v5385
        %v5410 = vpack.c.b16 %v5389, %v5386
        %v5411 = vpack.c.b16 %v5393, %v5390
        %v5412 = vpack.c.b16 %v5394, %v5391
        %v5413 = vpack.c.b16 %v5395, %v5392
        %v5414 = vpack.c.b16 %v5399, %v5396
        %v5415 = vpack.c.b16 %v5400, %v5397
        %v5416 = vpack.c.b16 %v5401, %v5398
        %v5417 = vpack.c.b16 %v5405, %v5402
        %v5418 = vpack.c.b16 %v5406, %v5403
        %v5419 = vpack.c.b16 %v5407, %v5404
        %v5480 = vunpack.c.l.b16 %v4917
        %v5481 = vunpack.c.l.b16 %v4918
        %v5482 = vunpack.c.l.b16 %v4919
        %v5483 = vunpack.c.l.b16 %v4920
        %v5484 = vunpack.c.l.b16 %v4921
        %v5485 = vunpack.c.l.b16 %v4922
        %v5486 = vunpack.c.l.b16 %v4923
        %v5487 = vunpack.c.l.b16 %v4924
        %v5488 = vunpack.c.l.b16 %v4925
        %v5489 = vunpack.c.l.b16 %v4926
        %v5490 = vunpack.c.l.b16 %v4927
        %v5491 = vunpack.c.l.b16 %v4928
        %v5492 = vunpack.c.l.b16 %v4929
        %v5493 = vunpack.c.l.b16 %v4930
        %v5494 = vunpack.c.l.b16 %v4931
        %v5495 = vunpack.c.l.b16 %v4932
        %v5496 = vunpack.c.l.b16 %v4933
        %v5497 = vunpack.c.l.b16 %v4934
        %v5498 = vunpack.c.l.b16 %v4935
        %v5499 = vunpack.c.l.b16 %v4936
        %v5500 = vunpack.c.l.b16 %v4937
        %v5501 = vunpack.c.l.b16 %v4938
        %v5502 = vunpack.c.l.b16 %v4939
        %v5503 = vunpack.c.l.b16 %v4940
        %v5504 = vunpack.c.l.b16 %v4941
        %v5505 = vunpack.c.l.b16 %v4942
        %v5506 = vunpack.c.l.b16 %v4943
        %v5507 = vunpack.c.l.b16 %v4944
        %v5508 = vunpack.c.l.b16 %v4945
        %v5509 = vunpack.c.l.b16 %v4946
        %v5510 = vunpack.c.l.b16 %v4947
        %v5511 = vunpack.c.l.b16 %v4948
        %v5512 = vunpack.c.l.b16 %v4949
        %v5513 = vunpack.c.l.b16 %v4950
        %v5514 = vunpack.c.l.b16 %v4951
        %v5515 = vunpack.c.l.b16 %v4952
        %v5516 = vunpack.c.l.b16 %v4953
        %v5517 = vunpack.c.l.b16 %v4954
        %v5518 = vunpack.c.l.b16 %v4955
        %v5519 = vunpack.c.l.b16 %v4956
        %v5520 = vunpack.c.l.b16 %v4957
        %v5521 = vunpack.c.l.b16 %v4958
        %v5522 = vunpack.c.l.b16 %v4959
        %v5523 = vunpack.c.l.b16 %v4960
        %v5524 = vunpack.c.l.b16 %v4961
        %v5525 = vunpack.c.l.b16 %v4962
        %v5526 = vunpack.c.l.b16 %v4963
        %v5527 = vunpack.c.l.b16 %v4964
        %v5528 = vpack.c.b16 %v5481, %v5480
        %v5529 = vpack.c.b16 %v5483, %v5482
        %v5530 = vpack.c.b16 %v5485, %v5484
        %v5531 = vpack.c.b16 %v5487, %v5486
        %v5532 = vpack.c.b16 %v5489, %v5488
        %v5533 = vpack.c.b16 %v5491, %v5490
        %v5534 = vpack.c.b16 %v5493, %v5492
        %v5535 = vpack.c.b16 %v5495, %v5494
        %v5536 = vpack.c.b16 %v5497, %v5496
        %v5537 = vpack.c.b16 %v5499, %v5498
        %v5538 = vpack.c.b16 %v5501, %v5500
        %v5539 = vpack.c.b16 %v5503, %v5502
        %v5540 = vpack.c.b16 %v5505, %v5504
        %v5541 = vpack.c.b16 %v5507, %v5506
        %v5542 = vpack.c.b16 %v5509, %v5508
        %v5543 = vpack.c.b16 %v5511, %v5510
        %v5544 = vpack.c.b16 %v5513, %v5512
        %v5545 = vpack.c.b16 %v5515, %v5514
        %v5546 = vpack.c.b16 %v5517, %v5516
        %v5547 = vpack.c.b16 %v5519, %v5518
        %v5548 = vpack.c.b16 %v5521, %v5520
        %v5549 = vpack.c.b16 %v5523, %v5522
        %v5550 = vpack.c.b16 %v5525, %v5524
        %v5551 = vpack.c.b16 %v5527, %v5526
        %5576 = vmatprep.subr.bf16.mxu0 0
        %5577 = vmatpush1.bf16.msra.mxu0 %v5535
        %5578 = vmatprep.subr.bf16.mxu0 0
        %5579 = vmatpush1.bf16.msra.mxu0 %v5534
        %5580 = vmatprep.subr.bf16.mxu0 0
        %5581 = vmatpush1.bf16.msra.mxu0 %v5533
        %5582 = vmatprep.subr.bf16.mxu0 0
        %5583 = vmatpush1.bf16.msra.mxu0 %v5532
        %5584 = vmatprep.subr.bf16.mxu0 0
        %5585 = vmatpush1.bf16.msra.mxu0 %v5531
        %5586 = vmatprep.subr.bf16.mxu0 0
        %5587 = vmatpush1.bf16.msra.mxu0 %v5530
        %5588 = vmatprep.subr.bf16.mxu0 0
        %5589 = vmatpush1.bf16.msra.mxu0 %v5529
        %5590 = vmatprep.subr.bf16.mxu0 0
        %5591 = vmatpush1.bf16.msra.mxu0 %v5528
        %5592 = vmatprep.subr.bf16.mxu0 0
        %5593 = vmatpush2.bf16.msra.mxu0 %v5543
        %5594 = vmatprep.subr.bf16.mxu0 0
        %5595 = vmatpush2.bf16.msra.mxu0 %v5542
        %5596 = vmatprep.subr.bf16.mxu0 0
        %5597 = vmatpush2.bf16.msra.mxu0 %v5541
        %5598 = vmatprep.subr.bf16.mxu0 0
        %5599 = vmatpush2.bf16.msra.mxu0 %v5540
        %5600 = vmatprep.subr.bf16.mxu0 0
        %5601 = vmatpush2.bf16.msra.mxu0 %v5539
        %5602 = vmatprep.subr.bf16.mxu0 0
        %5603 = vmatpush2.bf16.msra.mxu0 %v5538
        %5604 = vmatprep.subr.bf16.mxu0 0
        %5605 = vmatpush2.bf16.msra.mxu0 %v5537
        %5606 = vmatprep.subr.bf16.mxu0 0
        %5607 = vmatpush2.bf16.msra.mxu0 %v5536
        %5608 = vmatprep.mubr.bf16.mxu0 %v5409
        %5609 = vmatmul.mubr.bf16.gmra.mxu0 %v5408
        %v5610 = vpop.f32.mrf.mxu0
        %v5611 = vadd.f32 %v5338, %v5610
        %v5612 = vpop.f32.mrf.mxu0
        %v5613 = vpop.f32.mrf.mxu0
        %v5614 = vadd.f32 %v5341, %v5613
        %v5615 = vpop.f32.mrf.mxu0
        %5616 = vmatprep.mubr.bf16.mxu0 %v5412
        %5617 = vmatmul.mubr.bf16.gmra.mxu0 %v5411
        %v5618 = vpop.f32.mrf.mxu0
        %v5619 = vadd.f32 %v5346, %v5618
        %v5620 = vpop.f32.mrf.mxu0
        %v5621 = vpop.f32.mrf.mxu0
        %v5622 = vadd.f32 %v5349, %v5621
        %v5623 = vpop.f32.mrf.mxu0
        %5624 = vmatprep.mubr.bf16.mxu0 %v5415
        %5625 = vmatmul.mubr.bf16.gmra.mxu0 %v5414
        %v5626 = vpop.f32.mrf.mxu0
        %v5627 = vadd.f32 %v5354, %v5626
        %v5628 = vpop.f32.mrf.mxu0
        %v5629 = vpop.f32.mrf.mxu0
        %v5630 = vadd.f32 %v5357, %v5629
        %v5631 = vpop.f32.mrf.mxu0
        %5632 = vmatprep.mubr.bf16.mxu0 %v5418
        %5633 = vmatmul.mubr.bf16.gmra.mxu0 %v5417
        %v5634 = vpop.f32.mrf.mxu0
        %v5635 = vadd.f32 %v5362, %v5634
        %v5636 = vpop.f32.mrf.mxu0
        %v5637 = vpop.f32.mrf.mxu0
        %v5638 = vadd.f32 %v5365, %v5637
        %v5639 = vpop.f32.mrf.mxu0
        %5640 = vdwg.mxu0
        %5641 = vmatprep.subr.bf16.mxu0 0
        %5642 = vmatpush1.bf16.msra.mxu0 %v5551
        %5643 = vmatprep.subr.bf16.mxu0 0
        %5644 = vmatpush1.bf16.msra.mxu0 %v5550
        %5645 = vmatprep.subr.bf16.mxu0 0
        %5646 = vmatpush1.bf16.msra.mxu0 %v5549
        %5647 = vmatprep.subr.bf16.mxu0 0
        %5648 = vmatpush1.bf16.msra.mxu0 %v5548
        %5649 = vmatprep.subr.bf16.mxu0 0
        %5650 = vmatpush1.bf16.msra.mxu0 %v5547
        %5651 = vmatprep.subr.bf16.mxu0 0
        %5652 = vmatpush1.bf16.msra.mxu0 %v5546
        %5653 = vmatprep.subr.bf16.mxu0 0
        %5654 = vmatpush1.bf16.msra.mxu0 %v5545
        %5655 = vmatprep.subr.bf16.mxu0 0
        %5656 = vmatpush1.bf16.msra.mxu0 %v5544
        %5657 = vmatprep.subr.bf16.mxu0 0
        %5658 = vmatpush2.bf16.msra.mxu0 0
        %5659 = vmatprep.subr.bf16.mxu0 0
        %5660 = vmatpush2.bf16.msra.mxu0 0
        %5661 = vmatprep.subr.bf16.mxu0 0
        %5662 = vmatpush2.bf16.msra.mxu0 0
        %5663 = vmatprep.subr.bf16.mxu0 0
        %5664 = vmatpush2.bf16.msra.mxu0 0
        %5665 = vmatprep.subr.bf16.mxu0 0
        %5666 = vmatpush2.bf16.msra.mxu0 0
        %5667 = vmatprep.subr.bf16.mxu0 0
        %5668 = vmatpush2.bf16.msra.mxu0 0
        %5669 = vmatprep.subr.bf16.mxu0 0
        %5670 = vmatpush2.bf16.msra.mxu0 0
        %5671 = vmatprep.subr.bf16.mxu0 0
        %5672 = vmatpush2.bf16.msra.mxu0 0
        %5673 = vmatprep.mubr.bf16.mxu0 0
        %5674 = vmatmul.mubr.bf16.gmra.mxu0 %v5410
        %v5675 = vpop.f32.mrf.mxu0
        %v5676 = vadd.f32 %v5611, %v5675
        %v5677 = vpop.f32.mrf.mxu0
        %v5678 = vpop.f32.mrf.mxu0
        %v5679 = vadd.f32 %v5614, %v5678
        %v5680 = vpop.f32.mrf.mxu0
        %5681 = vmatprep.mubr.bf16.mxu0 0
        %5682 = vmatmul.mubr.bf16.gmra.mxu0 %v5413
        %v5683 = vpop.f32.mrf.mxu0
        %v5684 = vadd.f32 %v5619, %v5683
        %v5685 = vpop.f32.mrf.mxu0
        %v5686 = vpop.f32.mrf.mxu0
        %v5687 = vadd.f32 %v5622, %v5686
        %v5688 = vpop.f32.mrf.mxu0
        %5689 = vmatprep.mubr.bf16.mxu0 0
        %5690 = vmatmul.mubr.bf16.gmra.mxu0 %v5416
        %v5691 = vpop.f32.mrf.mxu0
        %v5692 = vadd.f32 %v5627, %v5691
        %v5693 = vpop.f32.mrf.mxu0
        %v5694 = vpop.f32.mrf.mxu0
        %v5695 = vadd.f32 %v5630, %v5694
        %v5696 = vpop.f32.mrf.mxu0
        %5697 = vmatprep.mubr.bf16.mxu0 0
        %5698 = vmatmul.mubr.bf16.gmra.mxu0 %v5419
        %v5699 = vpop.f32.mrf.mxu0
        %v5700 = vadd.f32 %v5635, %v5699
        %v5701 = vpop.f32.mrf.mxu0
        %v5702 = vpop.f32.mrf.mxu0
        %v5703 = vadd.f32 %v5638, %v5702
        %v5704 = vpop.f32.mrf.mxu0
        %5705 = vdwg.mxu0
        %s5706 = scalar_lea.vmem [#allocation2], 336
        %v5707 = vld [vmem:[%s5706] sm:$0xff]
        %v5708 = vld [vmem:[%s5706 + $0x8] sm:$0xf]
        %v5709 = vld [vmem:[%s5706 + $0xc] sm:$0xff]
        %v5710 = vld [vmem:[%s5706 + $0x14] sm:$0xf]
        %v5711 = vld [vmem:[%s5706 + $0x18] sm:$0xff]
        %v5712 = vld [vmem:[%s5706 + $0x20] sm:$0xf]
        %v5713 = vld [vmem:[%s5706 + $0x24] sm:$0xff]
        %v5714 = vld [vmem:[%s5706 + $0x2c] sm:$0xf]
        %v5715 = vld [vmem:[%s5706 + $0x30] sm:$0xff]
        %v5716 = vld [vmem:[%s5706 + $0x38] sm:$0xf]
        %v5717 = vld [vmem:[%s5706 + $0x3c] sm:$0xff]
        %v5718 = vld [vmem:[%s5706 + $0x44] sm:$0xf]
        %v5719 = vld [vmem:[%s5706 + $0x48] sm:$0xff]
        %v5720 = vld [vmem:[%s5706 + $0x50] sm:$0xf]
        %v5721 = vld [vmem:[%s5706 + $0x54] sm:$0xff]
        %v5722 = vld [vmem:[%s5706 + $0x5c] sm:$0xf]
        %v5723 = vld [vmem:[%s1991] sm:$0xf]
        %v5724 = vld [vmem:[%s1991 + $0x4] sm:$0xf]
        %v5725 = vld [vmem:[%s1991 + $0x8] sm:$0xf]
        %v5726 = vld [vmem:[%s1991 + $0xc] sm:$0xf]
        %v5727 = vld [vmem:[%s1991 + $0x10] sm:$0xf]
        %v5728 = vld [vmem:[%s1991 + $0x14] sm:$0xf]
        %v5729 = vld [vmem:[%s1991 + $0x18] sm:$0xf]
        %v5730 = vld [vmem:[%s1991 + $0x1c] sm:$0xf]
        %v5731 = vld [vmem:[%s1991 + $0x20] sm:$0xf]
        %v5732 = vld [vmem:[%s1991 + $0x24] sm:$0xf]
        %v5733 = vld [vmem:[%s1991 + $0x28] sm:$0xf]
        %v5734 = vld [vmem:[%s1991 + $0x2c] sm:$0xf]
        %v5735 = vld [vmem:[%s1991 + $0x30] sm:$0xf]
        %v5736 = vld [vmem:[%s1991 + $0x34] sm:$0xf]
        %v5737 = vld [vmem:[%s1991 + $0x38] sm:$0xf]
        %v5738 = vld [vmem:[%s1991 + $0x3c] sm:$0xf]
        %v5739 = vld [vmem:[%s1991 + $0x40] sm:$0xf]
        %v5740 = vld [vmem:[%s1991 + $0x44] sm:$0xf]
        %v5741 = vld [vmem:[%s1991 + $0x48] sm:$0xf]
        %v5742 = vld [vmem:[%s1991 + $0x4c] sm:$0xf]
        %v5743 = vld [vmem:[%s1991 + $0x50] sm:$0xf]
        %v5744 = vld [vmem:[%s1991 + $0x54] sm:$0xf]
        %v5745 = vld [vmem:[%s1991 + $0x58] sm:$0xf]
        %v5746 = vld [vmem:[%s1991 + $0x5c] sm:$0xf]
        %v5747 = vld [vmem:[%s1991 + $0x60] sm:$0xf]
        %v5748 = vld [vmem:[%s1991 + $0x64] sm:$0xf]
        %v5749 = vld [vmem:[%s1991 + $0x68] sm:$0xf]
        %v5750 = vld [vmem:[%s1991 + $0x6c] sm:$0xf]
        %v5751 = vld [vmem:[%s1991 + $0x70] sm:$0xf]
        %v5752 = vld [vmem:[%s1991 + $0x74] sm:$0xf]
        %v5753 = vld [vmem:[%s1991 + $0x78] sm:$0xf]
        %v5754 = vld [vmem:[%s1991 + $0x7c] sm:$0xf]
        %v5755 = vld [vmem:[%s1991 + $0x80] sm:$0xf]
        %v5756 = vld [vmem:[%s1991 + $0x84] sm:$0xf]
        %v5757 = vld [vmem:[%s1991 + $0x88] sm:$0xf]
        %v5758 = vld [vmem:[%s1991 + $0x8c] sm:$0xf]
        %v5759 = vld [vmem:[%s1991 + $0x90] sm:$0xf]
        %v5760 = vld [vmem:[%s1991 + $0x94] sm:$0xf]
        %v5761 = vld [vmem:[%s1991 + $0x98] sm:$0xf]
        %v5762 = vld [vmem:[%s1991 + $0x9c] sm:$0xf]
        %v5763 = vld [vmem:[%s1991 + $0xa0] sm:$0xf]
        %v5764 = vld [vmem:[%s1991 + $0xa4] sm:$0xf]
        %v5765 = vld [vmem:[%s1991 + $0xa8] sm:$0xf]
        %v5766 = vld [vmem:[%s1991 + $0xac] sm:$0xf]
        %v5767 = vld [vmem:[%s1991 + $0xb0] sm:$0xf]
        %v5768 = vld [vmem:[%s1991 + $0xb4] sm:$0xf]
        %v5769 = vld [vmem:[%s1991 + $0xb8] sm:$0xf]
        %v5770 = vld [vmem:[%s1991 + $0xbc] sm:$0xf]
        %v5787 = vunpack.c.l.b16 %v5707
        %v5788 = vunpack.c.h.b16 %v5707
        %v5789 = vunpack.c.l.b16 %v5708
        %v5790 = vunpack.c.l.b16 %v5709
        %v5791 = vunpack.c.h.b16 %v5709
        %v5792 = vunpack.c.l.b16 %v5710
        %v5793 = vunpack.c.l.b16 %v5711
        %v5794 = vunpack.c.h.b16 %v5711
        %v5795 = vunpack.c.l.b16 %v5712
        %v5796 = vunpack.c.l.b16 %v5713
        %v5797 = vunpack.c.h.b16 %v5713
        %v5798 = vunpack.c.l.b16 %v5714
        %v5799 = vunpack.c.l.b16 %v5715
        %v5800 = vunpack.c.h.b16 %v5715
        %v5801 = vunpack.c.l.b16 %v5716
        %v5802 = vunpack.c.l.b16 %v5717
        %v5803 = vunpack.c.h.b16 %v5717
        %v5804 = vunpack.c.l.b16 %v5718
        %v5805 = vunpack.c.l.b16 %v5719
        %v5806 = vunpack.c.h.b16 %v5719
        %v5807 = vunpack.c.l.b16 %v5720
        %v5808 = vunpack.c.l.b16 %v5721
        %v5809 = vunpack.c.h.b16 %v5721
        %v5810 = vunpack.c.l.b16 %v5722
        %v5811 = vpack.c.b16 %v5790, %v5787
        %v5812 = vpack.c.b16 %v5791, %v5788
        %v5813 = vpack.c.b16 %v5792, %v5789
        %v5814 = vpack.c.b16 %v5796, %v5793
        %v5815 = vpack.c.b16 %v5797, %v5794
        %v5816 = vpack.c.b16 %v5798, %v5795
        %v5817 = vpack.c.b16 %v5802, %v5799
        %v5818 = vpack.c.b16 %v5803, %v5800
        %v5819 = vpack.c.b16 %v5804, %v5801
        %v5820 = vpack.c.b16 %v5808, %v5805
        %v5821 = vpack.c.b16 %v5809, %v5806
        %v5822 = vpack.c.b16 %v5810, %v5807
        %v5883 = vunpack.c.l.b16 %v5723
        %v5884 = vunpack.c.l.b16 %v5724
        %v5885 = vunpack.c.l.b16 %v5725
        %v5886 = vunpack.c.l.b16 %v5726
        %v5887 = vunpack.c.l.b16 %v5727
        %v5888 = vunpack.c.l.b16 %v5728
        %v5889 = vunpack.c.l.b16 %v5729
        %v5890 = vunpack.c.l.b16 %v5730
        %v5891 = vunpack.c.l.b16 %v5731
        %v5892 = vunpack.c.l.b16 %v5732
        %v5893 = vunpack.c.l.b16 %v5733
        %v5894 = vunpack.c.l.b16 %v5734
        %v5895 = vunpack.c.l.b16 %v5735
        %v5896 = vunpack.c.l.b16 %v5736
        %v5897 = vunpack.c.l.b16 %v5737
        %v5898 = vunpack.c.l.b16 %v5738
        %v5899 = vunpack.c.l.b16 %v5739
        %v5900 = vunpack.c.l.b16 %v5740
        %v5901 = vunpack.c.l.b16 %v5741
        %v5902 = vunpack.c.l.b16 %v5742
        %v5903 = vunpack.c.l.b16 %v5743
        %v5904 = vunpack.c.l.b16 %v5744
        %v5905 = vunpack.c.l.b16 %v5745
        %v5906 = vunpack.c.l.b16 %v5746
        %v5907 = vunpack.c.l.b16 %v5747
        %v5908 = vunpack.c.l.b16 %v5748
        %v5909 = vunpack.c.l.b16 %v5749
        %v5910 = vunpack.c.l.b16 %v5750
        %v5911 = vunpack.c.l.b16 %v5751
        %v5912 = vunpack.c.l.b16 %v5752
        %v5913 = vunpack.c.l.b16 %v5753
        %v5914 = vunpack.c.l.b16 %v5754
        %v5915 = vunpack.c.l.b16 %v5755
        %v5916 = vunpack.c.l.b16 %v5756
        %v5917 = vunpack.c.l.b16 %v5757
        %v5918 = vunpack.c.l.b16 %v5758
        %v5919 = vunpack.c.l.b16 %v5759
        %v5920 = vunpack.c.l.b16 %v5760
        %v5921 = vunpack.c.l.b16 %v5761
        %v5922 = vunpack.c.l.b16 %v5762
        %v5923 = vunpack.c.l.b16 %v5763
        %v5924 = vunpack.c.l.b16 %v5764
        %v5925 = vunpack.c.l.b16 %v5765
        %v5926 = vunpack.c.l.b16 %v5766
        %v5927 = vunpack.c.l.b16 %v5767
        %v5928 = vunpack.c.l.b16 %v5768
        %v5929 = vunpack.c.l.b16 %v5769
        %v5930 = vunpack.c.l.b16 %v5770
        %v5931 = vpack.c.b16 %v5884, %v5883
        %v5932 = vpack.c.b16 %v5886, %v5885
        %v5933 = vpack.c.b16 %v5888, %v5887
        %v5934 = vpack.c.b16 %v5890, %v5889
        %v5935 = vpack.c.b16 %v5892, %v5891
        %v5936 = vpack.c.b16 %v5894, %v5893
        %v5937 = vpack.c.b16 %v5896, %v5895
        %v5938 = vpack.c.b16 %v5898, %v5897
        %v5939 = vpack.c.b16 %v5900, %v5899
        %v5940 = vpack.c.b16 %v5902, %v5901
        %v5941 = vpack.c.b16 %v5904, %v5903
        %v5942 = vpack.c.b16 %v5906, %v5905
        %v5943 = vpack.c.b16 %v5908, %v5907
        %v5944 = vpack.c.b16 %v5910, %v5909
        %v5945 = vpack.c.b16 %v5912, %v5911
        %v5946 = vpack.c.b16 %v5914, %v5913
        %v5947 = vpack.c.b16 %v5916, %v5915
        %v5948 = vpack.c.b16 %v5918, %v5917
        %v5949 = vpack.c.b16 %v5920, %v5919
        %v5950 = vpack.c.b16 %v5922, %v5921
        %v5951 = vpack.c.b16 %v5924, %v5923
        %v5952 = vpack.c.b16 %v5926, %v5925
        %v5953 = vpack.c.b16 %v5928, %v5927
        %v5954 = vpack.c.b16 %v5930, %v5929
        %5979 = vmatprep.subr.bf16.mxu0 0
        %5980 = vmatpush1.bf16.msra.mxu0 %v5938
        %5981 = vmatprep.subr.bf16.mxu0 0
        %5982 = vmatpush1.bf16.msra.mxu0 %v5937
        %5983 = vmatprep.subr.bf16.mxu0 0
        %5984 = vmatpush1.bf16.msra.mxu0 %v5936
        %5985 = vmatprep.subr.bf16.mxu0 0
        %5986 = vmatpush1.bf16.msra.mxu0 %v5935
        %5987 = vmatprep.subr.bf16.mxu0 0
        %5988 = vmatpush1.bf16.msra.mxu0 %v5934
        %5989 = vmatprep.subr.bf16.mxu0 0
        %5990 = vmatpush1.bf16.msra.mxu0 %v5933
        %5991 = vmatprep.subr.bf16.mxu0 0
        %5992 = vmatpush1.bf16.msra.mxu0 %v5932
        %5993 = vmatprep.subr.bf16.mxu0 0
        %5994 = vmatpush1.bf16.msra.mxu0 %v5931
        %5995 = vmatprep.subr.bf16.mxu0 0
        %5996 = vmatpush2.bf16.msra.mxu0 %v5946
        %5997 = vmatprep.subr.bf16.mxu0 0
        %5998 = vmatpush2.bf16.msra.mxu0 %v5945
        %5999 = vmatprep.subr.bf16.mxu0 0
        %6000 = vmatpush2.bf16.msra.mxu0 %v5944
        %6001 = vmatprep.subr.bf16.mxu0 0
        %6002 = vmatpush2.bf16.msra.mxu0 %v5943
        %6003 = vmatprep.subr.bf16.mxu0 0
        %6004 = vmatpush2.bf16.msra.mxu0 %v5942
        %6005 = vmatprep.subr.bf16.mxu0 0
        %6006 = vmatpush2.bf16.msra.mxu0 %v5941
        %6007 = vmatprep.subr.bf16.mxu0 0
        %6008 = vmatpush2.bf16.msra.mxu0 %v5940
        %6009 = vmatprep.subr.bf16.mxu0 0
        %6010 = vmatpush2.bf16.msra.mxu0 %v5939
        %6011 = vmatprep.mubr.bf16.mxu0 %v5812
        %6012 = vmatmul.mubr.bf16.gmra.mxu0 %v5811
        %v6013 = vpop.f32.mrf.mxu0
        %v6014 = vadd.f32 0.0, %v6013
        %v6015 = vpop.f32.mrf.mxu0
        %v6016 = vpop.f32.mrf.mxu0
        %v6017 = vadd.f32 0.0, %v6016
        %v6018 = vpop.f32.mrf.mxu0
        %6019 = vmatprep.mubr.bf16.mxu0 %v5815
        %6020 = vmatmul.mubr.bf16.gmra.mxu0 %v5814
        %v6021 = vpop.f32.mrf.mxu0
        %v6022 = vadd.f32 0.0, %v6021
        %v6023 = vpop.f32.mrf.mxu0
        %v6024 = vpop.f32.mrf.mxu0
        %v6025 = vadd.f32 0.0, %v6024
        %v6026 = vpop.f32.mrf.mxu0
        %6027 = vmatprep.mubr.bf16.mxu0 %v5818
        %6028 = vmatmul.mubr.bf16.gmra.mxu0 %v5817
        %v6029 = vpop.f32.mrf.mxu0
        %v6030 = vadd.f32 0.0, %v6029
        %v6031 = vpop.f32.mrf.mxu0
        %v6032 = vpop.f32.mrf.mxu0
        %v6033 = vadd.f32 0.0, %v6032
        %v6034 = vpop.f32.mrf.mxu0
        %6035 = vmatprep.mubr.bf16.mxu0 %v5821
        %6036 = vmatmul.mubr.bf16.gmra.mxu0 %v5820
        %v6037 = vpop.f32.mrf.mxu0
        %v6038 = vadd.f32 0.0, %v6037
        %v6039 = vpop.f32.mrf.mxu0
        %v6040 = vpop.f32.mrf.mxu0
        %v6041 = vadd.f32 0.0, %v6040
        %v6042 = vpop.f32.mrf.mxu0
        %6043 = vdwg.mxu0
        %6044 = vmatprep.subr.bf16.mxu0 0
        %6045 = vmatpush1.bf16.msra.mxu0 %v5954
        %6046 = vmatprep.subr.bf16.mxu0 0
        %6047 = vmatpush1.bf16.msra.mxu0 %v5953
        %6048 = vmatprep.subr.bf16.mxu0 0
        %6049 = vmatpush1.bf16.msra.mxu0 %v5952
        %6050 = vmatprep.subr.bf16.mxu0 0
        %6051 = vmatpush1.bf16.msra.mxu0 %v5951
        %6052 = vmatprep.subr.bf16.mxu0 0
        %6053 = vmatpush1.bf16.msra.mxu0 %v5950
        %6054 = vmatprep.subr.bf16.mxu0 0
        %6055 = vmatpush1.bf16.msra.mxu0 %v5949
        %6056 = vmatprep.subr.bf16.mxu0 0
        %6057 = vmatpush1.bf16.msra.mxu0 %v5948
        %6058 = vmatprep.subr.bf16.mxu0 0
        %6059 = vmatpush1.bf16.msra.mxu0 %v5947
        %6060 = vmatprep.subr.bf16.mxu0 0
        %6061 = vmatpush2.bf16.msra.mxu0 0
        %6062 = vmatprep.subr.bf16.mxu0 0
        %6063 = vmatpush2.bf16.msra.mxu0 0
        %6064 = vmatprep.subr.bf16.mxu0 0
        %6065 = vmatpush2.bf16.msra.mxu0 0
        %6066 = vmatprep.subr.bf16.mxu0 0
        %6067 = vmatpush2.bf16.msra.mxu0 0
        %6068 = vmatprep.subr.bf16.mxu0 0
        %6069 = vmatpush2.bf16.msra.mxu0 0
        %6070 = vmatprep.subr.bf16.mxu0 0
        %6071 = vmatpush2.bf16.msra.mxu0 0
        %6072 = vmatprep.subr.bf16.mxu0 0
        %6073 = vmatpush2.bf16.msra.mxu0 0
        %6074 = vmatprep.subr.bf16.mxu0 0
        %6075 = vmatpush2.bf16.msra.mxu0 0
        %6076 = vmatprep.mubr.bf16.mxu0 0
        %6077 = vmatmul.mubr.bf16.gmra.mxu0 %v5813
        %v6078 = vpop.f32.mrf.mxu0
        %v6079 = vadd.f32 %v6014, %v6078
        %v6080 = vpop.f32.mrf.mxu0
        %v6081 = vpop.f32.mrf.mxu0
        %v6082 = vadd.f32 %v6017, %v6081
        %v6083 = vpop.f32.mrf.mxu0
        %6084 = vmatprep.mubr.bf16.mxu0 0
        %6085 = vmatmul.mubr.bf16.gmra.mxu0 %v5816
        %v6086 = vpop.f32.mrf.mxu0
        %v6087 = vadd.f32 %v6022, %v6086
        %v6088 = vpop.f32.mrf.mxu0
        %v6089 = vpop.f32.mrf.mxu0
        %v6090 = vadd.f32 %v6025, %v6089
        %v6091 = vpop.f32.mrf.mxu0
        %6092 = vmatprep.mubr.bf16.mxu0 0
        %6093 = vmatmul.mubr.bf16.gmra.mxu0 %v5819
        %v6094 = vpop.f32.mrf.mxu0
        %v6095 = vadd.f32 %v6030, %v6094
        %v6096 = vpop.f32.mrf.mxu0
        %v6097 = vpop.f32.mrf.mxu0
        %v6098 = vadd.f32 %v6033, %v6097
        %v6099 = vpop.f32.mrf.mxu0
        %6100 = vmatprep.mubr.bf16.mxu0 0
        %6101 = vmatmul.mubr.bf16.gmra.mxu0 %v5822
        %v6102 = vpop.f32.mrf.mxu0
        %v6103 = vadd.f32 %v6038, %v6102
        %v6104 = vpop.f32.mrf.mxu0
        %v6105 = vpop.f32.mrf.mxu0
        %v6106 = vadd.f32 %v6041, %v6105
        %v6107 = vpop.f32.mrf.mxu0
        %6108 = vdwg.mxu0
        %v6109 = vadd.f32 %v5676, %v6079
        %v6110 = vadd.f32 %v5679, %v6082
        %v6111 = vadd.f32 %v5684, %v6087
        %v6112 = vadd.f32 %v5687, %v6090
        %v6113 = vadd.f32 %v5692, %v6095
        %v6114 = vadd.f32 %v5695, %v6098
        %v6115 = vadd.f32 %v5700, %v6103
        %v6116 = vadd.f32 %v5703, %v6106
        %v6117 = vadd.f32 %v6109, %v2390
        %v6118 = vadd.f32 %v6110, %v2390
        %v6119 = vadd.f32 %v6111, %v2390
        %v6120 = vadd.f32 %v6112, %v2390
        %v6121 = vadd.f32 %v6113, %v2390
        %v6122 = vadd.f32 %v6114, %v2390
        %v6123 = vadd.f32 %v6115, %v2390
        %v6124 = vadd.f32 %v6116, %v2390
        %v6125 = vmax.f32 %v6117, 0.0
        %v6126 = vmax.f32 %v6118, 0.0
        %v6127 = vmax.f32 %v6119, 0.0
        %v6128 = vmax.f32 %v6120, 0.0
        %v6129 = vmax.f32 %v6121, 0.0
        %v6130 = vmax.f32 %v6122, 0.0
        %v6131 = vmax.f32 %v6123, 0.0
        %v6132 = vmax.f32 %v6124, 0.0
        %s6133 = scalar_lea.vmem %s203, 192 [#allocation8]
        %6134 = vst [vmem:[%s6133] sm:$0xff] %v6125
        %6135 = vst [vmem:[%s6133 + $0x8] sm:$0xff] %v6126
        %6136 = vst [vmem:[%s6133 + $0x10] sm:$0xff] %v6127
        %6137 = vst [vmem:[%s6133 + $0x18] sm:$0xff] %v6128
        %6138 = vst [vmem:[%s6133 + $0x20] sm:$0xff] %v6129
        %6139 = vst [vmem:[%s6133 + $0x28] sm:$0xff] %v6130
        %6140 = vst [vmem:[%s6133 + $0x30] sm:$0xff] %v6131
        %6141 = vst [vmem:[%s6133 + $0x38] sm:$0xff] %v6132
        %s6142 = sand.u32 %s97, 1
        %s6143 = scalar_lea.sflag [#allocation5], %s6142
        %s6144 = sand.u32 %s97, 1
        %s6145 = smul.addr %s6144, 256
        %s6146 = scalar_lea.vmem [#allocation8], %s6145
        // Predicated region
        $region41: #{tpu_custom_call.1} parent=31 // pred_check
          %p6147 = pneg %p107
        $region42: #{tpu_custom_call.1} parent=31 // pred_check_branch
          %6149 = sbr.rel (%p6147) target = $region44
        $region43: #{tpu_custom_call.1} parent=31 // pred_region
          %s6151 = ssub.s32 4096, 4096
          %6152 = vsyncadd %s6143, %s6151
          %s6153 = smul.addr %s21, 32
          %s6154 = smul.addr %s6153, 128
          %s6155 = scalar_lea.hbm %s3, %s6154
          %s6156 = sshll.u32 %s6146, 4
          %s6157 = int_to_ptr.vmem [resolvable:$true] %s6156
          %6162 = dma.vmem_to_hbm [thread:$0]  %s6157, 4096, %s6155, %s6143, 128, 128, 8
        $region44: #{tpu_custom_call.1} parent=31 // pred_fallthru
          _
      $region32: #{tpu_custom_call.1} parent=5 // pred_fallthru
        _
      %p6163 = scmp.le.s32.totalorder 2, %s16
      // Predicated region
      $region45: #{tpu_custom_call.1} parent=5 // pred_check
        %p6164 = pneg %p6163
      $region46: #{tpu_custom_call.1} parent=5 // pred_check_branch
        %6166 = sbr.rel (%p6164) target = $region48
      $region47: #{tpu_custom_call.1} parent=5 // pred_region
        %s6167 = ssub.s32 %s16, 2
        // Predicated region
        $region49: #{tpu_custom_call.1} parent=47 // pred_check
          %p6168 = pneg %p113
        $region50: #{tpu_custom_call.1} parent=47 // pred_check_branch
          %6170 = sbr.rel (%p6168) target = $region52
        $region51: #{tpu_custom_call.1} parent=47 // pred_region
          %s6171 = sand.u32 %s98, 1
          %s6172 = scalar_lea.sflag [#allocation5], %s6171
          %s6173 = sand.u32 %s98, 1
          %s6174 = smul.addr %s6173, 256
          %s6175 = scalar_lea.vmem [#allocation8], %s6174
          %6176 = dma.done %s6172, 4096
        $region52: #{tpu_custom_call.1} parent=47 // pred_fallthru
          _
      $region48: #{tpu_custom_call.1} parent=5 // pred_fallthru
        _
    $region6: #{tpu_custom_call.1} parent=1 // loop_footer
      %s20 = sadd.s32 1, %s16
    $region7: #{tpu_custom_call.1} parent=1 // loop_footer_branch
      %15 = sbr.rel target = $region3
    $region8: #{tpu_custom_call.1} parent=1 // loop_exit
      _
    %6177 = vsyncpa [#allocation4], 1
    %s6178 = scalar_lea.sflag [#allocation4], 1
    %6179 = vsyncpa %s6178, 1
    %6180 = vsyncpa [#allocation7], 1
    %6181 = vsyncpa [#allocation5], 1
    %s6182 = scalar_lea.sflag [#allocation5], 1
    %6183 = vsyncpa %s6182, 1

</llo_original>
